<compile_context>
chip_gen: v6e
topology: v6e:2x2x1
jax: 0.10.0
libtpu: 0.0.40
codegen_flags: <defaults>
</compile_context>

<pallas_src>
import jax
import jax.numpy as jnp
from jax.experimental import pallas as pl
from jax.experimental.pallas import tpu as pltpu


def _residual_block_sr_kernel(x_ref, w1_ref, b1_ref, w2_ref, b2_ref,
                              o_ref, xcat_ref, mcat_ref):
    # x_ref   : (H+2, Wpad, Cp) f32   spatially + channel zero-padded NHWC tile
    # w*_ref  : (3, 3*Cp, Cp)   bf16  per-dy weights, contraction = (dx, cin)
    # b*_ref  : (1, Cp)         f32   conv biases (zero in padded channels)
    # o_ref   : (H*W, Cp)             lane-dense output slab
    # xcat_ref: (H+2, W, 3*Cp)  bf16  dx-fused input windows
    # mcat_ref: (H+2, W, 3*Cp)  bf16  dx-fused conv1 activation (with halo)
    Hp2, Wpad, Cp = x_ref.shape
    H = Hp2 - 2
    W = xcat_ref.shape[1]

    # ---- materialize the three dx-shifted input windows once (bf16) -------
    for dx in range(3):
        xcat_ref[:, :, dx * Cp:(dx + 1) * Cp] = (
            x_ref[:, dx:dx + W, :].astype(jnp.bfloat16))

    # ---- conv1: 3 matmuls, K = 3*Cp, f32 accumulation seeded with bias ----
    acc1 = jnp.broadcast_to(b1_ref[...], (H * W, Cp))
    for dy in range(3):
        lhs = xcat_ref[dy:dy + H].reshape(H * W, 3 * Cp)
        acc1 = acc1 + jnp.dot(lhs, w1_ref[dy],
                              preferred_element_type=jnp.float32)

    # LeakyReLU(0.2) in f32 on the VPU, cast once to bf16 for conv2's MXU.
    act = jnp.where(acc1 > 0, acc1, 0.2 * acc1)
    act = act.astype(jnp.bfloat16).reshape(H, W, Cp)

    # ---- scatter the activation into the dx-fused layout ------------------
    # mcat[r, j, dx*Cp + c] == act_pad[r, j + dx, c], where act_pad is the
    # activation with a 1-pixel zero border (conv2's padding=1).
    zrow = jnp.zeros((1, W, 3 * Cp), jnp.bfloat16)
    zcol = jnp.zeros((H, 1, Cp), jnp.bfloat16)
    mcat_ref[0:1] = zrow                       # top halo row (read at dy=0)
    mcat_ref[H + 1:H + 2] = zrow               # bottom halo row (read at dy=2)
    mcat_ref[1:H + 1, :, Cp:2 * Cp] = act                               # dx = 1
    mcat_ref[1:H + 1, :, 0:Cp] = jnp.concatenate(
        [zcol, act[:, :W - 1, :]], axis=1)                              # dx = 0
    mcat_ref[1:H + 1, :, 2 * Cp:3 * Cp] = jnp.concatenate(
        [act[:, 1:, :], zcol], axis=1)                                  # dx = 2

    # ---- conv2: 3 matmuls, K = 3*Cp -------------------------------------
    acc2 = jnp.broadcast_to(b2_ref[...], (H * W, Cp))
    for dy in range(3):
        lhs = mcat_ref[dy:dy + H].reshape(H * W, 3 * Cp)
        acc2 = acc2 + jnp.dot(lhs, w2_ref[dy],
                              preferred_element_type=jnp.float32)

    # ---- residual add in f32; lane-dense unmasked store -------------------
    identity = x_ref[1:H + 1, 1:W + 1, :].reshape(H * W, Cp)
    o_ref[...] = (acc2 + identity).astype(o_ref.dtype)


def residual_block_sr(x_nchw, w1, b1, w2, b2):
    """x_nchw: (B, C, H, W); w*: (3, 3, C, C) as (kh, kw, cin, cout); b*: (C,)."""
    B, C, H, W = x_nchw.shape
    Cp = ((C + 127) // 128) * 128                # lane-dense channel padding
    Wpad = ((W + 2 + 7) // 8) * 8                # sublane-aligned padded width

    x_nhwc = jnp.transpose(x_nchw, (0, 2, 3, 1))                       # NHWC
    x_pad = jnp.pad(x_nhwc,
                    ((0, 0), (1, 1), (1, Wpad - W - 1), (0, Cp - C)))

    pad_c = ((0, 0), (0, 0), (0, Cp - C), (0, Cp - C))
    # (kh, kw, cin, cout) -> (kh, kw*cin, cout); bf16 operands for the MXU.
    w1p = jnp.pad(w1, pad_c).reshape(3, 3 * Cp, Cp).astype(jnp.bfloat16)
    w2p = jnp.pad(w2, pad_c).reshape(3, 3 * Cp, Cp).astype(jnp.bfloat16)
    b1p = jnp.pad(b1, (0, Cp - C)).reshape(1, Cp).astype(jnp.float32)
    b2p = jnp.pad(b2, (0, Cp - C)).reshape(1, Cp).astype(jnp.float32)

    out = pl.pallas_call(
        _residual_block_sr_kernel,
        out_shape=jax.ShapeDtypeStruct((B, H * W, Cp), x_nchw.dtype),
        grid_spec=pltpu.PrefetchScalarGridSpec(
            num_scalar_prefetch=0,
            grid=(B,),
            in_specs=[
                pl.BlockSpec((None, H + 2, Wpad, Cp), lambda b: (b, 0, 0, 0)),
                pl.BlockSpec((3, 3 * Cp, Cp), lambda b: (0, 0, 0)),
                pl.BlockSpec((1, Cp), lambda b: (0, 0)),
                pl.BlockSpec((3, 3 * Cp, Cp), lambda b: (0, 0, 0)),
                pl.BlockSpec((1, Cp), lambda b: (0, 0)),
            ],
            out_specs=pl.BlockSpec((None, H * W, Cp), lambda b: (b, 0, 0)),
            scratch_shapes=[
                pltpu.VMEM((H + 2, W, 3 * Cp), jnp.bfloat16),   # xcat
                pltpu.VMEM((H + 2, W, 3 * Cp), jnp.bfloat16),   # mcat
            ],
        ),
        compiler_params=pltpu.CompilerParams(
            dimension_semantics=("parallel",)),
    )(x_pad, w1p, b1p, w2p, b2p)

    out = out.reshape(B, H, W, Cp)[..., :C]          # drop channel padding
    return jnp.transpose(out, (0, 3, 1, 2))          # back to NCHW


def _reference(x_nchw, w1, b1, w2, b2):
    """Pure-JAX reference of the PyTorch forward (sanity check)."""
    x = jnp.transpose(x_nchw, (0, 2, 3, 1))
    dn = ('NHWC', 'HWIO', 'NHWC')
    y = jax.lax.conv_general_dilated(x, w1, (1, 1), 'SAME',
                                     dimension_numbers=dn) + b1
    y = jnp.where(y > 0, y, 0.2 * y)
    y = jax.lax.conv_general_dilated(y, w2, (1, 1), 'SAME',
                                     dimension_numbers=dn) + b2
    y = y + x
    return jnp.transpose(y, (0, 3, 1, 2))


def init_params(key, num_ft):
    """Deterministic synthetic params matching nn.Conv2d(num_ft, num_ft, 3, bias=True)."""
    k1, k2, k3, k4 = jax.random.split(key, 4)
    fan_in = num_ft * 3 * 3
    scale = 1.0 / jnp.sqrt(fan_in)
    # weights stored as (kh, kw, cin, cout)
    w1 = jax.random.uniform(k1, (3, 3, num_ft, num_ft), jnp.float32, -scale, scale)
    b1 = jax.random.uniform(k2, (num_ft,), jnp.float32, -scale, scale)
    w2 = jax.random.uniform(k3, (3, 3, num_ft, num_ft), jnp.float32, -scale, scale)
    b2 = jax.random.uniform(k4, (num_ft,), jnp.float32, -scale, scale)
    return w1, b1, w2, b2


if __name__ == "__main__":
    key = jax.random.PRNGKey(0)
    kx, kp = jax.random.split(key)

    B, C, H, W = 2, 4, 16, 16          # small NCHW input, num_ft = 4
    x = jax.random.normal(kx, (B, C, H, W), jnp.float32)
    w1, b1, w2, b2 = init_params(kp, C)

    out = jax.block_until_ready(residual_block_sr(x, w1, b1, w2, b2))
    assert out.shape == (B, C, H, W), out.shape

    ref = jax.block_until_ready(_reference(x, w1, b1, w2, b2))
    # bf16 matmul operands + bf16 activation scratch with f32 accumulation:
    # observed error is O(1e-2) at these magnitudes, well inside tolerance.
    max_err = float(jnp.max(jnp.abs(out - ref)))
    assert max_err < 5e-2, f"max abs error {max_err}"

    print("KERNEL_OK")
</pallas_src>

<mosaic_0001>
module attributes {stable_mosaic.version = 11 : i64} {
  func.func @_residual_block_sr_kernel(%arg0: i32, %arg1: memref<1x18x24x128xf32, #tpu.memory_space<vmem>>, %arg2: memref<3x384x128xbf16, #tpu.memory_space<vmem>>, %arg3: memref<1x128xf32, #tpu.memory_space<vmem>>, %arg4: memref<3x384x128xbf16, #tpu.memory_space<vmem>>, %arg5: memref<1x128xf32, #tpu.memory_space<vmem>>, %arg6: memref<1x256x128xf32, #tpu.memory_space<vmem>>, %arg7: memref<18x16x384xbf16, #tpu.memory_space<vmem>>, %arg8: memref<18x16x384xbf16, #tpu.memory_space<vmem>>) attributes {dimension_semantics = [#tpu.dimension_semantics<parallel>], iteration_bounds = array<i64: 2>, scalar_prefetch = 0 : i64, scratch_operands = 2 : i64, tpu.core_type = #tpu.core_type<tc>, window_params = [{transform_indices = @transform_0, window_bounds = array<i64: 1, 18, 24, 128>}, {pipeline_mode = #tpu.pipeline_mode<synchronous>, transform_indices = @transform_1, window_bounds = array<i64: 3, 384, 128>}, {pipeline_mode = #tpu.pipeline_mode<synchronous>, transform_indices = @transform_2, window_bounds = array<i64: 1, 128>}, {pipeline_mode = #tpu.pipeline_mode<synchronous>, transform_indices = @transform_3, window_bounds = array<i64: 3, 384, 128>}, {pipeline_mode = #tpu.pipeline_mode<synchronous>, transform_indices = @transform_4, window_bounds = array<i64: 1, 128>}, {transform_indices = @transform_5, window_bounds = array<i64: 1, 256, 128>}]} {
    %c0 = arith.constant 0 : index
    %c0_0 = arith.constant 0 : index
    %c0_1 = arith.constant 0 : index
    %c0_2 = arith.constant 0 : index
    %0 = vector.load %arg1[%c0, %c0_0, %c0_1, %c0_2] : memref<1x18x24x128xf32, #tpu.memory_space<vmem>>, vector<1x18x16x128xf32>
    %1 = vector.shape_cast %0 : vector<1x18x16x128xf32> to vector<18x16x128xf32>
    %2 = arith.truncf %1 : vector<18x16x128xf32> to vector<18x16x128xbf16>
    %c0_3 = arith.constant 0 : index
    %c0_4 = arith.constant 0 : index
    %c0_5 = arith.constant 0 : index
    %3 = vector.load %arg7[%c0_3, %c0_4, %c0_5] : memref<18x16x384xbf16, #tpu.memory_space<vmem>>, vector<18x16x128xbf16>
    tpu.vector_store %arg7[%c0_3, %c0_4, %c0_5], %2 {strides = array<i32>} : memref<18x16x384xbf16, #tpu.memory_space<vmem>>, vector<18x16x128xbf16>,
    %c0_6 = arith.constant 0 : index
    %c0_7 = arith.constant 0 : index
    %c1 = arith.constant 1 : index
    %c0_8 = arith.constant 0 : index
    %4 = vector.load %arg1[%c0_6, %c0_7, %c1, %c0_8] : memref<1x18x24x128xf32, #tpu.memory_space<vmem>>, vector<1x18x16x128xf32>
    %5 = vector.shape_cast %4 : vector<1x18x16x128xf32> to vector<18x16x128xf32>
    %6 = arith.truncf %5 : vector<18x16x128xf32> to vector<18x16x128xbf16>
    %c0_9 = arith.constant 0 : index
    %c0_10 = arith.constant 0 : index
    %c128 = arith.constant 128 : index
    %7 = vector.load %arg7[%c0_9, %c0_10, %c128] : memref<18x16x384xbf16, #tpu.memory_space<vmem>>, vector<18x16x128xbf16>
    tpu.vector_store %arg7[%c0_9, %c0_10, %c128], %6 {strides = array<i32>} : memref<18x16x384xbf16, #tpu.memory_space<vmem>>, vector<18x16x128xbf16>,
    %c0_11 = arith.constant 0 : index
    %c0_12 = arith.constant 0 : index
    %c2 = arith.constant 2 : index
    %c0_13 = arith.constant 0 : index
    %8 = vector.load %arg1[%c0_11, %c0_12, %c2, %c0_13] : memref<1x18x24x128xf32, #tpu.memory_space<vmem>>, vector<1x18x16x128xf32>
    %9 = vector.shape_cast %8 : vector<1x18x16x128xf32> to vector<18x16x128xf32>
    %10 = arith.truncf %9 : vector<18x16x128xf32> to vector<18x16x128xbf16>
    %c0_14 = arith.constant 0 : index
    %c0_15 = arith.constant 0 : index
    %c256 = arith.constant 256 : index
    %11 = vector.load %arg7[%c0_14, %c0_15, %c256] : memref<18x16x384xbf16, #tpu.memory_space<vmem>>, vector<18x16x128xbf16>
    tpu.vector_store %arg7[%c0_14, %c0_15, %c256], %10 {strides = array<i32>} : memref<18x16x384xbf16, #tpu.memory_space<vmem>>, vector<18x16x128xbf16>,
    %c0_16 = arith.constant 0 : index
    %c0_17 = arith.constant 0 : index
    %12 = vector.load %arg3[%c0_16, %c0_17] : memref<1x128xf32, #tpu.memory_space<vmem>>, vector<1x128xf32>
    %13 = vector.shape_cast %12 : vector<1x128xf32> to vector<1x128xf32>
    %14 = vector.broadcast %13 : vector<1x128xf32> to vector<256x128xf32>
    %c0_18 = arith.constant 0 : index
    %c0_19 = arith.constant 0 : index
    %c0_20 = arith.constant 0 : index
    %15 = vector.load %arg7[%c0_18, %c0_19, %c0_20] : memref<18x16x384xbf16, #tpu.memory_space<vmem>>, vector<16x16x384xbf16>
    %16 = vector.shape_cast %15 : vector<16x16x384xbf16> to vector<256x384xbf16>
    %c0_21 = arith.constant 0 : index
    %c0_22 = arith.constant 0 : index
    %c0_23 = arith.constant 0 : index
    %17 = vector.load %arg2[%c0_21, %c0_22, %c0_23] : memref<3x384x128xbf16, #tpu.memory_space<vmem>>, vector<1x384x128xbf16>
    %18 = vector.shape_cast %17 : vector<1x384x128xbf16> to vector<384x128xbf16>
    %cst = arith.constant dense<0.000000e+00> : vector<256x128xf32>
    %19 = tpu.matmul %16, %18, %cst {dimension_numbers = #tpu.dot_dimension_numbers<[1], [0], [0], [1], [0, 0, 1, 1], [], []>} : vector<256x384xbf16>, vector<384x128xbf16>, vector<256x128xf32> -> vector<256x128xf32>
    %20 = arith.addf %14, %19 : vector<256x128xf32>
    %c1_24 = arith.constant 1 : index
    %c0_25 = arith.constant 0 : index
    %c0_26 = arith.constant 0 : index
    %21 = vector.load %arg7[%c1_24, %c0_25, %c0_26] : memref<18x16x384xbf16, #tpu.memory_space<vmem>>, vector<16x16x384xbf16>
    %22 = vector.shape_cast %21 : vector<16x16x384xbf16> to vector<256x384xbf16>
    %c1_27 = arith.constant 1 : index
    %c0_28 = arith.constant 0 : index
    %c0_29 = arith.constant 0 : index
    %23 = vector.load %arg2[%c1_27, %c0_28, %c0_29] : memref<3x384x128xbf16, #tpu.memory_space<vmem>>, vector<1x384x128xbf16>
    %24 = vector.shape_cast %23 : vector<1x384x128xbf16> to vector<384x128xbf16>
    %cst_30 = arith.constant dense<0.000000e+00> : vector<256x128xf32>
    %25 = tpu.matmul %22, %24, %cst_30 {dimension_numbers = #tpu.dot_dimension_numbers<[1], [0], [0], [1], [0, 0, 1, 1], [], []>} : vector<256x384xbf16>, vector<384x128xbf16>, vector<256x128xf32> -> vector<256x128xf32>
    %26 = arith.addf %20, %25 : vector<256x128xf32>
    %c2_31 = arith.constant 2 : index
    %c0_32 = arith.constant 0 : index
    %c0_33 = arith.constant 0 : index
    %27 = vector.load %arg7[%c2_31, %c0_32, %c0_33] : memref<18x16x384xbf16, #tpu.memory_space<vmem>>, vector<16x16x384xbf16>
    %28 = vector.shape_cast %27 : vector<16x16x384xbf16> to vector<256x384xbf16>
    %c2_34 = arith.constant 2 : index
    %c0_35 = arith.constant 0 : index
    %c0_36 = arith.constant 0 : index
    %29 = vector.load %arg2[%c2_34, %c0_35, %c0_36] : memref<3x384x128xbf16, #tpu.memory_space<vmem>>, vector<1x384x128xbf16>
    %30 = vector.shape_cast %29 : vector<1x384x128xbf16> to vector<384x128xbf16>
    %cst_37 = arith.constant dense<0.000000e+00> : vector<256x128xf32>
    %31 = tpu.matmul %28, %30, %cst_37 {dimension_numbers = #tpu.dot_dimension_numbers<[1], [0], [0], [1], [0, 0, 1, 1], [], []>} : vector<256x384xbf16>, vector<384x128xbf16>, vector<256x128xf32> -> vector<256x128xf32>
    %32 = arith.addf %26, %31 : vector<256x128xf32>
    %cst_38 = arith.constant 0.000000e+00 : f32
    %33 = vector.broadcast %cst_38 : f32 to vector<256x128xf32>
    %34 = arith.cmpf ogt, %32, %33 : vector<256x128xf32>
    %cst_39 = arith.constant 2.000000e-01 : f32
    %35 = vector.broadcast %cst_39 : f32 to vector<256x128xf32>
    %36 = arith.mulf %35, %32 : vector<256x128xf32>
    %37 = arith.select %34, %32, %36 : vector<256x128xi1>, vector<256x128xf32>
    %38 = arith.truncf %37 : vector<256x128xf32> to vector<256x128xbf16>
    %39 = vector.shape_cast %38 : vector<256x128xbf16> to vector<16x16x128xbf16>
    %cst_40 = arith.constant 0.000000e+00 : bf16
    %40 = vector.broadcast %cst_40 : bf16 to vector<1x16x384xbf16>
    %cst_41 = arith.constant 0.000000e+00 : bf16
    %41 = vector.broadcast %cst_41 : bf16 to vector<16x1x128xbf16>
    %c0_42 = arith.constant 0 : index
    %c0_43 = arith.constant 0 : index
    %c0_44 = arith.constant 0 : index
    %42 = vector.load %arg8[%c0_42, %c0_43, %c0_44] : memref<18x16x384xbf16, #tpu.memory_space<vmem>>, vector<1x16x384xbf16>
    tpu.vector_store %arg8[%c0_42, %c0_43, %c0_44], %40 {strides = array<i32>} : memref<18x16x384xbf16, #tpu.memory_space<vmem>>, vector<1x16x384xbf16>,
    %c17 = arith.constant 17 : index
    %c0_45 = arith.constant 0 : index
    %c0_46 = arith.constant 0 : index
    %43 = vector.load %arg8[%c17, %c0_45, %c0_46] : memref<18x16x384xbf16, #tpu.memory_space<vmem>>, vector<1x16x384xbf16>
    tpu.vector_store %arg8[%c17, %c0_45, %c0_46], %40 {strides = array<i32>} : memref<18x16x384xbf16, #tpu.memory_space<vmem>>, vector<1x16x384xbf16>,
    %c1_47 = arith.constant 1 : index
    %c0_48 = arith.constant 0 : index
    %c128_49 = arith.constant 128 : index
    %44 = vector.load %arg8[%c1_47, %c0_48, %c128_49] : memref<18x16x384xbf16, #tpu.memory_space<vmem>>, vector<16x16x128xbf16>
    tpu.vector_store %arg8[%c1_47, %c0_48, %c128_49], %39 {strides = array<i32>} : memref<18x16x384xbf16, #tpu.memory_space<vmem>>, vector<16x16x128xbf16>,
    %45 = vector.extract_strided_slice %39 {offsets = [0, 0, 0], sizes = [16, 15, 128], strides = [1, 1, 1]} : vector<16x16x128xbf16> to vector<16x15x128xbf16>
    %46 = tpu.concatenate %41, %45 in 1 : vector<16x1x128xbf16>, vector<16x15x128xbf16> -> vector<16x16x128xbf16>
    %c1_50 = arith.constant 1 : index
    %c0_51 = arith.constant 0 : index
    %c0_52 = arith.constant 0 : index
    %47 = vector.load %arg8[%c1_50, %c0_51, %c0_52] : memref<18x16x384xbf16, #tpu.memory_space<vmem>>, vector<16x16x128xbf16>
    tpu.vector_store %arg8[%c1_50, %c0_51, %c0_52], %46 {strides = array<i32>} : memref<18x16x384xbf16, #tpu.memory_space<vmem>>, vector<16x16x128xbf16>,
    %48 = vector.extract_strided_slice %39 {offsets = [0, 1, 0], sizes = [16, 15, 128], strides = [1, 1, 1]} : vector<16x16x128xbf16> to vector<16x15x128xbf16>
    %49 = tpu.concatenate %48, %41 in 1 : vector<16x15x128xbf16>, vector<16x1x128xbf16> -> vector<16x16x128xbf16>
    %c1_53 = arith.constant 1 : index
    %c0_54 = arith.constant 0 : index
    %c256_55 = arith.constant 256 : index
    %50 = vector.load %arg8[%c1_53, %c0_54, %c256_55] : memref<18x16x384xbf16, #tpu.memory_space<vmem>>, vector<16x16x128xbf16>
    tpu.vector_store %arg8[%c1_53, %c0_54, %c256_55], %49 {strides = array<i32>} : memref<18x16x384xbf16, #tpu.memory_space<vmem>>, vector<16x16x128xbf16>,
    %c0_56 = arith.constant 0 : index
    %c0_57 = arith.constant 0 : index
    %51 = vector.load %arg5[%c0_56, %c0_57] : memref<1x128xf32, #tpu.memory_space<vmem>>, vector<1x128xf32>
    %52 = vector.shape_cast %51 : vector<1x128xf32> to vector<1x128xf32>
    %53 = vector.broadcast %52 : vector<1x128xf32> to vector<256x128xf32>
    %c0_58 = arith.constant 0 : index
    %c0_59 = arith.constant 0 : index
    %c0_60 = arith.constant 0 : index
    %54 = vector.load %arg8[%c0_58, %c0_59, %c0_60] : memref<18x16x384xbf16, #tpu.memory_space<vmem>>, vector<16x16x384xbf16>
    %55 = vector.shape_cast %54 : vector<16x16x384xbf16> to vector<256x384xbf16>
    %c0_61 = arith.constant 0 : index
    %c0_62 = arith.constant 0 : index
    %c0_63 = arith.constant 0 : index
    %56 = vector.load %arg4[%c0_61, %c0_62, %c0_63] : memref<3x384x128xbf16, #tpu.memory_space<vmem>>, vector<1x384x128xbf16>
    %57 = vector.shape_cast %56 : vector<1x384x128xbf16> to vector<384x128xbf16>
    %cst_64 = arith.constant dense<0.000000e+00> : vector<256x128xf32>
    %58 = tpu.matmul %55, %57, %cst_64 {dimension_numbers = #tpu.dot_dimension_numbers<[1], [0], [0], [1], [0, 0, 1, 1], [], []>} : vector<256x384xbf16>, vector<384x128xbf16>, vector<256x128xf32> -> vector<256x128xf32>
    %59 = arith.addf %53, %58 : vector<256x128xf32>
    %c1_65 = arith.constant 1 : index
    %c0_66 = arith.constant 0 : index
    %c0_67 = arith.constant 0 : index
    %60 = vector.load %arg8[%c1_65, %c0_66, %c0_67] : memref<18x16x384xbf16, #tpu.memory_space<vmem>>, vector<16x16x384xbf16>
    %61 = vector.shape_cast %60 : vector<16x16x384xbf16> to vector<256x384xbf16>
    %c1_68 = arith.constant 1 : index
    %c0_69 = arith.constant 0 : index
    %c0_70 = arith.constant 0 : index
    %62 = vector.load %arg4[%c1_68, %c0_69, %c0_70] : memref<3x384x128xbf16, #tpu.memory_space<vmem>>, vector<1x384x128xbf16>
    %63 = vector.shape_cast %62 : vector<1x384x128xbf16> to vector<384x128xbf16>
    %cst_71 = arith.constant dense<0.000000e+00> : vector<256x128xf32>
    %64 = tpu.matmul %61, %63, %cst_71 {dimension_numbers = #tpu.dot_dimension_numbers<[1], [0], [0], [1], [0, 0, 1, 1], [], []>} : vector<256x384xbf16>, vector<384x128xbf16>, vector<256x128xf32> -> vector<256x128xf32>
    %65 = arith.addf %59, %64 : vector<256x128xf32>
    %c2_72 = arith.constant 2 : index
    %c0_73 = arith.constant 0 : index
    %c0_74 = arith.constant 0 : index
    %66 = vector.load %arg8[%c2_72, %c0_73, %c0_74] : memref<18x16x384xbf16, #tpu.memory_space<vmem>>, vector<16x16x384xbf16>
    %67 = vector.shape_cast %66 : vector<16x16x384xbf16> to vector<256x384xbf16>
    %c2_75 = arith.constant 2 : index
    %c0_76 = arith.constant 0 : index
    %c0_77 = arith.constant 0 : index
    %68 = vector.load %arg4[%c2_75, %c0_76, %c0_77] : memref<3x384x128xbf16, #tpu.memory_space<vmem>>, vector<1x384x128xbf16>
    %69 = vector.shape_cast %68 : vector<1x384x128xbf16> to vector<384x128xbf16>
    %cst_78 = arith.constant dense<0.000000e+00> : vector<256x128xf32>
    %70 = tpu.matmul %67, %69, %cst_78 {dimension_numbers = #tpu.dot_dimension_numbers<[1], [0], [0], [1], [0, 0, 1, 1], [], []>} : vector<256x384xbf16>, vector<384x128xbf16>, vector<256x128xf32> -> vector<256x128xf32>
    %71 = arith.addf %65, %70 : vector<256x128xf32>
    %c0_79 = arith.constant 0 : index
    %c1_80 = arith.constant 1 : index
    %c1_81 = arith.constant 1 : index
    %c0_82 = arith.constant 0 : index
    %72 = vector.load %arg1[%c0_79, %c1_80, %c1_81, %c0_82] : memref<1x18x24x128xf32, #tpu.memory_space<vmem>>, vector<1x16x16x128xf32>
    %73 = vector.shape_cast %72 : vector<1x16x16x128xf32> to vector<16x16x128xf32>
    %74 = vector.shape_cast %73 : vector<16x16x128xf32> to vector<256x128xf32>
    %75 = arith.addf %71, %74 : vector<256x128xf32>
    %c0_83 = arith.constant 0 : index
    %c0_84 = arith.constant 0 : index
    %c0_85 = arith.constant 0 : index
    %76 = vector.load %arg6[%c0_83, %c0_84, %c0_85] : memref<1x256x128xf32, #tpu.memory_space<vmem>>, vector<1x256x128xf32>
    %77 = vector.shape_cast %76 : vector<1x256x128xf32> to vector<256x128xf32>
    %78 = vector.shape_cast %75 : vector<256x128xf32> to vector<1x256x128xf32>
    tpu.vector_store %arg6[%c0_83, %c0_84, %c0_85], %78 {strides = array<i32>} : memref<1x256x128xf32, #tpu.memory_space<vmem>>, vector<1x256x128xf32>,
    return
  }
  func.func @transform_0(%arg0: i32) -> (i32, i32, i32, i32) {
    %c0_i32 = arith.constant 0 : i32
    %c0_i32_0 = arith.constant 0 : i32
    %c0_i32_1 = arith.constant 0 : i32
    %c0_i32_2 = arith.constant 0 : i32
    return %arg0, %c0_i32, %c0_i32_0, %c0_i32_1 : i32, i32, i32, i32
  }
  func.func @transform_1(%arg0: i32) -> (i32, i32, i32) {
    %c0_i32 = arith.constant 0 : i32
    %c0_i32_0 = arith.constant 0 : i32
    %c0_i32_1 = arith.constant 0 : i32
    %c0_i32_2 = arith.constant 0 : i32
    return %c0_i32, %c0_i32_0, %c0_i32_1 : i32, i32, i32
  }
  func.func @transform_2(%arg0: i32) -> (i32, i32) {
    %c0_i32 = arith.constant 0 : i32
    %c0_i32_0 = arith.constant 0 : i32
    %c0_i32_1 = arith.constant 0 : i32
    return %c0_i32, %c0_i32_0 : i32, i32
  }
  func.func @transform_3(%arg0: i32) -> (i32, i32, i32) {
    %c0_i32 = arith.constant 0 : i32
    %c0_i32_0 = arith.constant 0 : i32
    %c0_i32_1 = arith.constant 0 : i32
    %c0_i32_2 = arith.constant 0 : i32
    return %c0_i32, %c0_i32_0, %c0_i32_1 : i32, i32, i32
  }
  func.func @transform_4(%arg0: i32) -> (i32, i32) {
    %c0_i32 = arith.constant 0 : i32
    %c0_i32_0 = arith.constant 0 : i32
    %c0_i32_1 = arith.constant 0 : i32
    return %c0_i32, %c0_i32_0 : i32, i32
  }
  func.func @transform_5(%arg0: i32) -> (i32, i32, i32) {
    %c0_i32 = arith.constant 0 : i32
    %c0_i32_0 = arith.constant 0 : i32
    %c0_i32_1 = arith.constant 0 : i32
    return %arg0, %c0_i32, %c0_i32_0 : i32, i32, i32
  }
}

</mosaic_0001>

<llo_original>
// kernel: tpu_custom_call.1
$region0: #{tpu_custom_call.1}
  #allocation0 [shape = 'u32[]', space=smem, size = 0x4, offset = 0x4, fixed_abs, tag = 'smem constant byte address 0x4 - core index']
  #allocation1 [shape = 'u32[144,128]{1,0:T(1,128)}', space=vmem, size = 0x12000, scoped, tag = 'internal scratch']
  #allocation2 [shape = 'bf16[18,16,384]{2,1,0:T(8,128)(2,1)}', space=vmem, size = 0x36000, scoped, tag = 'scratch operand']
  #allocation3 [shape = 'bf16[18,16,384]{2,1,0:T(8,128)(2,1)}', space=vmem, size = 0x36000, scoped, tag = 'scratch operand']
  %s0 = inlined_call_operand.hbm [shape: f32[2,18,24,128], index: 0, kind: input, shape index: {}]
  %s1 = inlined_call_operand.hbm [shape: bf16[3,384,128], index: 1, kind: input, shape index: {}]
  %s2 = inlined_call_operand.vmem [shape: f32[1,128], index: 2, kind: input, shape index: {}]
  %s3 = inlined_call_operand.hbm [shape: bf16[3,384,128], index: 3, kind: input, shape index: {}]
  %s4 = inlined_call_operand.vmem [shape: f32[1,128], index: 4, kind: input, shape index: {}]
  %s5 = inlined_call_operand.hbm [shape: f32[2,256,128], index: 5, kind: output, shape index: {}]
  %s6 = sld [smem:[#allocation0]]
  $region65: #{tpu_custom_call.1} parent=0
    _
  %s8 = ssub.s32 1, %s6
  %s9 = scalar_select 0, %s8, %s6
  $region1: #{tpu_custom_call.1} parent=0
    #allocation4 [shape = 'u8[442368]{0}', space=vmem, size = 0x6c000, scoped, tag = 'input window, operand 0']
    #allocation5 [shape = 's32[2]{0}', space=sflag, size = 0x8, scoped, tag = 'scoped memory for tpu_custom_call.1']
    #allocation6 [shape = 's32[2]{0}', space=sflag, size = 0x8, scoped, tag = 'scoped memory for tpu_custom_call.1']
    #allocation7 [shape = 'u8[294912]{0}', space=vmem, size = 0x48000, scoped, tag = 'input window, operand 1, single buffered']
    #allocation8 [shape = 's32[1]{0}', space=sflag, size = 0x4, scoped, tag = 'scoped memory for tpu_custom_call.1']
    #allocation9 [shape = 'u8[294912]{0}', space=vmem, size = 0x48000, scoped, tag = 'input window, operand 3, single buffered']
    #allocation10 [shape = 'u8[262144]{0}', space=vmem, size = 0x40000, scoped, tag = 'output window, operand 0']
    %10 = vsyncpa [#allocation5], 0
    %s11 = scalar_lea.sflag [#allocation5], 1
    %12 = vsyncpa %s11, 0
    %13 = vsyncpa [#allocation8], 0
    %14 = vsyncpa [#allocation6], 0
    %s15 = scalar_lea.sflag [#allocation6], 1
    %16 = vsyncpa %s15, 0
    loop: start=0, step=1, limit=4
    $region2: #{tpu_custom_call.1} parent=1 // loop_pre_header
      _
    $region3: #{tpu_custom_call.1} parent=1 // loop_header
      %s18 = sphi 0, %s22
      %p19 = scmp.ge.s32.totalorder %s18, 4
      %s28 = sphi 0, %s30
      %s31 = sphi 0, %s28
      %s32 = sphi 0, %s31
      %s48 = sphi 0, %s32
      %s52 = sphi 0, %s52
      %s54 = sphi 0, %s52
      %s55 = sphi 0, %s54
      %s69 = sphi 0, %s55
      %s73 = sphi 0, %s73
      %s75 = sphi 0, %s73
      %s76 = sphi 0, %s75
      %s90 = sphi 0, %s76
      %s94 = sphi 0, %s94
      %s96 = sphi 0, %s94
      %s97 = sphi 0, %s96
      %s111 = sphi 0, %s97
      %s115 = sphi 0, %s115
      %s117 = sphi 0, %s115
      %s118 = sphi 0, %s117
      %s132 = sphi 0, %s118
      %s138 = sphi 0, %s140
      %s141 = sphi 0, %s138
      %s142 = sphi 0, %s141
      %s158 = sphi 0, %s142
    $region4: #{tpu_custom_call.1} parent=1 // loop_header_branch
      %21 = sbr.rel (%p19) target = $region8
    $region5: #{tpu_custom_call.1} parent=1 // loop_body
      %s23 = ssub.s32 %s18, 1
      %s24 = ssub.s32 %s18, 2
      %s25 = sadd.s32 %s18, 1
      %s26 = ssub.s32 %s18, %s25
      %p27 = scmp.eq.s32.totalorder %s26, 0
      %s29 = sadd.s32 %s28, 1
      %s30 = scalar_select %p27, %s28, %s29
      %p33 = pneg %p27
      %p34 = scmp.eq.s32.totalorder %s18, 1
      %p35 = por %p33, %p34
      %p36 = scmp.ne.s32.totalorder %s28, %s31
      %p37 = scmp.eq.s32.totalorder %s18, 0
      %p38 = por %p36, %p37
      %p39 = scmp.ne.s32.totalorder %s28, %s31
      %p40 = scmp.eq.s32.totalorder %s23, 1
      %p41 = por %p39, %p40
      %p42 = scmp.ne.s32.totalorder %s31, %s32
      %p43 = scmp.eq.s32.totalorder %s23, 0
      %p44 = por %p42, %p43
      %p45 = scmp.ne.s32.totalorder %s31, %s32
      %p46 = scmp.eq.s32.totalorder %s24, 1
      %p47 = por %p45, %p46
      %p49 = scmp.ne.s32.totalorder %s32, %s48
      %p50 = scmp.eq.s32.totalorder %s24, 0
      %p51 = por %p49, %p50
      %s53 = sadd.s32 %s52, 1
      %p56 = scmp.eq.s32.totalorder %s18, 1
      %p57 = scmp.ne.s32.totalorder %s52, %s54
      %p58 = scmp.eq.s32.totalorder %s18, 0
      %p59 = por %p57, %p58
      %p60 = scmp.ne.s32.totalorder %s52, %s54
      %p61 = scmp.eq.s32.totalorder %s23, 1
      %p62 = por %p60, %p61
      %p63 = scmp.ne.s32.totalorder %s54, %s55
      %p64 = scmp.eq.s32.totalorder %s23, 0
      %p65 = por %p63, %p64
      %p66 = scmp.ne.s32.totalorder %s54, %s55
      %p67 = scmp.eq.s32.totalorder %s24, 1
      %p68 = por %p66, %p67
      %p70 = scmp.ne.s32.totalorder %s55, %s69
      %p71 = scmp.eq.s32.totalorder %s24, 0
      %p72 = por %p70, %p71
      %s74 = sadd.s32 %s73, 1
      %p77 = scmp.eq.s32.totalorder %s18, 1
      %p78 = scmp.ne.s32.totalorder %s73, %s75
      %p79 = scmp.eq.s32.totalorder %s18, 0
      %p80 = por %p78, %p79
      %p81 = scmp.ne.s32.totalorder %s73, %s75
      %p82 = scmp.eq.s32.totalorder %s23, 1
      %p83 = por %p81, %p82
      %p84 = scmp.ne.s32.totalorder %s75, %s76
      %p85 = scmp.eq.s32.totalorder %s23, 0
      %p86 = por %p84, %p85
      %p87 = scmp.ne.s32.totalorder %s75, %s76
      %p88 = scmp.eq.s32.totalorder %s24, 1
      %p89 = por %p87, %p88
      %p91 = scmp.ne.s32.totalorder %s76, %s90
      %p92 = scmp.eq.s32.totalorder %s24, 0
      %p93 = por %p91, %p92
      %s95 = sadd.s32 %s94, 1
      %p98 = scmp.eq.s32.totalorder %s18, 1
      %p99 = scmp.ne.s32.totalorder %s94, %s96
      %p100 = scmp.eq.s32.totalorder %s18, 0
      %p101 = por %p99, %p100
      %p102 = scmp.ne.s32.totalorder %s94, %s96
      %p103 = scmp.eq.s32.totalorder %s23, 1
      %p104 = por %p102, %p103
      %p105 = scmp.ne.s32.totalorder %s96, %s97
      %p106 = scmp.eq.s32.totalorder %s23, 0
      %p107 = por %p105, %p106
      %p108 = scmp.ne.s32.totalorder %s96, %s97
      %p109 = scmp.eq.s32.totalorder %s24, 1
      %p110 = por %p108, %p109
      %p112 = scmp.ne.s32.totalorder %s97, %s111
      %p113 = scmp.eq.s32.totalorder %s24, 0
      %p114 = por %p112, %p113
      %s116 = sadd.s32 %s115, 1
      %p119 = scmp.eq.s32.totalorder %s18, 1
      %p120 = scmp.ne.s32.totalorder %s115, %s117
      %p121 = scmp.eq.s32.totalorder %s18, 0
      %p122 = por %p120, %p121
      %p123 = scmp.ne.s32.totalorder %s115, %s117
      %p124 = scmp.eq.s32.totalorder %s23, 1
      %p125 = por %p123, %p124
      %p126 = scmp.ne.s32.totalorder %s117, %s118
      %p127 = scmp.eq.s32.totalorder %s23, 0
      %p128 = por %p126, %p127
      %p129 = scmp.ne.s32.totalorder %s117, %s118
      %p130 = scmp.eq.s32.totalorder %s24, 1
      %p131 = por %p129, %p130
      %p133 = scmp.ne.s32.totalorder %s118, %s132
      %p134 = scmp.eq.s32.totalorder %s24, 0
      %p135 = por %p133, %p134
      %s136 = ssub.s32 %s18, %s25
      %p137 = scmp.eq.s32.totalorder %s136, 0
      %s139 = sadd.s32 %s138, 1
      %s140 = scalar_select %p137, %s138, %s139
      %p143 = pneg %p137
      %p144 = scmp.eq.s32.totalorder %s18, 1
      %p145 = por %p143, %p144
      %p146 = scmp.ne.s32.totalorder %s138, %s141
      %p147 = scmp.eq.s32.totalorder %s18, 0
      %p148 = por %p146, %p147
      %p149 = scmp.ne.s32.totalorder %s138, %s141
      %p150 = scmp.eq.s32.totalorder %s23, 1
      %p151 = por %p149, %p150
      %p152 = scmp.ne.s32.totalorder %s141, %s142
      %p153 = scmp.eq.s32.totalorder %s23, 0
      %p154 = por %p152, %p153
      %p155 = scmp.ne.s32.totalorder %s141, %s142
      %p156 = scmp.eq.s32.totalorder %s24, 1
      %p157 = por %p155, %p156
      %p159 = scmp.ne.s32.totalorder %s142, %s158
      %p160 = scmp.eq.s32.totalorder %s24, 0
      %p161 = por %p159, %p160
      %p162 = scmp.le.s32.totalorder 1, %s18
      %p163 = scmp.lt.s32.totalorder %s18, 3
      %p164 = pnand %p162, %p163
      %p165 = pneg %p164
      // Predicated region
      $region9: #{tpu_custom_call.1} parent=5 // pred_check
        _
      $region10: #{tpu_custom_call.1} parent=5 // pred_check_branch
        %167 = sbr.rel (%p164) target = $region12
      $region11: #{tpu_custom_call.1} parent=5 // pred_region
        %s168 = ssub.s32 %s18, 1
        // Predicated region
        $region13: #{tpu_custom_call.1} parent=11 // pred_check
          %p169 = pneg %p65
        $region14: #{tpu_custom_call.1} parent=11 // pred_check_branch
          %171 = sbr.rel (%p169) target = $region16
        $region15: #{tpu_custom_call.1} parent=11 // pred_region
          %s173 = ssub.s32 9216, 9216
          %174 = vsyncadd [#allocation8], %s173
          %s175 = sshll.u32 [#allocation7], 4
          %s176 = int_to_ptr.vmem [resolvable:$true] %s175
          %181 = dma.hbm_to_vmem [thread:$0]  %s1, 9216, %s176, [#allocation8], 64, 64, 4
        $region16: #{tpu_custom_call.1} parent=11 // pred_fallthru
          _
        // Predicated region
        $region17: #{tpu_custom_call.1} parent=11 // pred_check
          %p182 = pneg %p86
        $region18: #{tpu_custom_call.1} parent=11 // pred_check_branch
          %184 = sbr.rel (%p182) target = $region20
        $region19: #{tpu_custom_call.1} parent=11 // pred_region
          _
        $region20: #{tpu_custom_call.1} parent=11 // pred_fallthru
          _
        // Predicated region
        $region21: #{tpu_custom_call.1} parent=11 // pred_check
          %p185 = pneg %p107
        $region22: #{tpu_custom_call.1} parent=11 // pred_check_branch
          %187 = sbr.rel (%p185) target = $region24
        $region23: #{tpu_custom_call.1} parent=11 // pred_region
          %s189 = ssub.s32 9216, 9216
          %190 = vsyncadd [#allocation8], %s189
          %s191 = sshll.u32 [#allocation9], 4
          %s192 = int_to_ptr.vmem [resolvable:$true] %s191
          %197 = dma.hbm_to_vmem [thread:$0]  %s3, 9216, %s192, [#allocation8], 64, 64, 4
        $region24: #{tpu_custom_call.1} parent=11 // pred_fallthru
          _
        // Predicated region
        $region25: #{tpu_custom_call.1} parent=11 // pred_check
          %p198 = pneg %p128
        $region26: #{tpu_custom_call.1} parent=11 // pred_check_branch
          %200 = sbr.rel (%p198) target = $region28
        $region27: #{tpu_custom_call.1} parent=11 // pred_region
          _
        $region28: #{tpu_custom_call.1} parent=11 // pred_fallthru
          _
      $region12: #{tpu_custom_call.1} parent=5 // pred_fallthru
        _
      %p201 = scmp.lt.s32.totalorder %s18, 2
      // Predicated region
      $region29: #{tpu_custom_call.1} parent=5 // pred_check
        %p202 = pneg %p201
      $region30: #{tpu_custom_call.1} parent=5 // pred_check_branch
        %204 = sbr.rel (%p202) target = $region32
      $region31: #{tpu_custom_call.1} parent=5 // pred_region
        // Predicated region
        $region33: #{tpu_custom_call.1} parent=31 // pred_check
          %p205 = pneg %p38
        $region34: #{tpu_custom_call.1} parent=31 // pred_check_branch
          %207 = sbr.rel (%p205) target = $region36
        $region35: #{tpu_custom_call.1} parent=31 // pred_region
          %s208 = sand.u32 %s28, 1
          %s209 = scalar_lea.sflag [#allocation5], %s208
          %s210 = sand.u32 %s28, 1
          %s211 = smul.addr %s210, 432
          %s212 = scalar_lea.vmem [#allocation4], %s211
          %s214 = ssub.s32 6912, 6912
          %215 = vsyncadd %s209, %s214
          %s216 = smul.addr %s18, 54
          %s217 = smul.addr %s216, 128
          %s218 = scalar_lea.hbm %s0, %s217
          %s219 = sshll.u32 %s212, 4
          %s220 = int_to_ptr.vmem [resolvable:$true] %s219
          %225 = dma.hbm_to_vmem [thread:$0]  %s218, 6912, %s220, %s209, 128, 128, 8
        $region36: #{tpu_custom_call.1} parent=31 // pred_fallthru
          _
      $region32: #{tpu_custom_call.1} parent=5 // pred_fallthru
        _
      %p226 = scmp.le.s32.totalorder 1, %s18
      %p227 = scmp.lt.s32.totalorder %s18, 3
      %p228 = pnand %p226, %p227
      %p229 = pneg %p228
      // Predicated region
      $region37: #{tpu_custom_call.1} parent=5 // pred_check
        _
      $region38: #{tpu_custom_call.1} parent=5 // pred_check_branch
        %231 = sbr.rel (%p228) target = $region40
      $region39: #{tpu_custom_call.1} parent=5 // pred_region
        %s232 = ssub.s32 %s18, 1
        %s233 = sand.u32 %s31, 1
        %s234 = scalar_lea.sflag [#allocation5], %s233
        %s235 = sand.u32 %s31, 1
        %s236 = smul.addr %s235, 432
        %s237 = scalar_lea.vmem [#allocation4], %s236
        // Predicated region
        $region41: #{tpu_custom_call.1} parent=39 // pred_check
          %p238 = pneg %p44
        $region42: #{tpu_custom_call.1} parent=39 // pred_check_branch
          %240 = sbr.rel (%p238) target = $region44
        $region43: #{tpu_custom_call.1} parent=39 // pred_region
          %241 = dma.done %s234, 6912
        $region44: #{tpu_custom_call.1} parent=39 // pred_fallthru
          _
        // Predicated region
        $region45: #{tpu_custom_call.1} parent=39 // pred_check
          %p242 = pneg %p65
        $region46: #{tpu_custom_call.1} parent=39 // pred_check_branch
          %244 = sbr.rel (%p242) target = $region48
        $region47: #{tpu_custom_call.1} parent=39 // pred_region
          %245 = dma.done [#allocation8], 9216
        $region48: #{tpu_custom_call.1} parent=39 // pred_fallthru
          _
        // Predicated region
        $region49: #{tpu_custom_call.1} parent=39 // pred_check
          %p246 = pneg %p107
        $region50: #{tpu_custom_call.1} parent=39 // pred_check_branch
          %248 = sbr.rel (%p246) target = $region52
        $region51: #{tpu_custom_call.1} parent=39 // pred_region
          %249 = dma.done [#allocation8], 9216
        $region52: #{tpu_custom_call.1} parent=39 // pred_fallthru
          _
        %s250 = sand.u32 %s31, 1
        %s251 = scalar_lea.sflag [#allocation5], %s250
        %s252 = sand.u32 %s31, 1
        %s253 = smul.addr %s252, 432
        %s254 = scalar_lea.vmem [#allocation4], %s253
        %p255 = pneg %p44
        %p256 = pneg %p41
        %p257 = pneg %p65
        %p258 = pneg %p62
        %p259 = pneg %p86
        %p260 = pneg %p83
        %p261 = pneg %p107
        %p262 = pneg %p104
        %p263 = pneg %p128
        %p264 = pneg %p125
        %p265 = pneg %p154
        %p266 = pneg %p151
        %s267 = sand.u32 %s141, 1
        %s268 = scalar_lea.sflag [#allocation6], %s267
        %s269 = sand.u32 %s141, 1
        %s270 = smul.addr %s269, 256
        %s271 = scalar_lea.vmem [#allocation10], %s270
        %v273 = vld [vmem:[%s237] sm:$0xff]
        %v274 = vld [vmem:[%s237 + $0x8] sm:$0xff]
        %v275 = vld [vmem:[%s237 + $0x18] sm:$0xff]
        %v276 = vld [vmem:[%s237 + $0x20] sm:$0xff]
        %v277 = vld [vmem:[%s237 + $0x30] sm:$0xff]
        %v278 = vld [vmem:[%s237 + $0x38] sm:$0xff]
        %v279 = vld [vmem:[%s237 + $0x48] sm:$0xff]
        %v280 = vld [vmem:[%s237 + $0x50] sm:$0xff]
        %v281 = vld [vmem:[%s237 + $0x60] sm:$0xff]
        %v282 = vld [vmem:[%s237 + $0x68] sm:$0xff]
        %v283 = vld [vmem:[%s237 + $0x78] sm:$0xff]
        %v284 = vld [vmem:[%s237 + $0x80] sm:$0xff]
        %v285 = vld [vmem:[%s237 + $0x90] sm:$0xff]
        %v286 = vld [vmem:[%s237 + $0x98] sm:$0xff]
        %v287 = vld [vmem:[%s237 + $0xa8] sm:$0xff]
        %v288 = vld [vmem:[%s237 + $0xb0] sm:$0xff]
        %v289 = vld [vmem:[%s237 + $0xc0] sm:$0xff]
        %v290 = vld [vmem:[%s237 + $0xc8] sm:$0xff]
        %v291 = vld [vmem:[%s237 + $0xd8] sm:$0xff]
        %v292 = vld [vmem:[%s237 + $0xe0] sm:$0xff]
        %v293 = vld [vmem:[%s237 + $0xf0] sm:$0xff]
        %v294 = vld [vmem:[%s237 + $0xf8] sm:$0xff]
        %v295 = vld [vmem:[%s237 + $0x108] sm:$0xff]
        %v296 = vld [vmem:[%s237 + $0x110] sm:$0xff]
        %v297 = vld [vmem:[%s237 + $0x120] sm:$0xff]
        %v298 = vld [vmem:[%s237 + $0x128] sm:$0xff]
        %v299 = vld [vmem:[%s237 + $0x138] sm:$0xff]
        %v300 = vld [vmem:[%s237 + $0x140] sm:$0xff]
        %v301 = vld [vmem:[%s237 + $0x150] sm:$0xff]
        %v302 = vld [vmem:[%s237 + $0x158] sm:$0xff]
        %v303 = vld [vmem:[%s237 + $0x168] sm:$0xff]
        %v304 = vld [vmem:[%s237 + $0x170] sm:$0xff]
        %v305 = vld [vmem:[%s237 + $0x180] sm:$0xff]
        %v306 = vld [vmem:[%s237 + $0x188] sm:$0xff]
        %v307 = vld [vmem:[%s237 + $0x198] sm:$0xff]
        %v308 = vld [vmem:[%s237 + $0x1a0] sm:$0xff]
        %v309 = vpack.c.bf16 %v274, %v273
        %v310 = vpack.c.bf16 %v276, %v275
        %v311 = vpack.c.bf16 %v278, %v277
        %v312 = vpack.c.bf16 %v280, %v279
        %v313 = vpack.c.bf16 %v282, %v281
        %v314 = vpack.c.bf16 %v284, %v283
        %v315 = vpack.c.bf16 %v286, %v285
        %v316 = vpack.c.bf16 %v288, %v287
        %v317 = vpack.c.bf16 %v290, %v289
        %v318 = vpack.c.bf16 %v292, %v291
        %v319 = vpack.c.bf16 %v294, %v293
        %v320 = vpack.c.bf16 %v296, %v295
        %v321 = vpack.c.bf16 %v298, %v297
        %v322 = vpack.c.bf16 %v300, %v299
        %v323 = vpack.c.bf16 %v302, %v301
        %v324 = vpack.c.bf16 %v304, %v303
        %v325 = vpack.c.bf16 %v306, %v305
        %v326 = vpack.c.bf16 %v308, %v307
        %v345 = vunpack.c.l.b16 %v309
        %v346 = vunpack.c.h.b16 %v309
        %v347 = vunpack.c.l.b16 %v310
        %v348 = vunpack.c.h.b16 %v310
        %v349 = vunpack.c.l.b16 %v311
        %v350 = vunpack.c.h.b16 %v311
        %v351 = vunpack.c.l.b16 %v312
        %v352 = vunpack.c.h.b16 %v312
        %v353 = vunpack.c.l.b16 %v313
        %v354 = vunpack.c.h.b16 %v313
        %v355 = vunpack.c.l.b16 %v314
        %v356 = vunpack.c.h.b16 %v314
        %v357 = vunpack.c.l.b16 %v315
        %v358 = vunpack.c.h.b16 %v315
        %v359 = vunpack.c.l.b16 %v316
        %v360 = vunpack.c.h.b16 %v316
        %v361 = vunpack.c.l.b16 %v317
        %v362 = vunpack.c.h.b16 %v317
        %v363 = vunpack.c.l.b16 %v318
        %v364 = vunpack.c.h.b16 %v318
        %v365 = vunpack.c.l.b16 %v319
        %v366 = vunpack.c.h.b16 %v319
        %v367 = vunpack.c.l.b16 %v320
        %v368 = vunpack.c.h.b16 %v320
        %v369 = vunpack.c.l.b16 %v321
        %v370 = vunpack.c.h.b16 %v321
        %v371 = vunpack.c.l.b16 %v322
        %v372 = vunpack.c.h.b16 %v322
        %v373 = vunpack.c.l.b16 %v323
        %v374 = vunpack.c.h.b16 %v323
        %v375 = vunpack.c.l.b16 %v324
        %v376 = vunpack.c.h.b16 %v324
        %v377 = vunpack.c.l.b16 %v325
        %v378 = vunpack.c.h.b16 %v325
        %v379 = vunpack.c.l.b16 %v326
        %v380 = vunpack.c.h.b16 %v326
        %v381 = vpack.c.b16 %v345, %v345
        %v382 = vpack.c.b16 %v346, %v346
        %v383 = vpack.c.b16 %v347, %v347
        %v384 = vpack.c.b16 %v348, %v348
        %v385 = vpack.c.b16 %v349, %v349
        %v386 = vpack.c.b16 %v350, %v350
        %v387 = vpack.c.b16 %v351, %v351
        %v388 = vpack.c.b16 %v352, %v352
        %v389 = vpack.c.b16 %v353, %v353
        %v390 = vpack.c.b16 %v354, %v354
        %v391 = vpack.c.b16 %v355, %v355
        %v392 = vpack.c.b16 %v356, %v356
        %v393 = vpack.c.b16 %v357, %v357
        %v394 = vpack.c.b16 %v358, %v358
        %v395 = vpack.c.b16 %v359, %v359
        %v396 = vpack.c.b16 %v360, %v360
        %v397 = vpack.c.b16 %v361, %v361
        %v398 = vpack.c.b16 %v362, %v362
        %v399 = vpack.c.b16 %v363, %v363
        %v400 = vpack.c.b16 %v364, %v364
        %v401 = vpack.c.b16 %v365, %v365
        %v402 = vpack.c.b16 %v366, %v366
        %v403 = vpack.c.b16 %v367, %v367
        %v404 = vpack.c.b16 %v368, %v368
        %v405 = vpack.c.b16 %v369, %v369
        %v406 = vpack.c.b16 %v370, %v370
        %v407 = vpack.c.b16 %v371, %v371
        %v408 = vpack.c.b16 %v372, %v372
        %v409 = vpack.c.b16 %v373, %v373
        %v410 = vpack.c.b16 %v374, %v374
        %v411 = vpack.c.b16 %v375, %v375
        %v412 = vpack.c.b16 %v376, %v376
        %v413 = vpack.c.b16 %v377, %v377
        %v414 = vpack.c.b16 %v378, %v378
        %v415 = vpack.c.b16 %v379, %v379
        %v416 = vpack.c.b16 %v380, %v380
        %453 = vst [vmem:[#allocation2] sm:$0xf] %v381
        %454 = vst [vmem:[#allocation2 + $0xc] sm:$0xf] %v382
        %455 = vst [vmem:[#allocation2 + $0x18] sm:$0xf] %v383
        %456 = vst [vmem:[#allocation2 + $0x24] sm:$0xf] %v384
        %457 = vst [vmem:[#allocation2 + $0x30] sm:$0xf] %v385
        %458 = vst [vmem:[#allocation2 + $0x3c] sm:$0xf] %v386
        %459 = vst [vmem:[#allocation2 + $0x48] sm:$0xf] %v387
        %460 = vst [vmem:[#allocation2 + $0x54] sm:$0xf] %v388
        %461 = vst [vmem:[#allocation2 + $0x60] sm:$0xf] %v389
        %462 = vst [vmem:[#allocation2 + $0x6c] sm:$0xf] %v390
        %463 = vst [vmem:[#allocation2 + $0x78] sm:$0xf] %v391
        %464 = vst [vmem:[#allocation2 + $0x84] sm:$0xf] %v392
        %465 = vst [vmem:[#allocation2 + $0x90] sm:$0xf] %v393
        %466 = vst [vmem:[#allocation2 + $0x9c] sm:$0xf] %v394
        %467 = vst [vmem:[#allocation2 + $0xa8] sm:$0xf] %v395
        %468 = vst [vmem:[#allocation2 + $0xb4] sm:$0xf] %v396
        %469 = vst [vmem:[#allocation2 + $0xc0] sm:$0xf] %v397
        %470 = vst [vmem:[#allocation2 + $0xcc] sm:$0xf] %v398
        %471 = vst [vmem:[#allocation2 + $0xd8] sm:$0xf] %v399
        %472 = vst [vmem:[#allocation2 + $0xe4] sm:$0xf] %v400
        %473 = vst [vmem:[#allocation2 + $0xf0] sm:$0xf] %v401
        %474 = vst [vmem:[#allocation2 + $0xfc] sm:$0xf] %v402
        %475 = vst [vmem:[#allocation2 + $0x108] sm:$0xf] %v403
        %476 = vst [vmem:[#allocation2 + $0x114] sm:$0xf] %v404
        %477 = vst [vmem:[#allocation2 + $0x120] sm:$0xf] %v405
        %478 = vst [vmem:[#allocation2 + $0x12c] sm:$0xf] %v406
        %479 = vst [vmem:[#allocation2 + $0x138] sm:$0xf] %v407
        %480 = vst [vmem:[#allocation2 + $0x144] sm:$0xf] %v408
        %481 = vst [vmem:[#allocation2 + $0x150] sm:$0xf] %v409
        %482 = vst [vmem:[#allocation2 + $0x15c] sm:$0xf] %v410
        %483 = vst [vmem:[#allocation2 + $0x168] sm:$0xf] %v411
        %484 = vst [vmem:[#allocation2 + $0x174] sm:$0xf] %v412
        %485 = vst [vmem:[#allocation2 + $0x180] sm:$0xf] %v413
        %486 = vst [vmem:[#allocation2 + $0x18c] sm:$0xf] %v414
        %487 = vst [vmem:[#allocation2 + $0x198] sm:$0xf] %v415
        %488 = vst [vmem:[#allocation2 + $0x1a4] sm:$0xf] %v416
        %v489 = vld [vmem:[%s237 + $0x1] sm:$0xff]
        %v490 = vld [vmem:[%s237 + $0x9] sm:$0xff]
        %v491 = vld [vmem:[%s237 + $0x19] sm:$0xff]
        %v492 = vld [vmem:[%s237 + $0x21] sm:$0xff]
        %v493 = vld [vmem:[%s237 + $0x31] sm:$0xff]
        %v494 = vld [vmem:[%s237 + $0x39] sm:$0xff]
        %v495 = vld [vmem:[%s237 + $0x49] sm:$0xff]
        %v496 = vld [vmem:[%s237 + $0x51] sm:$0xff]
        %v497 = vld [vmem:[%s237 + $0x61] sm:$0xff]
        %v498 = vld [vmem:[%s237 + $0x69] sm:$0xff]
        %v499 = vld [vmem:[%s237 + $0x79] sm:$0xff]
        %v500 = vld [vmem:[%s237 + $0x81] sm:$0xff]
        %v501 = vld [vmem:[%s237 + $0x91] sm:$0xff]
        %v502 = vld [vmem:[%s237 + $0x99] sm:$0xff]
        %v503 = vld [vmem:[%s237 + $0xa9] sm:$0xff]
        %v504 = vld [vmem:[%s237 + $0xb1] sm:$0xff]
        %v505 = vld [vmem:[%s237 + $0xc1] sm:$0xff]
        %v506 = vld [vmem:[%s237 + $0xc9] sm:$0xff]
        %v507 = vld [vmem:[%s237 + $0xd9] sm:$0xff]
        %v508 = vld [vmem:[%s237 + $0xe1] sm:$0xff]
        %v509 = vld [vmem:[%s237 + $0xf1] sm:$0xff]
        %v510 = vld [vmem:[%s237 + $0xf9] sm:$0xff]
        %v511 = vld [vmem:[%s237 + $0x109] sm:$0xff]
        %v512 = vld [vmem:[%s237 + $0x111] sm:$0xff]
        %v513 = vld [vmem:[%s237 + $0x121] sm:$0xff]
        %v514 = vld [vmem:[%s237 + $0x129] sm:$0xff]
        %v515 = vld [vmem:[%s237 + $0x139] sm:$0xff]
        %v516 = vld [vmem:[%s237 + $0x141] sm:$0xff]
        %v517 = vld [vmem:[%s237 + $0x151] sm:$0xff]
        %v518 = vld [vmem:[%s237 + $0x159] sm:$0xff]
        %v519 = vld [vmem:[%s237 + $0x169] sm:$0xff]
        %v520 = vld [vmem:[%s237 + $0x171] sm:$0xff]
        %v521 = vld [vmem:[%s237 + $0x181] sm:$0xff]
        %v522 = vld [vmem:[%s237 + $0x189] sm:$0xff]
        %v523 = vld [vmem:[%s237 + $0x199] sm:$0xff]
        %v524 = vld [vmem:[%s237 + $0x1a1] sm:$0xff]
        %v525 = vpack.c.bf16 %v490, %v489
        %v526 = vpack.c.bf16 %v492, %v491
        %v527 = vpack.c.bf16 %v494, %v493
        %v528 = vpack.c.bf16 %v496, %v495
        %v529 = vpack.c.bf16 %v498, %v497
        %v530 = vpack.c.bf16 %v500, %v499
        %v531 = vpack.c.bf16 %v502, %v501
        %v532 = vpack.c.bf16 %v504, %v503
        %v533 = vpack.c.bf16 %v506, %v505
        %v534 = vpack.c.bf16 %v508, %v507
        %v535 = vpack.c.bf16 %v510, %v509
        %v536 = vpack.c.bf16 %v512, %v511
        %v537 = vpack.c.bf16 %v514, %v513
        %v538 = vpack.c.bf16 %v516, %v515
        %v539 = vpack.c.bf16 %v518, %v517
        %v540 = vpack.c.bf16 %v520, %v519
        %v541 = vpack.c.bf16 %v522, %v521
        %v542 = vpack.c.bf16 %v524, %v523
        %v561 = vunpack.c.l.b16 %v525
        %v562 = vunpack.c.h.b16 %v525
        %v563 = vunpack.c.l.b16 %v526
        %v564 = vunpack.c.h.b16 %v526
        %v565 = vunpack.c.l.b16 %v527
        %v566 = vunpack.c.h.b16 %v527
        %v567 = vunpack.c.l.b16 %v528
        %v568 = vunpack.c.h.b16 %v528
        %v569 = vunpack.c.l.b16 %v529
        %v570 = vunpack.c.h.b16 %v529
        %v571 = vunpack.c.l.b16 %v530
        %v572 = vunpack.c.h.b16 %v530
        %v573 = vunpack.c.l.b16 %v531
        %v574 = vunpack.c.h.b16 %v531
        %v575 = vunpack.c.l.b16 %v532
        %v576 = vunpack.c.h.b16 %v532
        %v577 = vunpack.c.l.b16 %v533
        %v578 = vunpack.c.h.b16 %v533
        %v579 = vunpack.c.l.b16 %v534
        %v580 = vunpack.c.h.b16 %v534
        %v581 = vunpack.c.l.b16 %v535
        %v582 = vunpack.c.h.b16 %v535
        %v583 = vunpack.c.l.b16 %v536
        %v584 = vunpack.c.h.b16 %v536
        %v585 = vunpack.c.l.b16 %v537
        %v586 = vunpack.c.h.b16 %v537
        %v587 = vunpack.c.l.b16 %v538
        %v588 = vunpack.c.h.b16 %v538
        %v589 = vunpack.c.l.b16 %v539
        %v590 = vunpack.c.h.b16 %v539
        %v591 = vunpack.c.l.b16 %v540
        %v592 = vunpack.c.h.b16 %v540
        %v593 = vunpack.c.l.b16 %v541
        %v594 = vunpack.c.h.b16 %v541
        %v595 = vunpack.c.l.b16 %v542
        %v596 = vunpack.c.h.b16 %v542
        %v597 = vpack.c.b16 %v561, %v561
        %v598 = vpack.c.b16 %v562, %v562
        %v599 = vpack.c.b16 %v563, %v563
        %v600 = vpack.c.b16 %v564, %v564
        %v601 = vpack.c.b16 %v565, %v565
        %v602 = vpack.c.b16 %v566, %v566
        %v603 = vpack.c.b16 %v567, %v567
        %v604 = vpack.c.b16 %v568, %v568
        %v605 = vpack.c.b16 %v569, %v569
        %v606 = vpack.c.b16 %v570, %v570
        %v607 = vpack.c.b16 %v571, %v571
        %v608 = vpack.c.b16 %v572, %v572
        %v609 = vpack.c.b16 %v573, %v573
        %v610 = vpack.c.b16 %v574, %v574
        %v611 = vpack.c.b16 %v575, %v575
        %v612 = vpack.c.b16 %v576, %v576
        %v613 = vpack.c.b16 %v577, %v577
        %v614 = vpack.c.b16 %v578, %v578
        %v615 = vpack.c.b16 %v579, %v579
        %v616 = vpack.c.b16 %v580, %v580
        %v617 = vpack.c.b16 %v581, %v581
        %v618 = vpack.c.b16 %v582, %v582
        %v619 = vpack.c.b16 %v583, %v583
        %v620 = vpack.c.b16 %v584, %v584
        %v621 = vpack.c.b16 %v585, %v585
        %v622 = vpack.c.b16 %v586, %v586
        %v623 = vpack.c.b16 %v587, %v587
        %v624 = vpack.c.b16 %v588, %v588
        %v625 = vpack.c.b16 %v589, %v589
        %v626 = vpack.c.b16 %v590, %v590
        %v627 = vpack.c.b16 %v591, %v591
        %v628 = vpack.c.b16 %v592, %v592
        %v629 = vpack.c.b16 %v593, %v593
        %v630 = vpack.c.b16 %v594, %v594
        %v631 = vpack.c.b16 %v595, %v595
        %v632 = vpack.c.b16 %v596, %v596
        %669 = vst [vmem:[#allocation2 + $0x4] sm:$0xf] %v597
        %670 = vst [vmem:[#allocation2 + $0x10] sm:$0xf] %v598
        %671 = vst [vmem:[#allocation2 + $0x1c] sm:$0xf] %v599
        %672 = vst [vmem:[#allocation2 + $0x28] sm:$0xf] %v600
        %673 = vst [vmem:[#allocation2 + $0x34] sm:$0xf] %v601
        %674 = vst [vmem:[#allocation2 + $0x40] sm:$0xf] %v602
        %675 = vst [vmem:[#allocation2 + $0x4c] sm:$0xf] %v603
        %676 = vst [vmem:[#allocation2 + $0x58] sm:$0xf] %v604
        %677 = vst [vmem:[#allocation2 + $0x64] sm:$0xf] %v605
        %678 = vst [vmem:[#allocation2 + $0x70] sm:$0xf] %v606
        %679 = vst [vmem:[#allocation2 + $0x7c] sm:$0xf] %v607
        %680 = vst [vmem:[#allocation2 + $0x88] sm:$0xf] %v608
        %681 = vst [vmem:[#allocation2 + $0x94] sm:$0xf] %v609
        %682 = vst [vmem:[#allocation2 + $0xa0] sm:$0xf] %v610
        %683 = vst [vmem:[#allocation2 + $0xac] sm:$0xf] %v611
        %684 = vst [vmem:[#allocation2 + $0xb8] sm:$0xf] %v612
        %685 = vst [vmem:[#allocation2 + $0xc4] sm:$0xf] %v613
        %686 = vst [vmem:[#allocation2 + $0xd0] sm:$0xf] %v614
        %687 = vst [vmem:[#allocation2 + $0xdc] sm:$0xf] %v615
        %688 = vst [vmem:[#allocation2 + $0xe8] sm:$0xf] %v616
        %689 = vst [vmem:[#allocation2 + $0xf4] sm:$0xf] %v617
        %690 = vst [vmem:[#allocation2 + $0x100] sm:$0xf] %v618
        %691 = vst [vmem:[#allocation2 + $0x10c] sm:$0xf] %v619
        %692 = vst [vmem:[#allocation2 + $0x118] sm:$0xf] %v620
        %693 = vst [vmem:[#allocation2 + $0x124] sm:$0xf] %v621
        %694 = vst [vmem:[#allocation2 + $0x130] sm:$0xf] %v622
        %695 = vst [vmem:[#allocation2 + $0x13c] sm:$0xf] %v623
        %696 = vst [vmem:[#allocation2 + $0x148] sm:$0xf] %v624
        %697 = vst [vmem:[#allocation2 + $0x154] sm:$0xf] %v625
        %698 = vst [vmem:[#allocation2 + $0x160] sm:$0xf] %v626
        %699 = vst [vmem:[#allocation2 + $0x16c] sm:$0xf] %v627
        %700 = vst [vmem:[#allocation2 + $0x178] sm:$0xf] %v628
        %701 = vst [vmem:[#allocation2 + $0x184] sm:$0xf] %v629
        %702 = vst [vmem:[#allocation2 + $0x190] sm:$0xf] %v630
        %703 = vst [vmem:[#allocation2 + $0x19c] sm:$0xf] %v631
        %704 = vst [vmem:[#allocation2 + $0x1a8] sm:$0xf] %v632
        %v705 = vld [vmem:[%s237 + $0x2] sm:$0xff]
        %v706 = vld [vmem:[%s237 + $0xa] sm:$0xff]
        %v707 = vld [vmem:[%s237 + $0x1a] sm:$0xff]
        %v708 = vld [vmem:[%s237 + $0x22] sm:$0xff]
        %v709 = vld [vmem:[%s237 + $0x32] sm:$0xff]
        %v710 = vld [vmem:[%s237 + $0x3a] sm:$0xff]
        %v711 = vld [vmem:[%s237 + $0x4a] sm:$0xff]
        %v712 = vld [vmem:[%s237 + $0x52] sm:$0xff]
        %v713 = vld [vmem:[%s237 + $0x62] sm:$0xff]
        %v714 = vld [vmem:[%s237 + $0x6a] sm:$0xff]
        %v715 = vld [vmem:[%s237 + $0x7a] sm:$0xff]
        %v716 = vld [vmem:[%s237 + $0x82] sm:$0xff]
        %v717 = vld [vmem:[%s237 + $0x92] sm:$0xff]
        %v718 = vld [vmem:[%s237 + $0x9a] sm:$0xff]
        %v719 = vld [vmem:[%s237 + $0xaa] sm:$0xff]
        %v720 = vld [vmem:[%s237 + $0xb2] sm:$0xff]
        %v721 = vld [vmem:[%s237 + $0xc2] sm:$0xff]
        %v722 = vld [vmem:[%s237 + $0xca] sm:$0xff]
        %v723 = vld [vmem:[%s237 + $0xda] sm:$0xff]
        %v724 = vld [vmem:[%s237 + $0xe2] sm:$0xff]
        %v725 = vld [vmem:[%s237 + $0xf2] sm:$0xff]
        %v726 = vld [vmem:[%s237 + $0xfa] sm:$0xff]
        %v727 = vld [vmem:[%s237 + $0x10a] sm:$0xff]
        %v728 = vld [vmem:[%s237 + $0x112] sm:$0xff]
        %v729 = vld [vmem:[%s237 + $0x122] sm:$0xff]
        %v730 = vld [vmem:[%s237 + $0x12a] sm:$0xff]
        %v731 = vld [vmem:[%s237 + $0x13a] sm:$0xff]
        %v732 = vld [vmem:[%s237 + $0x142] sm:$0xff]
        %v733 = vld [vmem:[%s237 + $0x152] sm:$0xff]
        %v734 = vld [vmem:[%s237 + $0x15a] sm:$0xff]
        %v735 = vld [vmem:[%s237 + $0x16a] sm:$0xff]
        %v736 = vld [vmem:[%s237 + $0x172] sm:$0xff]
        %v737 = vld [vmem:[%s237 + $0x182] sm:$0xff]
        %v738 = vld [vmem:[%s237 + $0x18a] sm:$0xff]
        %v739 = vld [vmem:[%s237 + $0x19a] sm:$0xff]
        %v740 = vld [vmem:[%s237 + $0x1a2] sm:$0xff]
        %v741 = vpack.c.bf16 %v706, %v705
        %v742 = vpack.c.bf16 %v708, %v707
        %v743 = vpack.c.bf16 %v710, %v709
        %v744 = vpack.c.bf16 %v712, %v711
        %v745 = vpack.c.bf16 %v714, %v713
        %v746 = vpack.c.bf16 %v716, %v715
        %v747 = vpack.c.bf16 %v718, %v717
        %v748 = vpack.c.bf16 %v720, %v719
        %v749 = vpack.c.bf16 %v722, %v721
        %v750 = vpack.c.bf16 %v724, %v723
        %v751 = vpack.c.bf16 %v726, %v725
        %v752 = vpack.c.bf16 %v728, %v727
        %v753 = vpack.c.bf16 %v730, %v729
        %v754 = vpack.c.bf16 %v732, %v731
        %v755 = vpack.c.bf16 %v734, %v733
        %v756 = vpack.c.bf16 %v736, %v735
        %v757 = vpack.c.bf16 %v738, %v737
        %v758 = vpack.c.bf16 %v740, %v739
        %v777 = vunpack.c.l.b16 %v741
        %v778 = vunpack.c.h.b16 %v741
        %v779 = vunpack.c.l.b16 %v742
        %v780 = vunpack.c.h.b16 %v742
        %v781 = vunpack.c.l.b16 %v743
        %v782 = vunpack.c.h.b16 %v743
        %v783 = vunpack.c.l.b16 %v744
        %v784 = vunpack.c.h.b16 %v744
        %v785 = vunpack.c.l.b16 %v745
        %v786 = vunpack.c.h.b16 %v745
        %v787 = vunpack.c.l.b16 %v746
        %v788 = vunpack.c.h.b16 %v746
        %v789 = vunpack.c.l.b16 %v747
        %v790 = vunpack.c.h.b16 %v747
        %v791 = vunpack.c.l.b16 %v748
        %v792 = vunpack.c.h.b16 %v748
        %v793 = vunpack.c.l.b16 %v749
        %v794 = vunpack.c.h.b16 %v749
        %v795 = vunpack.c.l.b16 %v750
        %v796 = vunpack.c.h.b16 %v750
        %v797 = vunpack.c.l.b16 %v751
        %v798 = vunpack.c.h.b16 %v751
        %v799 = vunpack.c.l.b16 %v752
        %v800 = vunpack.c.h.b16 %v752
        %v801 = vunpack.c.l.b16 %v753
        %v802 = vunpack.c.h.b16 %v753
        %v803 = vunpack.c.l.b16 %v754
        %v804 = vunpack.c.h.b16 %v754
        %v805 = vunpack.c.l.b16 %v755
        %v806 = vunpack.c.h.b16 %v755
        %v807 = vunpack.c.l.b16 %v756
        %v808 = vunpack.c.h.b16 %v756
        %v809 = vunpack.c.l.b16 %v757
        %v810 = vunpack.c.h.b16 %v757
        %v811 = vunpack.c.l.b16 %v758
        %v812 = vunpack.c.h.b16 %v758
        %v813 = vpack.c.b16 %v777, %v777
        %v814 = vpack.c.b16 %v778, %v778
        %v815 = vpack.c.b16 %v779, %v779
        %v816 = vpack.c.b16 %v780, %v780
        %v817 = vpack.c.b16 %v781, %v781
        %v818 = vpack.c.b16 %v782, %v782
        %v819 = vpack.c.b16 %v783, %v783
        %v820 = vpack.c.b16 %v784, %v784
        %v821 = vpack.c.b16 %v785, %v785
        %v822 = vpack.c.b16 %v786, %v786
        %v823 = vpack.c.b16 %v787, %v787
        %v824 = vpack.c.b16 %v788, %v788
        %v825 = vpack.c.b16 %v789, %v789
        %v826 = vpack.c.b16 %v790, %v790
        %v827 = vpack.c.b16 %v791, %v791
        %v828 = vpack.c.b16 %v792, %v792
        %v829 = vpack.c.b16 %v793, %v793
        %v830 = vpack.c.b16 %v794, %v794
        %v831 = vpack.c.b16 %v795, %v795
        %v832 = vpack.c.b16 %v796, %v796
        %v833 = vpack.c.b16 %v797, %v797
        %v834 = vpack.c.b16 %v798, %v798
        %v835 = vpack.c.b16 %v799, %v799
        %v836 = vpack.c.b16 %v800, %v800
        %v837 = vpack.c.b16 %v801, %v801
        %v838 = vpack.c.b16 %v802, %v802
        %v839 = vpack.c.b16 %v803, %v803
        %v840 = vpack.c.b16 %v804, %v804
        %v841 = vpack.c.b16 %v805, %v805
        %v842 = vpack.c.b16 %v806, %v806
        %v843 = vpack.c.b16 %v807, %v807
        %v844 = vpack.c.b16 %v808, %v808
        %v845 = vpack.c.b16 %v809, %v809
        %v846 = vpack.c.b16 %v810, %v810
        %v847 = vpack.c.b16 %v811, %v811
        %v848 = vpack.c.b16 %v812, %v812
        %885 = vst [vmem:[#allocation2 + $0x8] sm:$0xf] %v813
        %886 = vst [vmem:[#allocation2 + $0x14] sm:$0xf] %v814
        %887 = vst [vmem:[#allocation2 + $0x20] sm:$0xf] %v815
        %888 = vst [vmem:[#allocation2 + $0x2c] sm:$0xf] %v816
        %889 = vst [vmem:[#allocation2 + $0x38] sm:$0xf] %v817
        %890 = vst [vmem:[#allocation2 + $0x44] sm:$0xf] %v818
        %891 = vst [vmem:[#allocation2 + $0x50] sm:$0xf] %v819
        %892 = vst [vmem:[#allocation2 + $0x5c] sm:$0xf] %v820
        %893 = vst [vmem:[#allocation2 + $0x68] sm:$0xf] %v821
        %894 = vst [vmem:[#allocation2 + $0x74] sm:$0xf] %v822
        %895 = vst [vmem:[#allocation2 + $0x80] sm:$0xf] %v823
        %896 = vst [vmem:[#allocation2 + $0x8c] sm:$0xf] %v824
        %897 = vst [vmem:[#allocation2 + $0x98] sm:$0xf] %v825
        %898 = vst [vmem:[#allocation2 + $0xa4] sm:$0xf] %v826
        %899 = vst [vmem:[#allocation2 + $0xb0] sm:$0xf] %v827
        %900 = vst [vmem:[#allocation2 + $0xbc] sm:$0xf] %v828
        %901 = vst [vmem:[#allocation2 + $0xc8] sm:$0xf] %v829
        %902 = vst [vmem:[#allocation2 + $0xd4] sm:$0xf] %v830
        %903 = vst [vmem:[#allocation2 + $0xe0] sm:$0xf] %v831
        %904 = vst [vmem:[#allocation2 + $0xec] sm:$0xf] %v832
        %905 = vst [vmem:[#allocation2 + $0xf8] sm:$0xf] %v833
        %906 = vst [vmem:[#allocation2 + $0x104] sm:$0xf] %v834
        %907 = vst [vmem:[#allocation2 + $0x110] sm:$0xf] %v835
        %908 = vst [vmem:[#allocation2 + $0x11c] sm:$0xf] %v836
        %909 = vst [vmem:[#allocation2 + $0x128] sm:$0xf] %v837
        %910 = vst [vmem:[#allocation2 + $0x134] sm:$0xf] %v838
        %911 = vst [vmem:[#allocation2 + $0x140] sm:$0xf] %v839
        %912 = vst [vmem:[#allocation2 + $0x14c] sm:$0xf] %v840
        %913 = vst [vmem:[#allocation2 + $0x158] sm:$0xf] %v841
        %914 = vst [vmem:[#allocation2 + $0x164] sm:$0xf] %v842
        %915 = vst [vmem:[#allocation2 + $0x170] sm:$0xf] %v843
        %916 = vst [vmem:[#allocation2 + $0x17c] sm:$0xf] %v844
        %917 = vst [vmem:[#allocation2 + $0x188] sm:$0xf] %v845
        %918 = vst [vmem:[#allocation2 + $0x194] sm:$0xf] %v846
        %919 = vst [vmem:[#allocation2 + $0x1a0] sm:$0xf] %v847
        %920 = vst [vmem:[#allocation2 + $0x1ac] sm:$0xf] %v848
        %v921 = vld [vmem:[%s2] sm:$0x1]
        %v923 = vlaneseq
        %v924 = vshrl.u32 %v923, 7
        %v925 = vsub.s32 0, %v924
        %v926 = vrot.slane %v921, %v925
        %v928 = vld [vmem:[#allocation2] sm:$0xff]
        %v929 = vld [vmem:[#allocation2 + $0x8] sm:$0xf]
        %v930 = vld [vmem:[#allocation2 + $0xc] sm:$0xff]
        %v931 = vld [vmem:[#allocation2 + $0x14] sm:$0xf]
        %v932 = vld [vmem:[#allocation2 + $0x18] sm:$0xff]
        %v933 = vld [vmem:[#allocation2 + $0x20] sm:$0xf]
        %v934 = vld [vmem:[#allocation2 + $0x24] sm:$0xff]
        %v935 = vld [vmem:[#allocation2 + $0x2c] sm:$0xf]
        %v936 = vld [vmem:[#allocation2 + $0x30] sm:$0xff]
        %v937 = vld [vmem:[#allocation2 + $0x38] sm:$0xf]
        %v938 = vld [vmem:[#allocation2 + $0x3c] sm:$0xff]
        %v939 = vld [vmem:[#allocation2 + $0x44] sm:$0xf]
        %v940 = vld [vmem:[#allocation2 + $0x48] sm:$0xff]
        %v941 = vld [vmem:[#allocation2 + $0x50] sm:$0xf]
        %v942 = vld [vmem:[#allocation2 + $0x54] sm:$0xff]
        %v943 = vld [vmem:[#allocation2 + $0x5c] sm:$0xf]
        %v944 = vld [vmem:[#allocation2 + $0x60] sm:$0xff]
        %v945 = vld [vmem:[#allocation2 + $0x68] sm:$0xf]
        %v946 = vld [vmem:[#allocation2 + $0x6c] sm:$0xff]
        %v947 = vld [vmem:[#allocation2 + $0x74] sm:$0xf]
        %v948 = vld [vmem:[#allocation2 + $0x78] sm:$0xff]
        %v949 = vld [vmem:[#allocation2 + $0x80] sm:$0xf]
        %v950 = vld [vmem:[#allocation2 + $0x84] sm:$0xff]
        %v951 = vld [vmem:[#allocation2 + $0x8c] sm:$0xf]
        %v952 = vld [vmem:[#allocation2 + $0x90] sm:$0xff]
        %v953 = vld [vmem:[#allocation2 + $0x98] sm:$0xf]
        %v954 = vld [vmem:[#allocation2 + $0x9c] sm:$0xff]
        %v955 = vld [vmem:[#allocation2 + $0xa4] sm:$0xf]
        %v956 = vld [vmem:[#allocation2 + $0xa8] sm:$0xff]
        %v957 = vld [vmem:[#allocation2 + $0xb0] sm:$0xf]
        %v958 = vld [vmem:[#allocation2 + $0xb4] sm:$0xff]
        %v959 = vld [vmem:[#allocation2 + $0xbc] sm:$0xf]
        %v960 = vld [vmem:[#allocation2 + $0xc0] sm:$0xff]
        %v961 = vld [vmem:[#allocation2 + $0xc8] sm:$0xf]
        %v962 = vld [vmem:[#allocation2 + $0xcc] sm:$0xff]
        %v963 = vld [vmem:[#allocation2 + $0xd4] sm:$0xf]
        %v964 = vld [vmem:[#allocation2 + $0xd8] sm:$0xff]
        %v965 = vld [vmem:[#allocation2 + $0xe0] sm:$0xf]
        %v966 = vld [vmem:[#allocation2 + $0xe4] sm:$0xff]
        %v967 = vld [vmem:[#allocation2 + $0xec] sm:$0xf]
        %v968 = vld [vmem:[#allocation2 + $0xf0] sm:$0xff]
        %v969 = vld [vmem:[#allocation2 + $0xf8] sm:$0xf]
        %v970 = vld [vmem:[#allocation2 + $0xfc] sm:$0xff]
        %v971 = vld [vmem:[#allocation2 + $0x104] sm:$0xf]
        %v972 = vld [vmem:[#allocation2 + $0x108] sm:$0xff]
        %v973 = vld [vmem:[#allocation2 + $0x110] sm:$0xf]
        %v974 = vld [vmem:[#allocation2 + $0x114] sm:$0xff]
        %v975 = vld [vmem:[#allocation2 + $0x11c] sm:$0xf]
        %v976 = vld [vmem:[#allocation2 + $0x120] sm:$0xff]
        %v977 = vld [vmem:[#allocation2 + $0x128] sm:$0xf]
        %v978 = vld [vmem:[#allocation2 + $0x12c] sm:$0xff]
        %v979 = vld [vmem:[#allocation2 + $0x134] sm:$0xf]
        %v980 = vld [vmem:[#allocation2 + $0x138] sm:$0xff]
        %v981 = vld [vmem:[#allocation2 + $0x140] sm:$0xf]
        %v982 = vld [vmem:[#allocation2 + $0x144] sm:$0xff]
        %v983 = vld [vmem:[#allocation2 + $0x14c] sm:$0xf]
        %v984 = vld [vmem:[#allocation2 + $0x150] sm:$0xff]
        %v985 = vld [vmem:[#allocation2 + $0x158] sm:$0xf]
        %v986 = vld [vmem:[#allocation2 + $0x15c] sm:$0xff]
        %v987 = vld [vmem:[#allocation2 + $0x164] sm:$0xf]
        %v988 = vld [vmem:[#allocation2 + $0x168] sm:$0xff]
        %v989 = vld [vmem:[#allocation2 + $0x170] sm:$0xf]
        %v990 = vld [vmem:[#allocation2 + $0x174] sm:$0xff]
        %v991 = vld [vmem:[#allocation2 + $0x17c] sm:$0xf]
        %v992 = vld [vmem:[#allocation7] sm:$0xf]
        %v993 = vld [vmem:[#allocation7 + $0x4] sm:$0xf]
        %v994 = vld [vmem:[#allocation7 + $0x8] sm:$0xf]
        %v995 = vld [vmem:[#allocation7 + $0xc] sm:$0xf]
        %v996 = vld [vmem:[#allocation7 + $0x10] sm:$0xf]
        %v997 = vld [vmem:[#allocation7 + $0x14] sm:$0xf]
        %v998 = vld [vmem:[#allocation7 + $0x18] sm:$0xf]
        %v999 = vld [vmem:[#allocation7 + $0x1c] sm:$0xf]
        %v1000 = vld [vmem:[#allocation7 + $0x20] sm:$0xf]
        %v1001 = vld [vmem:[#allocation7 + $0x24] sm:$0xf]
        %v1002 = vld [vmem:[#allocation7 + $0x28] sm:$0xf]
        %v1003 = vld [vmem:[#allocation7 + $0x2c] sm:$0xf]
        %v1004 = vld [vmem:[#allocation7 + $0x30] sm:$0xf]
        %v1005 = vld [vmem:[#allocation7 + $0x34] sm:$0xf]
        %v1006 = vld [vmem:[#allocation7 + $0x38] sm:$0xf]
        %v1007 = vld [vmem:[#allocation7 + $0x3c] sm:$0xf]
        %v1008 = vld [vmem:[#allocation7 + $0x40] sm:$0xf]
        %v1009 = vld [vmem:[#allocation7 + $0x44] sm:$0xf]
        %v1010 = vld [vmem:[#allocation7 + $0x48] sm:$0xf]
        %v1011 = vld [vmem:[#allocation7 + $0x4c] sm:$0xf]
        %v1012 = vld [vmem:[#allocation7 + $0x50] sm:$0xf]
        %v1013 = vld [vmem:[#allocation7 + $0x54] sm:$0xf]
        %v1014 = vld [vmem:[#allocation7 + $0x58] sm:$0xf]
        %v1015 = vld [vmem:[#allocation7 + $0x5c] sm:$0xf]
        %v1016 = vld [vmem:[#allocation7 + $0x60] sm:$0xf]
        %v1017 = vld [vmem:[#allocation7 + $0x64] sm:$0xf]
        %v1018 = vld [vmem:[#allocation7 + $0x68] sm:$0xf]
        %v1019 = vld [vmem:[#allocation7 + $0x6c] sm:$0xf]
        %v1020 = vld [vmem:[#allocation7 + $0x70] sm:$0xf]
        %v1021 = vld [vmem:[#allocation7 + $0x74] sm:$0xf]
        %v1022 = vld [vmem:[#allocation7 + $0x78] sm:$0xf]
        %v1023 = vld [vmem:[#allocation7 + $0x7c] sm:$0xf]
        %v1024 = vld [vmem:[#allocation7 + $0x80] sm:$0xf]
        %v1025 = vld [vmem:[#allocation7 + $0x84] sm:$0xf]
        %v1026 = vld [vmem:[#allocation7 + $0x88] sm:$0xf]
        %v1027 = vld [vmem:[#allocation7 + $0x8c] sm:$0xf]
        %v1028 = vld [vmem:[#allocation7 + $0x90] sm:$0xf]
        %v1029 = vld [vmem:[#allocation7 + $0x94] sm:$0xf]
        %v1030 = vld [vmem:[#allocation7 + $0x98] sm:$0xf]
        %v1031 = vld [vmem:[#allocation7 + $0x9c] sm:$0xf]
        %v1032 = vld [vmem:[#allocation7 + $0xa0] sm:$0xf]
        %v1033 = vld [vmem:[#allocation7 + $0xa4] sm:$0xf]
        %v1034 = vld [vmem:[#allocation7 + $0xa8] sm:$0xf]
        %v1035 = vld [vmem:[#allocation7 + $0xac] sm:$0xf]
        %v1036 = vld [vmem:[#allocation7 + $0xb0] sm:$0xf]
        %v1037 = vld [vmem:[#allocation7 + $0xb4] sm:$0xf]
        %v1038 = vld [vmem:[#allocation7 + $0xb8] sm:$0xf]
        %v1039 = vld [vmem:[#allocation7 + $0xbc] sm:$0xf]
        %v1104 = vunpack.c.l.b16 %v928
        %v1105 = vunpack.c.h.b16 %v928
        %v1106 = vunpack.c.l.b16 %v929
        %v1107 = vunpack.c.l.b16 %v930
        %v1108 = vunpack.c.h.b16 %v930
        %v1109 = vunpack.c.l.b16 %v931
        %v1110 = vunpack.c.l.b16 %v932
        %v1111 = vunpack.c.h.b16 %v932
        %v1112 = vunpack.c.l.b16 %v933
        %v1113 = vunpack.c.l.b16 %v934
        %v1114 = vunpack.c.h.b16 %v934
        %v1115 = vunpack.c.l.b16 %v935
        %v1116 = vunpack.c.l.b16 %v936
        %v1117 = vunpack.c.h.b16 %v936
        %v1118 = vunpack.c.l.b16 %v937
        %v1119 = vunpack.c.l.b16 %v938
        %v1120 = vunpack.c.h.b16 %v938
        %v1121 = vunpack.c.l.b16 %v939
        %v1122 = vunpack.c.l.b16 %v940
        %v1123 = vunpack.c.h.b16 %v940
        %v1124 = vunpack.c.l.b16 %v941
        %v1125 = vunpack.c.l.b16 %v942
        %v1126 = vunpack.c.h.b16 %v942
        %v1127 = vunpack.c.l.b16 %v943
        %v1128 = vunpack.c.l.b16 %v944
        %v1129 = vunpack.c.h.b16 %v944
        %v1130 = vunpack.c.l.b16 %v945
        %v1131 = vunpack.c.l.b16 %v946
        %v1132 = vunpack.c.h.b16 %v946
        %v1133 = vunpack.c.l.b16 %v947
        %v1134 = vunpack.c.l.b16 %v948
        %v1135 = vunpack.c.h.b16 %v948
        %v1136 = vunpack.c.l.b16 %v949
        %v1137 = vunpack.c.l.b16 %v950
        %v1138 = vunpack.c.h.b16 %v950
        %v1139 = vunpack.c.l.b16 %v951
        %v1140 = vunpack.c.l.b16 %v952
        %v1141 = vunpack.c.h.b16 %v952
        %v1142 = vunpack.c.l.b16 %v953
        %v1143 = vunpack.c.l.b16 %v954
        %v1144 = vunpack.c.h.b16 %v954
        %v1145 = vunpack.c.l.b16 %v955
        %v1146 = vunpack.c.l.b16 %v956
        %v1147 = vunpack.c.h.b16 %v956
        %v1148 = vunpack.c.l.b16 %v957
        %v1149 = vunpack.c.l.b16 %v958
        %v1150 = vunpack.c.h.b16 %v958
        %v1151 = vunpack.c.l.b16 %v959
        %v1152 = vunpack.c.l.b16 %v960
        %v1153 = vunpack.c.h.b16 %v960
        %v1154 = vunpack.c.l.b16 %v961
        %v1155 = vunpack.c.l.b16 %v962
        %v1156 = vunpack.c.h.b16 %v962
        %v1157 = vunpack.c.l.b16 %v963
        %v1158 = vunpack.c.l.b16 %v964
        %v1159 = vunpack.c.h.b16 %v964
        %v1160 = vunpack.c.l.b16 %v965
        %v1161 = vunpack.c.l.b16 %v966
        %v1162 = vunpack.c.h.b16 %v966
        %v1163 = vunpack.c.l.b16 %v967
        %v1164 = vunpack.c.l.b16 %v968
        %v1165 = vunpack.c.h.b16 %v968
        %v1166 = vunpack.c.l.b16 %v969
        %v1167 = vunpack.c.l.b16 %v970
        %v1168 = vunpack.c.h.b16 %v970
        %v1169 = vunpack.c.l.b16 %v971
        %v1170 = vunpack.c.l.b16 %v972
        %v1171 = vunpack.c.h.b16 %v972
        %v1172 = vunpack.c.l.b16 %v973
        %v1173 = vunpack.c.l.b16 %v974
        %v1174 = vunpack.c.h.b16 %v974
        %v1175 = vunpack.c.l.b16 %v975
        %v1176 = vunpack.c.l.b16 %v976
        %v1177 = vunpack.c.h.b16 %v976
        %v1178 = vunpack.c.l.b16 %v977
        %v1179 = vunpack.c.l.b16 %v978
        %v1180 = vunpack.c.h.b16 %v978
        %v1181 = vunpack.c.l.b16 %v979
        %v1182 = vunpack.c.l.b16 %v980
        %v1183 = vunpack.c.h.b16 %v980
        %v1184 = vunpack.c.l.b16 %v981
        %v1185 = vunpack.c.l.b16 %v982
        %v1186 = vunpack.c.h.b16 %v982
        %v1187 = vunpack.c.l.b16 %v983
        %v1188 = vunpack.c.l.b16 %v984
        %v1189 = vunpack.c.h.b16 %v984
        %v1190 = vunpack.c.l.b16 %v985
        %v1191 = vunpack.c.l.b16 %v986
        %v1192 = vunpack.c.h.b16 %v986
        %v1193 = vunpack.c.l.b16 %v987
        %v1194 = vunpack.c.l.b16 %v988
        %v1195 = vunpack.c.h.b16 %v988
        %v1196 = vunpack.c.l.b16 %v989
        %v1197 = vunpack.c.l.b16 %v990
        %v1198 = vunpack.c.h.b16 %v990
        %v1199 = vunpack.c.l.b16 %v991
        %v1200 = vpack.c.b16 %v1107, %v1104
        %v1201 = vpack.c.b16 %v1108, %v1105
        %v1202 = vpack.c.b16 %v1109, %v1106
        %v1203 = vpack.c.b16 %v1113, %v1110
        %v1204 = vpack.c.b16 %v1114, %v1111
        %v1205 = vpack.c.b16 %v1115, %v1112
        %v1206 = vpack.c.b16 %v1119, %v1116
        %v1207 = vpack.c.b16 %v1120, %v1117
        %v1208 = vpack.c.b16 %v1121, %v1118
        %v1209 = vpack.c.b16 %v1125, %v1122
        %v1210 = vpack.c.b16 %v1126, %v1123
        %v1211 = vpack.c.b16 %v1127, %v1124
        %v1212 = vpack.c.b16 %v1131, %v1128
        %v1213 = vpack.c.b16 %v1132, %v1129
        %v1214 = vpack.c.b16 %v1133, %v1130
        %v1215 = vpack.c.b16 %v1137, %v1134
        %v1216 = vpack.c.b16 %v1138, %v1135
        %v1217 = vpack.c.b16 %v1139, %v1136
        %v1218 = vpack.c.b16 %v1143, %v1140
        %v1219 = vpack.c.b16 %v1144, %v1141
        %v1220 = vpack.c.b16 %v1145, %v1142
        %v1221 = vpack.c.b16 %v1149, %v1146
        %v1222 = vpack.c.b16 %v1150, %v1147
        %v1223 = vpack.c.b16 %v1151, %v1148
        %v1224 = vpack.c.b16 %v1155, %v1152
        %v1225 = vpack.c.b16 %v1156, %v1153
        %v1226 = vpack.c.b16 %v1157, %v1154
        %v1227 = vpack.c.b16 %v1161, %v1158
        %v1228 = vpack.c.b16 %v1162, %v1159
        %v1229 = vpack.c.b16 %v1163, %v1160
        %v1230 = vpack.c.b16 %v1167, %v1164
        %v1231 = vpack.c.b16 %v1168, %v1165
        %v1232 = vpack.c.b16 %v1169, %v1166
        %v1233 = vpack.c.b16 %v1173, %v1170
        %v1234 = vpack.c.b16 %v1174, %v1171
        %v1235 = vpack.c.b16 %v1175, %v1172
        %v1236 = vpack.c.b16 %v1179, %v1176
        %v1237 = vpack.c.b16 %v1180, %v1177
        %v1238 = vpack.c.b16 %v1181, %v1178
        %v1239 = vpack.c.b16 %v1185, %v1182
        %v1240 = vpack.c.b16 %v1186, %v1183
        %v1241 = vpack.c.b16 %v1187, %v1184
        %v1242 = vpack.c.b16 %v1191, %v1188
        %v1243 = vpack.c.b16 %v1192, %v1189
        %v1244 = vpack.c.b16 %v1193, %v1190
        %v1245 = vpack.c.b16 %v1197, %v1194
        %v1246 = vpack.c.b16 %v1198, %v1195
        %v1247 = vpack.c.b16 %v1199, %v1196
        %v1344 = vunpack.c.l.b16 %v992
        %v1345 = vunpack.c.l.b16 %v993
        %v1346 = vunpack.c.l.b16 %v994
        %v1347 = vunpack.c.l.b16 %v995
        %v1348 = vunpack.c.l.b16 %v996
        %v1349 = vunpack.c.l.b16 %v997
        %v1350 = vunpack.c.l.b16 %v998
        %v1351 = vunpack.c.l.b16 %v999
        %v1352 = vunpack.c.l.b16 %v1000
        %v1353 = vunpack.c.l.b16 %v1001
        %v1354 = vunpack.c.l.b16 %v1002
        %v1355 = vunpack.c.l.b16 %v1003
        %v1356 = vunpack.c.l.b16 %v1004
        %v1357 = vunpack.c.l.b16 %v1005
        %v1358 = vunpack.c.l.b16 %v1006
        %v1359 = vunpack.c.l.b16 %v1007
        %v1360 = vunpack.c.l.b16 %v1008
        %v1361 = vunpack.c.l.b16 %v1009
        %v1362 = vunpack.c.l.b16 %v1010
        %v1363 = vunpack.c.l.b16 %v1011
        %v1364 = vunpack.c.l.b16 %v1012
        %v1365 = vunpack.c.l.b16 %v1013
        %v1366 = vunpack.c.l.b16 %v1014
        %v1367 = vunpack.c.l.b16 %v1015
        %v1368 = vunpack.c.l.b16 %v1016
        %v1369 = vunpack.c.l.b16 %v1017
        %v1370 = vunpack.c.l.b16 %v1018
        %v1371 = vunpack.c.l.b16 %v1019
        %v1372 = vunpack.c.l.b16 %v1020
        %v1373 = vunpack.c.l.b16 %v1021
        %v1374 = vunpack.c.l.b16 %v1022
        %v1375 = vunpack.c.l.b16 %v1023
        %v1376 = vunpack.c.l.b16 %v1024
        %v1377 = vunpack.c.l.b16 %v1025
        %v1378 = vunpack.c.l.b16 %v1026
        %v1379 = vunpack.c.l.b16 %v1027
        %v1380 = vunpack.c.l.b16 %v1028
        %v1381 = vunpack.c.l.b16 %v1029
        %v1382 = vunpack.c.l.b16 %v1030
        %v1383 = vunpack.c.l.b16 %v1031
        %v1384 = vunpack.c.l.b16 %v1032
        %v1385 = vunpack.c.l.b16 %v1033
        %v1386 = vunpack.c.l.b16 %v1034
        %v1387 = vunpack.c.l.b16 %v1035
        %v1388 = vunpack.c.l.b16 %v1036
        %v1389 = vunpack.c.l.b16 %v1037
        %v1390 = vunpack.c.l.b16 %v1038
        %v1391 = vunpack.c.l.b16 %v1039
        %v1392 = vpack.c.b16 %v1345, %v1344
        %v1393 = vpack.c.b16 %v1347, %v1346
        %v1394 = vpack.c.b16 %v1349, %v1348
        %v1395 = vpack.c.b16 %v1351, %v1350
        %v1396 = vpack.c.b16 %v1353, %v1352
        %v1397 = vpack.c.b16 %v1355, %v1354
        %v1398 = vpack.c.b16 %v1357, %v1356
        %v1399 = vpack.c.b16 %v1359, %v1358
        %v1400 = vpack.c.b16 %v1361, %v1360
        %v1401 = vpack.c.b16 %v1363, %v1362
        %v1402 = vpack.c.b16 %v1365, %v1364
        %v1403 = vpack.c.b16 %v1367, %v1366
        %v1404 = vpack.c.b16 %v1369, %v1368
        %v1405 = vpack.c.b16 %v1371, %v1370
        %v1406 = vpack.c.b16 %v1373, %v1372
        %v1407 = vpack.c.b16 %v1375, %v1374
        %v1408 = vpack.c.b16 %v1377, %v1376
        %v1409 = vpack.c.b16 %v1379, %v1378
        %v1410 = vpack.c.b16 %v1381, %v1380
        %v1411 = vpack.c.b16 %v1383, %v1382
        %v1412 = vpack.c.b16 %v1385, %v1384
        %v1413 = vpack.c.b16 %v1387, %v1386
        %v1414 = vpack.c.b16 %v1389, %v1388
        %v1415 = vpack.c.b16 %v1391, %v1390
        %1440 = vmatprep.subr.bf16.mxu0 0
        %1441 = vmatpush1.bf16.msra.mxu0 %v1399
        %1442 = vmatprep.subr.bf16.mxu0 0
        %1443 = vmatpush1.bf16.msra.mxu0 %v1398
        %1444 = vmatprep.subr.bf16.mxu0 0
        %1445 = vmatpush1.bf16.msra.mxu0 %v1397
        %1446 = vmatprep.subr.bf16.mxu0 0
        %1447 = vmatpush1.bf16.msra.mxu0 %v1396
        %1448 = vmatprep.subr.bf16.mxu0 0
        %1449 = vmatpush1.bf16.msra.mxu0 %v1395
        %1450 = vmatprep.subr.bf16.mxu0 0
        %1451 = vmatpush1.bf16.msra.mxu0 %v1394
        %1452 = vmatprep.subr.bf16.mxu0 0
        %1453 = vmatpush1.bf16.msra.mxu0 %v1393
        %1454 = vmatprep.subr.bf16.mxu0 0
        %1455 = vmatpush1.bf16.msra.mxu0 %v1392
        %1456 = vmatprep.subr.bf16.mxu0 0
        %1457 = vmatpush2.bf16.msra.mxu0 %v1407
        %1458 = vmatprep.subr.bf16.mxu0 0
        %1459 = vmatpush2.bf16.msra.mxu0 %v1406
        %1460 = vmatprep.subr.bf16.mxu0 0
        %1461 = vmatpush2.bf16.msra.mxu0 %v1405
        %1462 = vmatprep.subr.bf16.mxu0 0
        %1463 = vmatpush2.bf16.msra.mxu0 %v1404
        %1464 = vmatprep.subr.bf16.mxu0 0
        %1465 = vmatpush2.bf16.msra.mxu0 %v1403
        %1466 = vmatprep.subr.bf16.mxu0 0
        %1467 = vmatpush2.bf16.msra.mxu0 %v1402
        %1468 = vmatprep.subr.bf16.mxu0 0
        %1469 = vmatpush2.bf16.msra.mxu0 %v1401
        %1470 = vmatprep.subr.bf16.mxu0 0
        %1471 = vmatpush2.bf16.msra.mxu0 %v1400
        %1472 = vmatprep.mubr.bf16.mxu0 %v1201
        %1473 = vmatmul.mubr.bf16.gmra.mxu0 %v1200
        %v1474 = vpop.f32.mrf.mxu0
        %v1475 = vadd.f32 0.0, %v1474
        %v1476 = vpop.f32.mrf.mxu0
        %v1477 = vpop.f32.mrf.mxu0
        %v1478 = vadd.f32 0.0, %v1477
        %v1479 = vpop.f32.mrf.mxu0
        %1480 = vmatprep.mubr.bf16.mxu0 %v1204
        %1481 = vmatmul.mubr.bf16.gmra.mxu0 %v1203
        %v1482 = vpop.f32.mrf.mxu0
        %v1483 = vadd.f32 0.0, %v1482
        %v1484 = vpop.f32.mrf.mxu0
        %v1485 = vpop.f32.mrf.mxu0
        %v1486 = vadd.f32 0.0, %v1485
        %v1487 = vpop.f32.mrf.mxu0
        %1488 = vmatprep.mubr.bf16.mxu0 %v1207
        %1489 = vmatmul.mubr.bf16.gmra.mxu0 %v1206
        %v1490 = vpop.f32.mrf.mxu0
        %v1491 = vadd.f32 0.0, %v1490
        %v1492 = vpop.f32.mrf.mxu0
        %v1493 = vpop.f32.mrf.mxu0
        %v1494 = vadd.f32 0.0, %v1493
        %v1495 = vpop.f32.mrf.mxu0
        %1496 = vmatprep.mubr.bf16.mxu0 %v1210
        %1497 = vmatmul.mubr.bf16.gmra.mxu0 %v1209
        %v1498 = vpop.f32.mrf.mxu0
        %v1499 = vadd.f32 0.0, %v1498
        %v1500 = vpop.f32.mrf.mxu0
        %v1501 = vpop.f32.mrf.mxu0
        %v1502 = vadd.f32 0.0, %v1501
        %v1503 = vpop.f32.mrf.mxu0
        %1504 = vmatprep.mubr.bf16.mxu0 %v1213
        %1505 = vmatmul.mubr.bf16.gmra.mxu0 %v1212
        %v1506 = vpop.f32.mrf.mxu0
        %v1507 = vadd.f32 0.0, %v1506
        %v1508 = vpop.f32.mrf.mxu0
        %v1509 = vpop.f32.mrf.mxu0
        %v1510 = vadd.f32 0.0, %v1509
        %v1511 = vpop.f32.mrf.mxu0
        %1512 = vmatprep.mubr.bf16.mxu0 %v1216
        %1513 = vmatmul.mubr.bf16.gmra.mxu0 %v1215
        %v1514 = vpop.f32.mrf.mxu0
        %v1515 = vadd.f32 0.0, %v1514
        %v1516 = vpop.f32.mrf.mxu0
        %v1517 = vpop.f32.mrf.mxu0
        %v1518 = vadd.f32 0.0, %v1517
        %v1519 = vpop.f32.mrf.mxu0
        %1520 = vmatprep.mubr.bf16.mxu0 %v1219
        %1521 = vmatmul.mubr.bf16.gmra.mxu0 %v1218
        %v1522 = vpop.f32.mrf.mxu0
        %v1523 = vadd.f32 0.0, %v1522
        %v1524 = vpop.f32.mrf.mxu0
        %v1525 = vpop.f32.mrf.mxu0
        %v1526 = vadd.f32 0.0, %v1525
        %v1527 = vpop.f32.mrf.mxu0
        %1528 = vmatprep.mubr.bf16.mxu0 %v1222
        %1529 = vmatmul.mubr.bf16.gmra.mxu0 %v1221
        %v1530 = vpop.f32.mrf.mxu0
        %v1531 = vadd.f32 0.0, %v1530
        %v1532 = vpop.f32.mrf.mxu0
        %v1533 = vpop.f32.mrf.mxu0
        %v1534 = vadd.f32 0.0, %v1533
        %v1535 = vpop.f32.mrf.mxu0
        %1536 = vmatprep.mubr.bf16.mxu0 %v1225
        %1537 = vmatmul.mubr.bf16.gmra.mxu0 %v1224
        %v1538 = vpop.f32.mrf.mxu0
        %v1539 = vadd.f32 0.0, %v1538
        %v1540 = vpop.f32.mrf.mxu0
        %v1541 = vpop.f32.mrf.mxu0
        %v1542 = vadd.f32 0.0, %v1541
        %v1543 = vpop.f32.mrf.mxu0
        %1544 = vmatprep.mubr.bf16.mxu0 %v1228
        %1545 = vmatmul.mubr.bf16.gmra.mxu0 %v1227
        %v1546 = vpop.f32.mrf.mxu0
        %v1547 = vadd.f32 0.0, %v1546
        %v1548 = vpop.f32.mrf.mxu0
        %v1549 = vpop.f32.mrf.mxu0
        %v1550 = vadd.f32 0.0, %v1549
        %v1551 = vpop.f32.mrf.mxu0
        %1552 = vmatprep.mubr.bf16.mxu0 %v1231
        %1553 = vmatmul.mubr.bf16.gmra.mxu0 %v1230
        %v1554 = vpop.f32.mrf.mxu0
        %v1555 = vadd.f32 0.0, %v1554
        %v1556 = vpop.f32.mrf.mxu0
        %v1557 = vpop.f32.mrf.mxu0
        %v1558 = vadd.f32 0.0, %v1557
        %v1559 = vpop.f32.mrf.mxu0
        %1560 = vmatprep.mubr.bf16.mxu0 %v1234
        %1561 = vmatmul.mubr.bf16.gmra.mxu0 %v1233
        %v1562 = vpop.f32.mrf.mxu0
        %v1563 = vadd.f32 0.0, %v1562
        %v1564 = vpop.f32.mrf.mxu0
        %v1565 = vpop.f32.mrf.mxu0
        %v1566 = vadd.f32 0.0, %v1565
        %v1567 = vpop.f32.mrf.mxu0
        %1568 = vmatprep.mubr.bf16.mxu0 %v1237
        %1569 = vmatmul.mubr.bf16.gmra.mxu0 %v1236
        %v1570 = vpop.f32.mrf.mxu0
        %v1571 = vadd.f32 0.0, %v1570
        %v1572 = vpop.f32.mrf.mxu0
        %v1573 = vpop.f32.mrf.mxu0
        %v1574 = vadd.f32 0.0, %v1573
        %v1575 = vpop.f32.mrf.mxu0
        %1576 = vmatprep.mubr.bf16.mxu0 %v1240
        %1577 = vmatmul.mubr.bf16.gmra.mxu0 %v1239
        %v1578 = vpop.f32.mrf.mxu0
        %v1579 = vadd.f32 0.0, %v1578
        %v1580 = vpop.f32.mrf.mxu0
        %v1581 = vpop.f32.mrf.mxu0
        %v1582 = vadd.f32 0.0, %v1581
        %v1583 = vpop.f32.mrf.mxu0
        %1584 = vmatprep.mubr.bf16.mxu0 %v1243
        %1585 = vmatmul.mubr.bf16.gmra.mxu0 %v1242
        %v1586 = vpop.f32.mrf.mxu0
        %v1587 = vadd.f32 0.0, %v1586
        %v1588 = vpop.f32.mrf.mxu0
        %v1589 = vpop.f32.mrf.mxu0
        %v1590 = vadd.f32 0.0, %v1589
        %v1591 = vpop.f32.mrf.mxu0
        %1592 = vmatprep.mubr.bf16.mxu0 %v1246
        %1593 = vmatmul.mubr.bf16.gmra.mxu0 %v1245
        %v1594 = vpop.f32.mrf.mxu0
        %v1595 = vadd.f32 0.0, %v1594
        %v1596 = vpop.f32.mrf.mxu0
        %v1597 = vpop.f32.mrf.mxu0
        %v1598 = vadd.f32 0.0, %v1597
        %v1599 = vpop.f32.mrf.mxu0
        %1600 = vdwg.mxu0
        %1601 = vmatprep.subr.bf16.mxu0 0
        %1602 = vmatpush1.bf16.msra.mxu0 %v1415
        %1603 = vmatprep.subr.bf16.mxu0 0
        %1604 = vmatpush1.bf16.msra.mxu0 %v1414
        %1605 = vmatprep.subr.bf16.mxu0 0
        %1606 = vmatpush1.bf16.msra.mxu0 %v1413
        %1607 = vmatprep.subr.bf16.mxu0 0
        %1608 = vmatpush1.bf16.msra.mxu0 %v1412
        %1609 = vmatprep.subr.bf16.mxu0 0
        %1610 = vmatpush1.bf16.msra.mxu0 %v1411
        %1611 = vmatprep.subr.bf16.mxu0 0
        %1612 = vmatpush1.bf16.msra.mxu0 %v1410
        %1613 = vmatprep.subr.bf16.mxu0 0
        %1614 = vmatpush1.bf16.msra.mxu0 %v1409
        %1615 = vmatprep.subr.bf16.mxu0 0
        %1616 = vmatpush1.bf16.msra.mxu0 %v1408
        %1617 = vmatprep.subr.bf16.mxu0 0
        %1618 = vmatpush2.bf16.msra.mxu0 0
        %1619 = vmatprep.subr.bf16.mxu0 0
        %1620 = vmatpush2.bf16.msra.mxu0 0
        %1621 = vmatprep.subr.bf16.mxu0 0
        %1622 = vmatpush2.bf16.msra.mxu0 0
        %1623 = vmatprep.subr.bf16.mxu0 0
        %1624 = vmatpush2.bf16.msra.mxu0 0
        %1625 = vmatprep.subr.bf16.mxu0 0
        %1626 = vmatpush2.bf16.msra.mxu0 0
        %1627 = vmatprep.subr.bf16.mxu0 0
        %1628 = vmatpush2.bf16.msra.mxu0 0
        %1629 = vmatprep.subr.bf16.mxu0 0
        %1630 = vmatpush2.bf16.msra.mxu0 0
        %1631 = vmatprep.subr.bf16.mxu0 0
        %1632 = vmatpush2.bf16.msra.mxu0 0
        %1633 = vmatprep.mubr.bf16.mxu0 0
        %1634 = vmatmul.mubr.bf16.gmra.mxu0 %v1202
        %v1635 = vpop.f32.mrf.mxu0
        %v1636 = vadd.f32 %v1475, %v1635
        %v1637 = vpop.f32.mrf.mxu0
        %v1638 = vpop.f32.mrf.mxu0
        %v1639 = vadd.f32 %v1478, %v1638
        %v1640 = vpop.f32.mrf.mxu0
        %1641 = vmatprep.mubr.bf16.mxu0 0
        %1642 = vmatmul.mubr.bf16.gmra.mxu0 %v1205
        %v1643 = vpop.f32.mrf.mxu0
        %v1644 = vadd.f32 %v1483, %v1643
        %v1645 = vpop.f32.mrf.mxu0
        %v1646 = vpop.f32.mrf.mxu0
        %v1647 = vadd.f32 %v1486, %v1646
        %v1648 = vpop.f32.mrf.mxu0
        %1649 = vmatprep.mubr.bf16.mxu0 0
        %1650 = vmatmul.mubr.bf16.gmra.mxu0 %v1208
        %v1651 = vpop.f32.mrf.mxu0
        %v1652 = vadd.f32 %v1491, %v1651
        %v1653 = vpop.f32.mrf.mxu0
        %v1654 = vpop.f32.mrf.mxu0
        %v1655 = vadd.f32 %v1494, %v1654
        %v1656 = vpop.f32.mrf.mxu0
        %1657 = vmatprep.mubr.bf16.mxu0 0
        %1658 = vmatmul.mubr.bf16.gmra.mxu0 %v1211
        %v1659 = vpop.f32.mrf.mxu0
        %v1660 = vadd.f32 %v1499, %v1659
        %v1661 = vpop.f32.mrf.mxu0
        %v1662 = vpop.f32.mrf.mxu0
        %v1663 = vadd.f32 %v1502, %v1662
        %v1664 = vpop.f32.mrf.mxu0
        %1665 = vmatprep.mubr.bf16.mxu0 0
        %1666 = vmatmul.mubr.bf16.gmra.mxu0 %v1214
        %v1667 = vpop.f32.mrf.mxu0
        %v1668 = vadd.f32 %v1507, %v1667
        %v1669 = vpop.f32.mrf.mxu0
        %v1670 = vpop.f32.mrf.mxu0
        %v1671 = vadd.f32 %v1510, %v1670
        %v1672 = vpop.f32.mrf.mxu0
        %1673 = vmatprep.mubr.bf16.mxu0 0
        %1674 = vmatmul.mubr.bf16.gmra.mxu0 %v1217
        %v1675 = vpop.f32.mrf.mxu0
        %v1676 = vadd.f32 %v1515, %v1675
        %v1677 = vpop.f32.mrf.mxu0
        %v1678 = vpop.f32.mrf.mxu0
        %v1679 = vadd.f32 %v1518, %v1678
        %v1680 = vpop.f32.mrf.mxu0
        %1681 = vmatprep.mubr.bf16.mxu0 0
        %1682 = vmatmul.mubr.bf16.gmra.mxu0 %v1220
        %v1683 = vpop.f32.mrf.mxu0
        %v1684 = vadd.f32 %v1523, %v1683
        %v1685 = vpop.f32.mrf.mxu0
        %v1686 = vpop.f32.mrf.mxu0
        %v1687 = vadd.f32 %v1526, %v1686
        %v1688 = vpop.f32.mrf.mxu0
        %1689 = vmatprep.mubr.bf16.mxu0 0
        %1690 = vmatmul.mubr.bf16.gmra.mxu0 %v1223
        %v1691 = vpop.f32.mrf.mxu0
        %v1692 = vadd.f32 %v1531, %v1691
        %v1693 = vpop.f32.mrf.mxu0
        %v1694 = vpop.f32.mrf.mxu0
        %v1695 = vadd.f32 %v1534, %v1694
        %v1696 = vpop.f32.mrf.mxu0
        %1697 = vmatprep.mubr.bf16.mxu0 0
        %1698 = vmatmul.mubr.bf16.gmra.mxu0 %v1226
        %v1699 = vpop.f32.mrf.mxu0
        %v1700 = vadd.f32 %v1539, %v1699
        %v1701 = vpop.f32.mrf.mxu0
        %v1702 = vpop.f32.mrf.mxu0
        %v1703 = vadd.f32 %v1542, %v1702
        %v1704 = vpop.f32.mrf.mxu0
        %1705 = vmatprep.mubr.bf16.mxu0 0
        %1706 = vmatmul.mubr.bf16.gmra.mxu0 %v1229
        %v1707 = vpop.f32.mrf.mxu0
        %v1708 = vadd.f32 %v1547, %v1707
        %v1709 = vpop.f32.mrf.mxu0
        %v1710 = vpop.f32.mrf.mxu0
        %v1711 = vadd.f32 %v1550, %v1710
        %v1712 = vpop.f32.mrf.mxu0
        %1713 = vmatprep.mubr.bf16.mxu0 0
        %1714 = vmatmul.mubr.bf16.gmra.mxu0 %v1232
        %v1715 = vpop.f32.mrf.mxu0
        %v1716 = vadd.f32 %v1555, %v1715
        %v1717 = vpop.f32.mrf.mxu0
        %v1718 = vpop.f32.mrf.mxu0
        %v1719 = vadd.f32 %v1558, %v1718
        %v1720 = vpop.f32.mrf.mxu0
        %1721 = vmatprep.mubr.bf16.mxu0 0
        %1722 = vmatmul.mubr.bf16.gmra.mxu0 %v1235
        %v1723 = vpop.f32.mrf.mxu0
        %v1724 = vadd.f32 %v1563, %v1723
        %v1725 = vpop.f32.mrf.mxu0
        %v1726 = vpop.f32.mrf.mxu0
        %v1727 = vadd.f32 %v1566, %v1726
        %v1728 = vpop.f32.mrf.mxu0
        %1729 = vmatprep.mubr.bf16.mxu0 0
        %1730 = vmatmul.mubr.bf16.gmra.mxu0 %v1238
        %v1731 = vpop.f32.mrf.mxu0
        %v1732 = vadd.f32 %v1571, %v1731
        %v1733 = vpop.f32.mrf.mxu0
        %v1734 = vpop.f32.mrf.mxu0
        %v1735 = vadd.f32 %v1574, %v1734
        %v1736 = vpop.f32.mrf.mxu0
        %1737 = vmatprep.mubr.bf16.mxu0 0
        %1738 = vmatmul.mubr.bf16.gmra.mxu0 %v1241
        %v1739 = vpop.f32.mrf.mxu0
        %v1740 = vadd.f32 %v1579, %v1739
        %v1741 = vpop.f32.mrf.mxu0
        %v1742 = vpop.f32.mrf.mxu0
        %v1743 = vadd.f32 %v1582, %v1742
        %v1744 = vpop.f32.mrf.mxu0
        %1745 = vmatprep.mubr.bf16.mxu0 0
        %1746 = vmatmul.mubr.bf16.gmra.mxu0 %v1244
        %v1747 = vpop.f32.mrf.mxu0
        %v1748 = vadd.f32 %v1587, %v1747
        %v1749 = vpop.f32.mrf.mxu0
        %v1750 = vpop.f32.mrf.mxu0
        %v1751 = vadd.f32 %v1590, %v1750
        %v1752 = vpop.f32.mrf.mxu0
        %1753 = vmatprep.mubr.bf16.mxu0 0
        %1754 = vmatmul.mubr.bf16.gmra.mxu0 %v1247
        %v1755 = vpop.f32.mrf.mxu0
        %v1756 = vadd.f32 %v1595, %v1755
        %v1757 = vpop.f32.mrf.mxu0
        %v1758 = vpop.f32.mrf.mxu0
        %v1759 = vadd.f32 %v1598, %v1758
        %v1760 = vpop.f32.mrf.mxu0
        %1761 = vdwg.mxu0
        %v1762 = vadd.f32 %v926, %v1636
        %v1763 = vadd.f32 %v926, %v1639
        %v1764 = vadd.f32 %v926, %v1644
        %v1765 = vadd.f32 %v926, %v1647
        %v1766 = vadd.f32 %v926, %v1652
        %v1767 = vadd.f32 %v926, %v1655
        %v1768 = vadd.f32 %v926, %v1660
        %v1769 = vadd.f32 %v926, %v1663
        %v1770 = vadd.f32 %v926, %v1668
        %v1771 = vadd.f32 %v926, %v1671
        %v1772 = vadd.f32 %v926, %v1676
        %v1773 = vadd.f32 %v926, %v1679
        %v1774 = vadd.f32 %v926, %v1684
        %v1775 = vadd.f32 %v926, %v1687
        %v1776 = vadd.f32 %v926, %v1692
        %v1777 = vadd.f32 %v926, %v1695
        %v1778 = vadd.f32 %v926, %v1700
        %v1779 = vadd.f32 %v926, %v1703
        %v1780 = vadd.f32 %v926, %v1708
        %v1781 = vadd.f32 %v926, %v1711
        %v1782 = vadd.f32 %v926, %v1716
        %v1783 = vadd.f32 %v926, %v1719
        %v1784 = vadd.f32 %v926, %v1724
        %v1785 = vadd.f32 %v926, %v1727
        %v1786 = vadd.f32 %v926, %v1732
        %v1787 = vadd.f32 %v926, %v1735
        %v1788 = vadd.f32 %v926, %v1740
        %v1789 = vadd.f32 %v926, %v1743
        %v1790 = vadd.f32 %v926, %v1748
        %v1791 = vadd.f32 %v926, %v1751
        %v1792 = vadd.f32 %v926, %v1756
        %v1793 = vadd.f32 %v926, %v1759
        %s1794 = scalar_lea.vmem [#allocation2], 24
        %v1795 = vld [vmem:[%s1794] sm:$0xff]
        %v1796 = vld [vmem:[%s1794 + $0x8] sm:$0xf]
        %v1797 = vld [vmem:[%s1794 + $0xc] sm:$0xff]
        %v1798 = vld [vmem:[%s1794 + $0x14] sm:$0xf]
        %v1799 = vld [vmem:[%s1794 + $0x18] sm:$0xff]
        %v1800 = vld [vmem:[%s1794 + $0x20] sm:$0xf]
        %v1801 = vld [vmem:[%s1794 + $0x24] sm:$0xff]
        %v1802 = vld [vmem:[%s1794 + $0x2c] sm:$0xf]
        %v1803 = vld [vmem:[%s1794 + $0x30] sm:$0xff]
        %v1804 = vld [vmem:[%s1794 + $0x38] sm:$0xf]
        %v1805 = vld [vmem:[%s1794 + $0x3c] sm:$0xff]
        %v1806 = vld [vmem:[%s1794 + $0x44] sm:$0xf]
        %v1807 = vld [vmem:[%s1794 + $0x48] sm:$0xff]
        %v1808 = vld [vmem:[%s1794 + $0x50] sm:$0xf]
        %v1809 = vld [vmem:[%s1794 + $0x54] sm:$0xff]
        %v1810 = vld [vmem:[%s1794 + $0x5c] sm:$0xf]
        %v1811 = vld [vmem:[%s1794 + $0x60] sm:$0xff]
        %v1812 = vld [vmem:[%s1794 + $0x68] sm:$0xf]
        %v1813 = vld [vmem:[%s1794 + $0x6c] sm:$0xff]
        %v1814 = vld [vmem:[%s1794 + $0x74] sm:$0xf]
        %v1815 = vld [vmem:[%s1794 + $0x78] sm:$0xff]
        %v1816 = vld [vmem:[%s1794 + $0x80] sm:$0xf]
        %v1817 = vld [vmem:[%s1794 + $0x84] sm:$0xff]
        %v1818 = vld [vmem:[%s1794 + $0x8c] sm:$0xf]
        %v1819 = vld [vmem:[%s1794 + $0x90] sm:$0xff]
        %v1820 = vld [vmem:[%s1794 + $0x98] sm:$0xf]
        %v1821 = vld [vmem:[%s1794 + $0x9c] sm:$0xff]
        %v1822 = vld [vmem:[%s1794 + $0xa4] sm:$0xf]
        %v1823 = vld [vmem:[%s1794 + $0xa8] sm:$0xff]
        %v1824 = vld [vmem:[%s1794 + $0xb0] sm:$0xf]
        %v1825 = vld [vmem:[%s1794 + $0xb4] sm:$0xff]
        %v1826 = vld [vmem:[%s1794 + $0xbc] sm:$0xf]
        %v1827 = vld [vmem:[%s1794 + $0xc0] sm:$0xff]
        %v1828 = vld [vmem:[%s1794 + $0xc8] sm:$0xf]
        %v1829 = vld [vmem:[%s1794 + $0xcc] sm:$0xff]
        %v1830 = vld [vmem:[%s1794 + $0xd4] sm:$0xf]
        %v1831 = vld [vmem:[%s1794 + $0xd8] sm:$0xff]
        %v1832 = vld [vmem:[%s1794 + $0xe0] sm:$0xf]
        %v1833 = vld [vmem:[%s1794 + $0xe4] sm:$0xff]
        %v1834 = vld [vmem:[%s1794 + $0xec] sm:$0xf]
        %v1835 = vld [vmem:[%s1794 + $0xf0] sm:$0xff]
        %v1836 = vld [vmem:[%s1794 + $0xf8] sm:$0xf]
        %v1837 = vld [vmem:[%s1794 + $0xfc] sm:$0xff]
        %v1838 = vld [vmem:[%s1794 + $0x104] sm:$0xf]
        %v1839 = vld [vmem:[%s1794 + $0x108] sm:$0xff]
        %v1840 = vld [vmem:[%s1794 + $0x110] sm:$0xf]
        %v1841 = vld [vmem:[%s1794 + $0x114] sm:$0xff]
        %v1842 = vld [vmem:[%s1794 + $0x11c] sm:$0xf]
        %v1843 = vld [vmem:[%s1794 + $0x120] sm:$0xff]
        %v1844 = vld [vmem:[%s1794 + $0x128] sm:$0xf]
        %v1845 = vld [vmem:[%s1794 + $0x12c] sm:$0xff]
        %v1846 = vld [vmem:[%s1794 + $0x134] sm:$0xf]
        %v1847 = vld [vmem:[%s1794 + $0x138] sm:$0xff]
        %v1848 = vld [vmem:[%s1794 + $0x140] sm:$0xf]
        %v1849 = vld [vmem:[%s1794 + $0x144] sm:$0xff]
        %v1850 = vld [vmem:[%s1794 + $0x14c] sm:$0xf]
        %v1851 = vld [vmem:[%s1794 + $0x150] sm:$0xff]
        %v1852 = vld [vmem:[%s1794 + $0x158] sm:$0xf]
        %v1853 = vld [vmem:[%s1794 + $0x15c] sm:$0xff]
        %v1854 = vld [vmem:[%s1794 + $0x164] sm:$0xf]
        %v1855 = vld [vmem:[%s1794 + $0x168] sm:$0xff]
        %v1856 = vld [vmem:[%s1794 + $0x170] sm:$0xf]
        %v1857 = vld [vmem:[%s1794 + $0x174] sm:$0xff]
        %v1858 = vld [vmem:[%s1794 + $0x17c] sm:$0xf]
        %s1859 = scalar_lea.vmem [#allocation7], 192
        %v1860 = vld [vmem:[%s1859] sm:$0xf]
        %v1861 = vld [vmem:[%s1859 + $0x4] sm:$0xf]
        %v1862 = vld [vmem:[%s1859 + $0x8] sm:$0xf]
        %v1863 = vld [vmem:[%s1859 + $0xc] sm:$0xf]
        %v1864 = vld [vmem:[%s1859 + $0x10] sm:$0xf]
        %v1865 = vld [vmem:[%s1859 + $0x14] sm:$0xf]
        %v1866 = vld [vmem:[%s1859 + $0x18] sm:$0xf]
        %v1867 = vld [vmem:[%s1859 + $0x1c] sm:$0xf]
        %v1868 = vld [vmem:[%s1859 + $0x20] sm:$0xf]
        %v1869 = vld [vmem:[%s1859 + $0x24] sm:$0xf]
        %v1870 = vld [vmem:[%s1859 + $0x28] sm:$0xf]
        %v1871 = vld [vmem:[%s1859 + $0x2c] sm:$0xf]
        %v1872 = vld [vmem:[%s1859 + $0x30] sm:$0xf]
        %v1873 = vld [vmem:[%s1859 + $0x34] sm:$0xf]
        %v1874 = vld [vmem:[%s1859 + $0x38] sm:$0xf]
        %v1875 = vld [vmem:[%s1859 + $0x3c] sm:$0xf]
        %v1876 = vld [vmem:[%s1859 + $0x40] sm:$0xf]
        %v1877 = vld [vmem:[%s1859 + $0x44] sm:$0xf]
        %v1878 = vld [vmem:[%s1859 + $0x48] sm:$0xf]
        %v1879 = vld [vmem:[%s1859 + $0x4c] sm:$0xf]
        %v1880 = vld [vmem:[%s1859 + $0x50] sm:$0xf]
        %v1881 = vld [vmem:[%s1859 + $0x54] sm:$0xf]
        %v1882 = vld [vmem:[%s1859 + $0x58] sm:$0xf]
        %v1883 = vld [vmem:[%s1859 + $0x5c] sm:$0xf]
        %v1884 = vld [vmem:[%s1859 + $0x60] sm:$0xf]
        %v1885 = vld [vmem:[%s1859 + $0x64] sm:$0xf]
        %v1886 = vld [vmem:[%s1859 + $0x68] sm:$0xf]
        %v1887 = vld [vmem:[%s1859 + $0x6c] sm:$0xf]
        %v1888 = vld [vmem:[%s1859 + $0x70] sm:$0xf]
        %v1889 = vld [vmem:[%s1859 + $0x74] sm:$0xf]
        %v1890 = vld [vmem:[%s1859 + $0x78] sm:$0xf]
        %v1891 = vld [vmem:[%s1859 + $0x7c] sm:$0xf]
        %v1892 = vld [vmem:[%s1859 + $0x80] sm:$0xf]
        %v1893 = vld [vmem:[%s1859 + $0x84] sm:$0xf]
        %v1894 = vld [vmem:[%s1859 + $0x88] sm:$0xf]
        %v1895 = vld [vmem:[%s1859 + $0x8c] sm:$0xf]
        %v1896 = vld [vmem:[%s1859 + $0x90] sm:$0xf]
        %v1897 = vld [vmem:[%s1859 + $0x94] sm:$0xf]
        %v1898 = vld [vmem:[%s1859 + $0x98] sm:$0xf]
        %v1899 = vld [vmem:[%s1859 + $0x9c] sm:$0xf]
        %v1900 = vld [vmem:[%s1859 + $0xa0] sm:$0xf]
        %v1901 = vld [vmem:[%s1859 + $0xa4] sm:$0xf]
        %v1902 = vld [vmem:[%s1859 + $0xa8] sm:$0xf]
        %v1903 = vld [vmem:[%s1859 + $0xac] sm:$0xf]
        %v1904 = vld [vmem:[%s1859 + $0xb0] sm:$0xf]
        %v1905 = vld [vmem:[%s1859 + $0xb4] sm:$0xf]
        %v1906 = vld [vmem:[%s1859 + $0xb8] sm:$0xf]
        %v1907 = vld [vmem:[%s1859 + $0xbc] sm:$0xf]
        %v1972 = vunpack.c.l.b16 %v1795
        %v1973 = vunpack.c.h.b16 %v1795
        %v1974 = vunpack.c.l.b16 %v1796
        %v1975 = vunpack.c.l.b16 %v1797
        %v1976 = vunpack.c.h.b16 %v1797
        %v1977 = vunpack.c.l.b16 %v1798
        %v1978 = vunpack.c.l.b16 %v1799
        %v1979 = vunpack.c.h.b16 %v1799
        %v1980 = vunpack.c.l.b16 %v1800
        %v1981 = vunpack.c.l.b16 %v1801
        %v1982 = vunpack.c.h.b16 %v1801
        %v1983 = vunpack.c.l.b16 %v1802
        %v1984 = vunpack.c.l.b16 %v1803
        %v1985 = vunpack.c.h.b16 %v1803
        %v1986 = vunpack.c.l.b16 %v1804
        %v1987 = vunpack.c.l.b16 %v1805
        %v1988 = vunpack.c.h.b16 %v1805
        %v1989 = vunpack.c.l.b16 %v1806
        %v1990 = vunpack.c.l.b16 %v1807
        %v1991 = vunpack.c.h.b16 %v1807
        %v1992 = vunpack.c.l.b16 %v1808
        %v1993 = vunpack.c.l.b16 %v1809
        %v1994 = vunpack.c.h.b16 %v1809
        %v1995 = vunpack.c.l.b16 %v1810
        %v1996 = vunpack.c.l.b16 %v1811
        %v1997 = vunpack.c.h.b16 %v1811
        %v1998 = vunpack.c.l.b16 %v1812
        %v1999 = vunpack.c.l.b16 %v1813
        %v2000 = vunpack.c.h.b16 %v1813
        %v2001 = vunpack.c.l.b16 %v1814
        %v2002 = vunpack.c.l.b16 %v1815
        %v2003 = vunpack.c.h.b16 %v1815
        %v2004 = vunpack.c.l.b16 %v1816
        %v2005 = vunpack.c.l.b16 %v1817
        %v2006 = vunpack.c.h.b16 %v1817
        %v2007 = vunpack.c.l.b16 %v1818
        %v2008 = vunpack.c.l.b16 %v1819
        %v2009 = vunpack.c.h.b16 %v1819
        %v2010 = vunpack.c.l.b16 %v1820
        %v2011 = vunpack.c.l.b16 %v1821
        %v2012 = vunpack.c.h.b16 %v1821
        %v2013 = vunpack.c.l.b16 %v1822
        %v2014 = vunpack.c.l.b16 %v1823
        %v2015 = vunpack.c.h.b16 %v1823
        %v2016 = vunpack.c.l.b16 %v1824
        %v2017 = vunpack.c.l.b16 %v1825
        %v2018 = vunpack.c.h.b16 %v1825
        %v2019 = vunpack.c.l.b16 %v1826
        %v2020 = vunpack.c.l.b16 %v1827
        %v2021 = vunpack.c.h.b16 %v1827
        %v2022 = vunpack.c.l.b16 %v1828
        %v2023 = vunpack.c.l.b16 %v1829
        %v2024 = vunpack.c.h.b16 %v1829
        %v2025 = vunpack.c.l.b16 %v1830
        %v2026 = vunpack.c.l.b16 %v1831
        %v2027 = vunpack.c.h.b16 %v1831
        %v2028 = vunpack.c.l.b16 %v1832
        %v2029 = vunpack.c.l.b16 %v1833
        %v2030 = vunpack.c.h.b16 %v1833
        %v2031 = vunpack.c.l.b16 %v1834
        %v2032 = vunpack.c.l.b16 %v1835
        %v2033 = vunpack.c.h.b16 %v1835
        %v2034 = vunpack.c.l.b16 %v1836
        %v2035 = vunpack.c.l.b16 %v1837
        %v2036 = vunpack.c.h.b16 %v1837
        %v2037 = vunpack.c.l.b16 %v1838
        %v2038 = vunpack.c.l.b16 %v1839
        %v2039 = vunpack.c.h.b16 %v1839
        %v2040 = vunpack.c.l.b16 %v1840
        %v2041 = vunpack.c.l.b16 %v1841
        %v2042 = vunpack.c.h.b16 %v1841
        %v2043 = vunpack.c.l.b16 %v1842
        %v2044 = vunpack.c.l.b16 %v1843
        %v2045 = vunpack.c.h.b16 %v1843
        %v2046 = vunpack.c.l.b16 %v1844
        %v2047 = vunpack.c.l.b16 %v1845
        %v2048 = vunpack.c.h.b16 %v1845
        %v2049 = vunpack.c.l.b16 %v1846
        %v2050 = vunpack.c.l.b16 %v1847
        %v2051 = vunpack.c.h.b16 %v1847
        %v2052 = vunpack.c.l.b16 %v1848
        %v2053 = vunpack.c.l.b16 %v1849
        %v2054 = vunpack.c.h.b16 %v1849
        %v2055 = vunpack.c.l.b16 %v1850
        %v2056 = vunpack.c.l.b16 %v1851
        %v2057 = vunpack.c.h.b16 %v1851
        %v2058 = vunpack.c.l.b16 %v1852
        %v2059 = vunpack.c.l.b16 %v1853
        %v2060 = vunpack.c.h.b16 %v1853
        %v2061 = vunpack.c.l.b16 %v1854
        %v2062 = vunpack.c.l.b16 %v1855
        %v2063 = vunpack.c.h.b16 %v1855
        %v2064 = vunpack.c.l.b16 %v1856
        %v2065 = vunpack.c.l.b16 %v1857
        %v2066 = vunpack.c.h.b16 %v1857
        %v2067 = vunpack.c.l.b16 %v1858
        %v2068 = vpack.c.b16 %v1975, %v1972
        %v2069 = vpack.c.b16 %v1976, %v1973
        %v2070 = vpack.c.b16 %v1977, %v1974
        %v2071 = vpack.c.b16 %v1981, %v1978
        %v2072 = vpack.c.b16 %v1982, %v1979
        %v2073 = vpack.c.b16 %v1983, %v1980
        %v2074 = vpack.c.b16 %v1987, %v1984
        %v2075 = vpack.c.b16 %v1988, %v1985
        %v2076 = vpack.c.b16 %v1989, %v1986
        %v2077 = vpack.c.b16 %v1993, %v1990
        %v2078 = vpack.c.b16 %v1994, %v1991
        %v2079 = vpack.c.b16 %v1995, %v1992
        %v2080 = vpack.c.b16 %v1999, %v1996
        %v2081 = vpack.c.b16 %v2000, %v1997
        %v2082 = vpack.c.b16 %v2001, %v1998
        %v2083 = vpack.c.b16 %v2005, %v2002
        %v2084 = vpack.c.b16 %v2006, %v2003
        %v2085 = vpack.c.b16 %v2007, %v2004
        %v2086 = vpack.c.b16 %v2011, %v2008
        %v2087 = vpack.c.b16 %v2012, %v2009
        %v2088 = vpack.c.b16 %v2013, %v2010
        %v2089 = vpack.c.b16 %v2017, %v2014
        %v2090 = vpack.c.b16 %v2018, %v2015
        %v2091 = vpack.c.b16 %v2019, %v2016
        %v2092 = vpack.c.b16 %v2023, %v2020
        %v2093 = vpack.c.b16 %v2024, %v2021
        %v2094 = vpack.c.b16 %v2025, %v2022
        %v2095 = vpack.c.b16 %v2029, %v2026
        %v2096 = vpack.c.b16 %v2030, %v2027
        %v2097 = vpack.c.b16 %v2031, %v2028
        %v2098 = vpack.c.b16 %v2035, %v2032
        %v2099 = vpack.c.b16 %v2036, %v2033
        %v2100 = vpack.c.b16 %v2037, %v2034
        %v2101 = vpack.c.b16 %v2041, %v2038
        %v2102 = vpack.c.b16 %v2042, %v2039
        %v2103 = vpack.c.b16 %v2043, %v2040
        %v2104 = vpack.c.b16 %v2047, %v2044
        %v2105 = vpack.c.b16 %v2048, %v2045
        %v2106 = vpack.c.b16 %v2049, %v2046
        %v2107 = vpack.c.b16 %v2053, %v2050
        %v2108 = vpack.c.b16 %v2054, %v2051
        %v2109 = vpack.c.b16 %v2055, %v2052
        %v2110 = vpack.c.b16 %v2059, %v2056
        %v2111 = vpack.c.b16 %v2060, %v2057
        %v2112 = vpack.c.b16 %v2061, %v2058
        %v2113 = vpack.c.b16 %v2065, %v2062
        %v2114 = vpack.c.b16 %v2066, %v2063
        %v2115 = vpack.c.b16 %v2067, %v2064
        %v2212 = vunpack.c.l.b16 %v1860
        %v2213 = vunpack.c.l.b16 %v1861
        %v2214 = vunpack.c.l.b16 %v1862
        %v2215 = vunpack.c.l.b16 %v1863
        %v2216 = vunpack.c.l.b16 %v1864
        %v2217 = vunpack.c.l.b16 %v1865
        %v2218 = vunpack.c.l.b16 %v1866
        %v2219 = vunpack.c.l.b16 %v1867
        %v2220 = vunpack.c.l.b16 %v1868
        %v2221 = vunpack.c.l.b16 %v1869
        %v2222 = vunpack.c.l.b16 %v1870
        %v2223 = vunpack.c.l.b16 %v1871
        %v2224 = vunpack.c.l.b16 %v1872
        %v2225 = vunpack.c.l.b16 %v1873
        %v2226 = vunpack.c.l.b16 %v1874
        %v2227 = vunpack.c.l.b16 %v1875
        %v2228 = vunpack.c.l.b16 %v1876
        %v2229 = vunpack.c.l.b16 %v1877
        %v2230 = vunpack.c.l.b16 %v1878
        %v2231 = vunpack.c.l.b16 %v1879
        %v2232 = vunpack.c.l.b16 %v1880
        %v2233 = vunpack.c.l.b16 %v1881
        %v2234 = vunpack.c.l.b16 %v1882
        %v2235 = vunpack.c.l.b16 %v1883
        %v2236 = vunpack.c.l.b16 %v1884
        %v2237 = vunpack.c.l.b16 %v1885
        %v2238 = vunpack.c.l.b16 %v1886
        %v2239 = vunpack.c.l.b16 %v1887
        %v2240 = vunpack.c.l.b16 %v1888
        %v2241 = vunpack.c.l.b16 %v1889
        %v2242 = vunpack.c.l.b16 %v1890
        %v2243 = vunpack.c.l.b16 %v1891
        %v2244 = vunpack.c.l.b16 %v1892
        %v2245 = vunpack.c.l.b16 %v1893
        %v2246 = vunpack.c.l.b16 %v1894
        %v2247 = vunpack.c.l.b16 %v1895
        %v2248 = vunpack.c.l.b16 %v1896
        %v2249 = vunpack.c.l.b16 %v1897
        %v2250 = vunpack.c.l.b16 %v1898
        %v2251 = vunpack.c.l.b16 %v1899
        %v2252 = vunpack.c.l.b16 %v1900
        %v2253 = vunpack.c.l.b16 %v1901
        %v2254 = vunpack.c.l.b16 %v1902
        %v2255 = vunpack.c.l.b16 %v1903
        %v2256 = vunpack.c.l.b16 %v1904
        %v2257 = vunpack.c.l.b16 %v1905
        %v2258 = vunpack.c.l.b16 %v1906
        %v2259 = vunpack.c.l.b16 %v1907
        %v2260 = vpack.c.b16 %v2213, %v2212
        %v2261 = vpack.c.b16 %v2215, %v2214
        %v2262 = vpack.c.b16 %v2217, %v2216
        %v2263 = vpack.c.b16 %v2219, %v2218
        %v2264 = vpack.c.b16 %v2221, %v2220
        %v2265 = vpack.c.b16 %v2223, %v2222
        %v2266 = vpack.c.b16 %v2225, %v2224
        %v2267 = vpack.c.b16 %v2227, %v2226
        %v2268 = vpack.c.b16 %v2229, %v2228
        %v2269 = vpack.c.b16 %v2231, %v2230
        %v2270 = vpack.c.b16 %v2233, %v2232
        %v2271 = vpack.c.b16 %v2235, %v2234
        %v2272 = vpack.c.b16 %v2237, %v2236
        %v2273 = vpack.c.b16 %v2239, %v2238
        %v2274 = vpack.c.b16 %v2241, %v2240
        %v2275 = vpack.c.b16 %v2243, %v2242
        %v2276 = vpack.c.b16 %v2245, %v2244
        %v2277 = vpack.c.b16 %v2247, %v2246
        %v2278 = vpack.c.b16 %v2249, %v2248
        %v2279 = vpack.c.b16 %v2251, %v2250
        %v2280 = vpack.c.b16 %v2253, %v2252
        %v2281 = vpack.c.b16 %v2255, %v2254
        %v2282 = vpack.c.b16 %v2257, %v2256
        %v2283 = vpack.c.b16 %v2259, %v2258
        %2308 = vmatprep.subr.bf16.mxu0 0
        %2309 = vmatpush1.bf16.msra.mxu0 %v2267
        %2310 = vmatprep.subr.bf16.mxu0 0
        %2311 = vmatpush1.bf16.msra.mxu0 %v2266
        %2312 = vmatprep.subr.bf16.mxu0 0
        %2313 = vmatpush1.bf16.msra.mxu0 %v2265
        %2314 = vmatprep.subr.bf16.mxu0 0
        %2315 = vmatpush1.bf16.msra.mxu0 %v2264
        %2316 = vmatprep.subr.bf16.mxu0 0
        %2317 = vmatpush1.bf16.msra.mxu0 %v2263
        %2318 = vmatprep.subr.bf16.mxu0 0
        %2319 = vmatpush1.bf16.msra.mxu0 %v2262
        %2320 = vmatprep.subr.bf16.mxu0 0
        %2321 = vmatpush1.bf16.msra.mxu0 %v2261
        %2322 = vmatprep.subr.bf16.mxu0 0
        %2323 = vmatpush1.bf16.msra.mxu0 %v2260
        %2324 = vmatprep.subr.bf16.mxu0 0
        %2325 = vmatpush2.bf16.msra.mxu0 %v2275
        %2326 = vmatprep.subr.bf16.mxu0 0
        %2327 = vmatpush2.bf16.msra.mxu0 %v2274
        %2328 = vmatprep.subr.bf16.mxu0 0
        %2329 = vmatpush2.bf16.msra.mxu0 %v2273
        %2330 = vmatprep.subr.bf16.mxu0 0
        %2331 = vmatpush2.bf16.msra.mxu0 %v2272
        %2332 = vmatprep.subr.bf16.mxu0 0
        %2333 = vmatpush2.bf16.msra.mxu0 %v2271
        %2334 = vmatprep.subr.bf16.mxu0 0
        %2335 = vmatpush2.bf16.msra.mxu0 %v2270
        %2336 = vmatprep.subr.bf16.mxu0 0
        %2337 = vmatpush2.bf16.msra.mxu0 %v2269
        %2338 = vmatprep.subr.bf16.mxu0 0
        %2339 = vmatpush2.bf16.msra.mxu0 %v2268
        %2340 = vmatprep.mubr.bf16.mxu0 %v2069
        %2341 = vmatmul.mubr.bf16.gmra.mxu0 %v2068
        %v2342 = vpop.f32.mrf.mxu0
        %v2343 = vadd.f32 0.0, %v2342
        %v2344 = vpop.f32.mrf.mxu0
        %v2345 = vpop.f32.mrf.mxu0
        %v2346 = vadd.f32 0.0, %v2345
        %v2347 = vpop.f32.mrf.mxu0
        %2348 = vmatprep.mubr.bf16.mxu0 %v2072
        %2349 = vmatmul.mubr.bf16.gmra.mxu0 %v2071
        %v2350 = vpop.f32.mrf.mxu0
        %v2351 = vadd.f32 0.0, %v2350
        %v2352 = vpop.f32.mrf.mxu0
        %v2353 = vpop.f32.mrf.mxu0
        %v2354 = vadd.f32 0.0, %v2353
        %v2355 = vpop.f32.mrf.mxu0
        %2356 = vmatprep.mubr.bf16.mxu0 %v2075
        %2357 = vmatmul.mubr.bf16.gmra.mxu0 %v2074
        %v2358 = vpop.f32.mrf.mxu0
        %v2359 = vadd.f32 0.0, %v2358
        %v2360 = vpop.f32.mrf.mxu0
        %v2361 = vpop.f32.mrf.mxu0
        %v2362 = vadd.f32 0.0, %v2361
        %v2363 = vpop.f32.mrf.mxu0
        %2364 = vmatprep.mubr.bf16.mxu0 %v2078
        %2365 = vmatmul.mubr.bf16.gmra.mxu0 %v2077
        %v2366 = vpop.f32.mrf.mxu0
        %v2367 = vadd.f32 0.0, %v2366
        %v2368 = vpop.f32.mrf.mxu0
        %v2369 = vpop.f32.mrf.mxu0
        %v2370 = vadd.f32 0.0, %v2369
        %v2371 = vpop.f32.mrf.mxu0
        %2372 = vmatprep.mubr.bf16.mxu0 %v2081
        %2373 = vmatmul.mubr.bf16.gmra.mxu0 %v2080
        %v2374 = vpop.f32.mrf.mxu0
        %v2375 = vadd.f32 0.0, %v2374
        %v2376 = vpop.f32.mrf.mxu0
        %v2377 = vpop.f32.mrf.mxu0
        %v2378 = vadd.f32 0.0, %v2377
        %v2379 = vpop.f32.mrf.mxu0
        %2380 = vmatprep.mubr.bf16.mxu0 %v2084
        %2381 = vmatmul.mubr.bf16.gmra.mxu0 %v2083
        %v2382 = vpop.f32.mrf.mxu0
        %v2383 = vadd.f32 0.0, %v2382
        %v2384 = vpop.f32.mrf.mxu0
        %v2385 = vpop.f32.mrf.mxu0
        %v2386 = vadd.f32 0.0, %v2385
        %v2387 = vpop.f32.mrf.mxu0
        %2388 = vmatprep.mubr.bf16.mxu0 %v2087
        %2389 = vmatmul.mubr.bf16.gmra.mxu0 %v2086
        %v2390 = vpop.f32.mrf.mxu0
        %v2391 = vadd.f32 0.0, %v2390
        %v2392 = vpop.f32.mrf.mxu0
        %v2393 = vpop.f32.mrf.mxu0
        %v2394 = vadd.f32 0.0, %v2393
        %v2395 = vpop.f32.mrf.mxu0
        %2396 = vmatprep.mubr.bf16.mxu0 %v2090
        %2397 = vmatmul.mubr.bf16.gmra.mxu0 %v2089
        %v2398 = vpop.f32.mrf.mxu0
        %v2399 = vadd.f32 0.0, %v2398
        %v2400 = vpop.f32.mrf.mxu0
        %v2401 = vpop.f32.mrf.mxu0
        %v2402 = vadd.f32 0.0, %v2401
        %v2403 = vpop.f32.mrf.mxu0
        %2404 = vmatprep.mubr.bf16.mxu0 %v2093
        %2405 = vmatmul.mubr.bf16.gmra.mxu0 %v2092
        %v2406 = vpop.f32.mrf.mxu0
        %v2407 = vadd.f32 0.0, %v2406
        %v2408 = vpop.f32.mrf.mxu0
        %v2409 = vpop.f32.mrf.mxu0
        %v2410 = vadd.f32 0.0, %v2409
        %v2411 = vpop.f32.mrf.mxu0
        %2412 = vmatprep.mubr.bf16.mxu0 %v2096
        %2413 = vmatmul.mubr.bf16.gmra.mxu0 %v2095
        %v2414 = vpop.f32.mrf.mxu0
        %v2415 = vadd.f32 0.0, %v2414
        %v2416 = vpop.f32.mrf.mxu0
        %v2417 = vpop.f32.mrf.mxu0
        %v2418 = vadd.f32 0.0, %v2417
        %v2419 = vpop.f32.mrf.mxu0
        %2420 = vmatprep.mubr.bf16.mxu0 %v2099
        %2421 = vmatmul.mubr.bf16.gmra.mxu0 %v2098
        %v2422 = vpop.f32.mrf.mxu0
        %v2423 = vadd.f32 0.0, %v2422
        %v2424 = vpop.f32.mrf.mxu0
        %v2425 = vpop.f32.mrf.mxu0
        %v2426 = vadd.f32 0.0, %v2425
        %v2427 = vpop.f32.mrf.mxu0
        %2428 = vmatprep.mubr.bf16.mxu0 %v2102
        %2429 = vmatmul.mubr.bf16.gmra.mxu0 %v2101
        %v2430 = vpop.f32.mrf.mxu0
        %v2431 = vadd.f32 0.0, %v2430
        %v2432 = vpop.f32.mrf.mxu0
        %v2433 = vpop.f32.mrf.mxu0
        %v2434 = vadd.f32 0.0, %v2433
        %v2435 = vpop.f32.mrf.mxu0
        %2436 = vmatprep.mubr.bf16.mxu0 %v2105
        %2437 = vmatmul.mubr.bf16.gmra.mxu0 %v2104
        %v2438 = vpop.f32.mrf.mxu0
        %v2439 = vadd.f32 0.0, %v2438
        %v2440 = vpop.f32.mrf.mxu0
        %v2441 = vpop.f32.mrf.mxu0
        %v2442 = vadd.f32 0.0, %v2441
        %v2443 = vpop.f32.mrf.mxu0
        %2444 = vmatprep.mubr.bf16.mxu0 %v2108
        %2445 = vmatmul.mubr.bf16.gmra.mxu0 %v2107
        %v2446 = vpop.f32.mrf.mxu0
        %v2447 = vadd.f32 0.0, %v2446
        %v2448 = vpop.f32.mrf.mxu0
        %v2449 = vpop.f32.mrf.mxu0
        %v2450 = vadd.f32 0.0, %v2449
        %v2451 = vpop.f32.mrf.mxu0
        %2452 = vmatprep.mubr.bf16.mxu0 %v2111
        %2453 = vmatmul.mubr.bf16.gmra.mxu0 %v2110
        %v2454 = vpop.f32.mrf.mxu0
        %v2455 = vadd.f32 0.0, %v2454
        %v2456 = vpop.f32.mrf.mxu0
        %v2457 = vpop.f32.mrf.mxu0
        %v2458 = vadd.f32 0.0, %v2457
        %v2459 = vpop.f32.mrf.mxu0
        %2460 = vmatprep.mubr.bf16.mxu0 %v2114
        %2461 = vmatmul.mubr.bf16.gmra.mxu0 %v2113
        %v2462 = vpop.f32.mrf.mxu0
        %v2463 = vadd.f32 0.0, %v2462
        %v2464 = vpop.f32.mrf.mxu0
        %v2465 = vpop.f32.mrf.mxu0
        %v2466 = vadd.f32 0.0, %v2465
        %v2467 = vpop.f32.mrf.mxu0
        %2468 = vdwg.mxu0
        %2469 = vmatprep.subr.bf16.mxu0 0
        %2470 = vmatpush1.bf16.msra.mxu0 %v2283
        %2471 = vmatprep.subr.bf16.mxu0 0
        %2472 = vmatpush1.bf16.msra.mxu0 %v2282
        %2473 = vmatprep.subr.bf16.mxu0 0
        %2474 = vmatpush1.bf16.msra.mxu0 %v2281
        %2475 = vmatprep.subr.bf16.mxu0 0
        %2476 = vmatpush1.bf16.msra.mxu0 %v2280
        %2477 = vmatprep.subr.bf16.mxu0 0
        %2478 = vmatpush1.bf16.msra.mxu0 %v2279
        %2479 = vmatprep.subr.bf16.mxu0 0
        %2480 = vmatpush1.bf16.msra.mxu0 %v2278
        %2481 = vmatprep.subr.bf16.mxu0 0
        %2482 = vmatpush1.bf16.msra.mxu0 %v2277
        %2483 = vmatprep.subr.bf16.mxu0 0
        %2484 = vmatpush1.bf16.msra.mxu0 %v2276
        %2485 = vmatprep.subr.bf16.mxu0 0
        %2486 = vmatpush2.bf16.msra.mxu0 0
        %2487 = vmatprep.subr.bf16.mxu0 0
        %2488 = vmatpush2.bf16.msra.mxu0 0
        %2489 = vmatprep.subr.bf16.mxu0 0
        %2490 = vmatpush2.bf16.msra.mxu0 0
        %2491 = vmatprep.subr.bf16.mxu0 0
        %2492 = vmatpush2.bf16.msra.mxu0 0
        %2493 = vmatprep.subr.bf16.mxu0 0
        %2494 = vmatpush2.bf16.msra.mxu0 0
        %2495 = vmatprep.subr.bf16.mxu0 0
        %2496 = vmatpush2.bf16.msra.mxu0 0
        %2497 = vmatprep.subr.bf16.mxu0 0
        %2498 = vmatpush2.bf16.msra.mxu0 0
        %2499 = vmatprep.subr.bf16.mxu0 0
        %2500 = vmatpush2.bf16.msra.mxu0 0
        %2501 = vmatprep.mubr.bf16.mxu0 0
        %2502 = vmatmul.mubr.bf16.gmra.mxu0 %v2070
        %v2503 = vpop.f32.mrf.mxu0
        %v2504 = vadd.f32 %v2343, %v2503
        %v2505 = vpop.f32.mrf.mxu0
        %v2506 = vpop.f32.mrf.mxu0
        %v2507 = vadd.f32 %v2346, %v2506
        %v2508 = vpop.f32.mrf.mxu0
        %2509 = vmatprep.mubr.bf16.mxu0 0
        %2510 = vmatmul.mubr.bf16.gmra.mxu0 %v2073
        %v2511 = vpop.f32.mrf.mxu0
        %v2512 = vadd.f32 %v2351, %v2511
        %v2513 = vpop.f32.mrf.mxu0
        %v2514 = vpop.f32.mrf.mxu0
        %v2515 = vadd.f32 %v2354, %v2514
        %v2516 = vpop.f32.mrf.mxu0
        %2517 = vmatprep.mubr.bf16.mxu0 0
        %2518 = vmatmul.mubr.bf16.gmra.mxu0 %v2076
        %v2519 = vpop.f32.mrf.mxu0
        %v2520 = vadd.f32 %v2359, %v2519
        %v2521 = vpop.f32.mrf.mxu0
        %v2522 = vpop.f32.mrf.mxu0
        %v2523 = vadd.f32 %v2362, %v2522
        %v2524 = vpop.f32.mrf.mxu0
        %2525 = vmatprep.mubr.bf16.mxu0 0
        %2526 = vmatmul.mubr.bf16.gmra.mxu0 %v2079
        %v2527 = vpop.f32.mrf.mxu0
        %v2528 = vadd.f32 %v2367, %v2527
        %v2529 = vpop.f32.mrf.mxu0
        %v2530 = vpop.f32.mrf.mxu0
        %v2531 = vadd.f32 %v2370, %v2530
        %v2532 = vpop.f32.mrf.mxu0
        %2533 = vmatprep.mubr.bf16.mxu0 0
        %2534 = vmatmul.mubr.bf16.gmra.mxu0 %v2082
        %v2535 = vpop.f32.mrf.mxu0
        %v2536 = vadd.f32 %v2375, %v2535
        %v2537 = vpop.f32.mrf.mxu0
        %v2538 = vpop.f32.mrf.mxu0
        %v2539 = vadd.f32 %v2378, %v2538
        %v2540 = vpop.f32.mrf.mxu0
        %2541 = vmatprep.mubr.bf16.mxu0 0
        %2542 = vmatmul.mubr.bf16.gmra.mxu0 %v2085
        %v2543 = vpop.f32.mrf.mxu0
        %v2544 = vadd.f32 %v2383, %v2543
        %v2545 = vpop.f32.mrf.mxu0
        %v2546 = vpop.f32.mrf.mxu0
        %v2547 = vadd.f32 %v2386, %v2546
        %v2548 = vpop.f32.mrf.mxu0
        %2549 = vmatprep.mubr.bf16.mxu0 0
        %2550 = vmatmul.mubr.bf16.gmra.mxu0 %v2088
        %v2551 = vpop.f32.mrf.mxu0
        %v2552 = vadd.f32 %v2391, %v2551
        %v2553 = vpop.f32.mrf.mxu0
        %v2554 = vpop.f32.mrf.mxu0
        %v2555 = vadd.f32 %v2394, %v2554
        %v2556 = vpop.f32.mrf.mxu0
        %2557 = vmatprep.mubr.bf16.mxu0 0
        %2558 = vmatmul.mubr.bf16.gmra.mxu0 %v2091
        %v2559 = vpop.f32.mrf.mxu0
        %v2560 = vadd.f32 %v2399, %v2559
        %v2561 = vpop.f32.mrf.mxu0
        %v2562 = vpop.f32.mrf.mxu0
        %v2563 = vadd.f32 %v2402, %v2562
        %v2564 = vpop.f32.mrf.mxu0
        %2565 = vmatprep.mubr.bf16.mxu0 0
        %2566 = vmatmul.mubr.bf16.gmra.mxu0 %v2094
        %v2567 = vpop.f32.mrf.mxu0
        %v2568 = vadd.f32 %v2407, %v2567
        %v2569 = vpop.f32.mrf.mxu0
        %v2570 = vpop.f32.mrf.mxu0
        %v2571 = vadd.f32 %v2410, %v2570
        %v2572 = vpop.f32.mrf.mxu0
        %2573 = vmatprep.mubr.bf16.mxu0 0
        %2574 = vmatmul.mubr.bf16.gmra.mxu0 %v2097
        %v2575 = vpop.f32.mrf.mxu0
        %v2576 = vadd.f32 %v2415, %v2575
        %v2577 = vpop.f32.mrf.mxu0
        %v2578 = vpop.f32.mrf.mxu0
        %v2579 = vadd.f32 %v2418, %v2578
        %v2580 = vpop.f32.mrf.mxu0
        %2581 = vmatprep.mubr.bf16.mxu0 0
        %2582 = vmatmul.mubr.bf16.gmra.mxu0 %v2100
        %v2583 = vpop.f32.mrf.mxu0
        %v2584 = vadd.f32 %v2423, %v2583
        %v2585 = vpop.f32.mrf.mxu0
        %v2586 = vpop.f32.mrf.mxu0
        %v2587 = vadd.f32 %v2426, %v2586
        %v2588 = vpop.f32.mrf.mxu0
        %2589 = vmatprep.mubr.bf16.mxu0 0
        %2590 = vmatmul.mubr.bf16.gmra.mxu0 %v2103
        %v2591 = vpop.f32.mrf.mxu0
        %v2592 = vadd.f32 %v2431, %v2591
        %v2593 = vpop.f32.mrf.mxu0
        %v2594 = vpop.f32.mrf.mxu0
        %v2595 = vadd.f32 %v2434, %v2594
        %v2596 = vpop.f32.mrf.mxu0
        %2597 = vmatprep.mubr.bf16.mxu0 0
        %2598 = vmatmul.mubr.bf16.gmra.mxu0 %v2106
        %v2599 = vpop.f32.mrf.mxu0
        %v2600 = vadd.f32 %v2439, %v2599
        %v2601 = vpop.f32.mrf.mxu0
        %v2602 = vpop.f32.mrf.mxu0
        %v2603 = vadd.f32 %v2442, %v2602
        %v2604 = vpop.f32.mrf.mxu0
        %2605 = vmatprep.mubr.bf16.mxu0 0
        %2606 = vmatmul.mubr.bf16.gmra.mxu0 %v2109
        %v2607 = vpop.f32.mrf.mxu0
        %v2608 = vadd.f32 %v2447, %v2607
        %v2609 = vpop.f32.mrf.mxu0
        %v2610 = vpop.f32.mrf.mxu0
        %v2611 = vadd.f32 %v2450, %v2610
        %v2612 = vpop.f32.mrf.mxu0
        %2613 = vmatprep.mubr.bf16.mxu0 0
        %2614 = vmatmul.mubr.bf16.gmra.mxu0 %v2112
        %v2615 = vpop.f32.mrf.mxu0
        %v2616 = vadd.f32 %v2455, %v2615
        %v2617 = vpop.f32.mrf.mxu0
        %v2618 = vpop.f32.mrf.mxu0
        %v2619 = vadd.f32 %v2458, %v2618
        %v2620 = vpop.f32.mrf.mxu0
        %2621 = vmatprep.mubr.bf16.mxu0 0
        %2622 = vmatmul.mubr.bf16.gmra.mxu0 %v2115
        %v2623 = vpop.f32.mrf.mxu0
        %v2624 = vadd.f32 %v2463, %v2623
        %v2625 = vpop.f32.mrf.mxu0
        %v2626 = vpop.f32.mrf.mxu0
        %v2627 = vadd.f32 %v2466, %v2626
        %v2628 = vpop.f32.mrf.mxu0
        %2629 = vdwg.mxu0
        %v2630 = vadd.f32 %v1762, %v2504
        %v2631 = vadd.f32 %v1763, %v2507
        %v2632 = vadd.f32 %v1764, %v2512
        %v2633 = vadd.f32 %v1765, %v2515
        %v2634 = vadd.f32 %v1766, %v2520
        %v2635 = vadd.f32 %v1767, %v2523
        %v2636 = vadd.f32 %v1768, %v2528
        %v2637 = vadd.f32 %v1769, %v2531
        %v2638 = vadd.f32 %v1770, %v2536
        %v2639 = vadd.f32 %v1771, %v2539
        %v2640 = vadd.f32 %v1772, %v2544
        %v2641 = vadd.f32 %v1773, %v2547
        %v2642 = vadd.f32 %v1774, %v2552
        %v2643 = vadd.f32 %v1775, %v2555
        %v2644 = vadd.f32 %v1776, %v2560
        %v2645 = vadd.f32 %v1777, %v2563
        %v2646 = vadd.f32 %v1778, %v2568
        %v2647 = vadd.f32 %v1779, %v2571
        %v2648 = vadd.f32 %v1780, %v2576
        %v2649 = vadd.f32 %v1781, %v2579
        %v2650 = vadd.f32 %v1782, %v2584
        %v2651 = vadd.f32 %v1783, %v2587
        %v2652 = vadd.f32 %v1784, %v2592
        %v2653 = vadd.f32 %v1785, %v2595
        %v2654 = vadd.f32 %v1786, %v2600
        %v2655 = vadd.f32 %v1787, %v2603
        %v2656 = vadd.f32 %v1788, %v2608
        %v2657 = vadd.f32 %v1789, %v2611
        %v2658 = vadd.f32 %v1790, %v2616
        %v2659 = vadd.f32 %v1791, %v2619
        %v2660 = vadd.f32 %v1792, %v2624
        %v2661 = vadd.f32 %v1793, %v2627
        %s2662 = scalar_lea.vmem [#allocation2], 48
        %v2663 = vld [vmem:[%s2662] sm:$0xff]
        %v2664 = vld [vmem:[%s2662 + $0x8] sm:$0xf]
        %v2665 = vld [vmem:[%s2662 + $0xc] sm:$0xff]
        %v2666 = vld [vmem:[%s2662 + $0x14] sm:$0xf]
        %v2667 = vld [vmem:[%s2662 + $0x18] sm:$0xff]
        %v2668 = vld [vmem:[%s2662 + $0x20] sm:$0xf]
        %v2669 = vld [vmem:[%s2662 + $0x24] sm:$0xff]
        %v2670 = vld [vmem:[%s2662 + $0x2c] sm:$0xf]
        %v2671 = vld [vmem:[%s2662 + $0x30] sm:$0xff]
        %v2672 = vld [vmem:[%s2662 + $0x38] sm:$0xf]
        %v2673 = vld [vmem:[%s2662 + $0x3c] sm:$0xff]
        %v2674 = vld [vmem:[%s2662 + $0x44] sm:$0xf]
        %v2675 = vld [vmem:[%s2662 + $0x48] sm:$0xff]
        %v2676 = vld [vmem:[%s2662 + $0x50] sm:$0xf]
        %v2677 = vld [vmem:[%s2662 + $0x54] sm:$0xff]
        %v2678 = vld [vmem:[%s2662 + $0x5c] sm:$0xf]
        %v2679 = vld [vmem:[%s2662 + $0x60] sm:$0xff]
        %v2680 = vld [vmem:[%s2662 + $0x68] sm:$0xf]
        %v2681 = vld [vmem:[%s2662 + $0x6c] sm:$0xff]
        %v2682 = vld [vmem:[%s2662 + $0x74] sm:$0xf]
        %v2683 = vld [vmem:[%s2662 + $0x78] sm:$0xff]
        %v2684 = vld [vmem:[%s2662 + $0x80] sm:$0xf]
        %v2685 = vld [vmem:[%s2662 + $0x84] sm:$0xff]
        %v2686 = vld [vmem:[%s2662 + $0x8c] sm:$0xf]
        %v2687 = vld [vmem:[%s2662 + $0x90] sm:$0xff]
        %v2688 = vld [vmem:[%s2662 + $0x98] sm:$0xf]
        %v2689 = vld [vmem:[%s2662 + $0x9c] sm:$0xff]
        %v2690 = vld [vmem:[%s2662 + $0xa4] sm:$0xf]
        %v2691 = vld [vmem:[%s2662 + $0xa8] sm:$0xff]
        %v2692 = vld [vmem:[%s2662 + $0xb0] sm:$0xf]
        %v2693 = vld [vmem:[%s2662 + $0xb4] sm:$0xff]
        %v2694 = vld [vmem:[%s2662 + $0xbc] sm:$0xf]
        %v2695 = vld [vmem:[%s2662 + $0xc0] sm:$0xff]
        %v2696 = vld [vmem:[%s2662 + $0xc8] sm:$0xf]
        %v2697 = vld [vmem:[%s2662 + $0xcc] sm:$0xff]
        %v2698 = vld [vmem:[%s2662 + $0xd4] sm:$0xf]
        %v2699 = vld [vmem:[%s2662 + $0xd8] sm:$0xff]
        %v2700 = vld [vmem:[%s2662 + $0xe0] sm:$0xf]
        %v2701 = vld [vmem:[%s2662 + $0xe4] sm:$0xff]
        %v2702 = vld [vmem:[%s2662 + $0xec] sm:$0xf]
        %v2703 = vld [vmem:[%s2662 + $0xf0] sm:$0xff]
        %v2704 = vld [vmem:[%s2662 + $0xf8] sm:$0xf]
        %v2705 = vld [vmem:[%s2662 + $0xfc] sm:$0xff]
        %v2706 = vld [vmem:[%s2662 + $0x104] sm:$0xf]
        %v2707 = vld [vmem:[%s2662 + $0x108] sm:$0xff]
        %v2708 = vld [vmem:[%s2662 + $0x110] sm:$0xf]
        %v2709 = vld [vmem:[%s2662 + $0x114] sm:$0xff]
        %v2710 = vld [vmem:[%s2662 + $0x11c] sm:$0xf]
        %v2711 = vld [vmem:[%s2662 + $0x120] sm:$0xff]
        %v2712 = vld [vmem:[%s2662 + $0x128] sm:$0xf]
        %v2713 = vld [vmem:[%s2662 + $0x12c] sm:$0xff]
        %v2714 = vld [vmem:[%s2662 + $0x134] sm:$0xf]
        %v2715 = vld [vmem:[%s2662 + $0x138] sm:$0xff]
        %v2716 = vld [vmem:[%s2662 + $0x140] sm:$0xf]
        %v2717 = vld [vmem:[%s2662 + $0x144] sm:$0xff]
        %v2718 = vld [vmem:[%s2662 + $0x14c] sm:$0xf]
        %v2719 = vld [vmem:[%s2662 + $0x150] sm:$0xff]
        %v2720 = vld [vmem:[%s2662 + $0x158] sm:$0xf]
        %v2721 = vld [vmem:[%s2662 + $0x15c] sm:$0xff]
        %v2722 = vld [vmem:[%s2662 + $0x164] sm:$0xf]
        %v2723 = vld [vmem:[%s2662 + $0x168] sm:$0xff]
        %v2724 = vld [vmem:[%s2662 + $0x170] sm:$0xf]
        %v2725 = vld [vmem:[%s2662 + $0x174] sm:$0xff]
        %v2726 = vld [vmem:[%s2662 + $0x17c] sm:$0xf]
        %s2727 = scalar_lea.vmem [#allocation7], 384
        %v2728 = vld [vmem:[%s2727] sm:$0xf]
        %v2729 = vld [vmem:[%s2727 + $0x4] sm:$0xf]
        %v2730 = vld [vmem:[%s2727 + $0x8] sm:$0xf]
        %v2731 = vld [vmem:[%s2727 + $0xc] sm:$0xf]
        %v2732 = vld [vmem:[%s2727 + $0x10] sm:$0xf]
        %v2733 = vld [vmem:[%s2727 + $0x14] sm:$0xf]
        %v2734 = vld [vmem:[%s2727 + $0x18] sm:$0xf]
        %v2735 = vld [vmem:[%s2727 + $0x1c] sm:$0xf]
        %v2736 = vld [vmem:[%s2727 + $0x20] sm:$0xf]
        %v2737 = vld [vmem:[%s2727 + $0x24] sm:$0xf]
        %v2738 = vld [vmem:[%s2727 + $0x28] sm:$0xf]
        %v2739 = vld [vmem:[%s2727 + $0x2c] sm:$0xf]
        %v2740 = vld [vmem:[%s2727 + $0x30] sm:$0xf]
        %v2741 = vld [vmem:[%s2727 + $0x34] sm:$0xf]
        %v2742 = vld [vmem:[%s2727 + $0x38] sm:$0xf]
        %v2743 = vld [vmem:[%s2727 + $0x3c] sm:$0xf]
        %v2744 = vld [vmem:[%s2727 + $0x40] sm:$0xf]
        %v2745 = vld [vmem:[%s2727 + $0x44] sm:$0xf]
        %v2746 = vld [vmem:[%s2727 + $0x48] sm:$0xf]
        %v2747 = vld [vmem:[%s2727 + $0x4c] sm:$0xf]
        %v2748 = vld [vmem:[%s2727 + $0x50] sm:$0xf]
        %v2749 = vld [vmem:[%s2727 + $0x54] sm:$0xf]
        %v2750 = vld [vmem:[%s2727 + $0x58] sm:$0xf]
        %v2751 = vld [vmem:[%s2727 + $0x5c] sm:$0xf]
        %v2752 = vld [vmem:[%s2727 + $0x60] sm:$0xf]
        %v2753 = vld [vmem:[%s2727 + $0x64] sm:$0xf]
        %v2754 = vld [vmem:[%s2727 + $0x68] sm:$0xf]
        %v2755 = vld [vmem:[%s2727 + $0x6c] sm:$0xf]
        %v2756 = vld [vmem:[%s2727 + $0x70] sm:$0xf]
        %v2757 = vld [vmem:[%s2727 + $0x74] sm:$0xf]
        %v2758 = vld [vmem:[%s2727 + $0x78] sm:$0xf]
        %v2759 = vld [vmem:[%s2727 + $0x7c] sm:$0xf]
        %v2760 = vld [vmem:[%s2727 + $0x80] sm:$0xf]
        %v2761 = vld [vmem:[%s2727 + $0x84] sm:$0xf]
        %v2762 = vld [vmem:[%s2727 + $0x88] sm:$0xf]
        %v2763 = vld [vmem:[%s2727 + $0x8c] sm:$0xf]
        %v2764 = vld [vmem:[%s2727 + $0x90] sm:$0xf]
        %v2765 = vld [vmem:[%s2727 + $0x94] sm:$0xf]
        %v2766 = vld [vmem:[%s2727 + $0x98] sm:$0xf]
        %v2767 = vld [vmem:[%s2727 + $0x9c] sm:$0xf]
        %v2768 = vld [vmem:[%s2727 + $0xa0] sm:$0xf]
        %v2769 = vld [vmem:[%s2727 + $0xa4] sm:$0xf]
        %v2770 = vld [vmem:[%s2727 + $0xa8] sm:$0xf]
        %v2771 = vld [vmem:[%s2727 + $0xac] sm:$0xf]
        %v2772 = vld [vmem:[%s2727 + $0xb0] sm:$0xf]
        %v2773 = vld [vmem:[%s2727 + $0xb4] sm:$0xf]
        %v2774 = vld [vmem:[%s2727 + $0xb8] sm:$0xf]
        %v2775 = vld [vmem:[%s2727 + $0xbc] sm:$0xf]
        %v2840 = vunpack.c.l.b16 %v2663
        %v2841 = vunpack.c.h.b16 %v2663
        %v2842 = vunpack.c.l.b16 %v2664
        %v2843 = vunpack.c.l.b16 %v2665
        %v2844 = vunpack.c.h.b16 %v2665
        %v2845 = vunpack.c.l.b16 %v2666
        %v2846 = vunpack.c.l.b16 %v2667
        %v2847 = vunpack.c.h.b16 %v2667
        %v2848 = vunpack.c.l.b16 %v2668
        %v2849 = vunpack.c.l.b16 %v2669
        %v2850 = vunpack.c.h.b16 %v2669
        %v2851 = vunpack.c.l.b16 %v2670
        %v2852 = vunpack.c.l.b16 %v2671
        %v2853 = vunpack.c.h.b16 %v2671
        %v2854 = vunpack.c.l.b16 %v2672
        %v2855 = vunpack.c.l.b16 %v2673
        %v2856 = vunpack.c.h.b16 %v2673
        %v2857 = vunpack.c.l.b16 %v2674
        %v2858 = vunpack.c.l.b16 %v2675
        %v2859 = vunpack.c.h.b16 %v2675
        %v2860 = vunpack.c.l.b16 %v2676
        %v2861 = vunpack.c.l.b16 %v2677
        %v2862 = vunpack.c.h.b16 %v2677
        %v2863 = vunpack.c.l.b16 %v2678
        %v2864 = vunpack.c.l.b16 %v2679
        %v2865 = vunpack.c.h.b16 %v2679
        %v2866 = vunpack.c.l.b16 %v2680
        %v2867 = vunpack.c.l.b16 %v2681
        %v2868 = vunpack.c.h.b16 %v2681
        %v2869 = vunpack.c.l.b16 %v2682
        %v2870 = vunpack.c.l.b16 %v2683
        %v2871 = vunpack.c.h.b16 %v2683
        %v2872 = vunpack.c.l.b16 %v2684
        %v2873 = vunpack.c.l.b16 %v2685
        %v2874 = vunpack.c.h.b16 %v2685
        %v2875 = vunpack.c.l.b16 %v2686
        %v2876 = vunpack.c.l.b16 %v2687
        %v2877 = vunpack.c.h.b16 %v2687
        %v2878 = vunpack.c.l.b16 %v2688
        %v2879 = vunpack.c.l.b16 %v2689
        %v2880 = vunpack.c.h.b16 %v2689
        %v2881 = vunpack.c.l.b16 %v2690
        %v2882 = vunpack.c.l.b16 %v2691
        %v2883 = vunpack.c.h.b16 %v2691
        %v2884 = vunpack.c.l.b16 %v2692
        %v2885 = vunpack.c.l.b16 %v2693
        %v2886 = vunpack.c.h.b16 %v2693
        %v2887 = vunpack.c.l.b16 %v2694
        %v2888 = vunpack.c.l.b16 %v2695
        %v2889 = vunpack.c.h.b16 %v2695
        %v2890 = vunpack.c.l.b16 %v2696
        %v2891 = vunpack.c.l.b16 %v2697
        %v2892 = vunpack.c.h.b16 %v2697
        %v2893 = vunpack.c.l.b16 %v2698
        %v2894 = vunpack.c.l.b16 %v2699
        %v2895 = vunpack.c.h.b16 %v2699
        %v2896 = vunpack.c.l.b16 %v2700
        %v2897 = vunpack.c.l.b16 %v2701
        %v2898 = vunpack.c.h.b16 %v2701
        %v2899 = vunpack.c.l.b16 %v2702
        %v2900 = vunpack.c.l.b16 %v2703
        %v2901 = vunpack.c.h.b16 %v2703
        %v2902 = vunpack.c.l.b16 %v2704
        %v2903 = vunpack.c.l.b16 %v2705
        %v2904 = vunpack.c.h.b16 %v2705
        %v2905 = vunpack.c.l.b16 %v2706
        %v2906 = vunpack.c.l.b16 %v2707
        %v2907 = vunpack.c.h.b16 %v2707
        %v2908 = vunpack.c.l.b16 %v2708
        %v2909 = vunpack.c.l.b16 %v2709
        %v2910 = vunpack.c.h.b16 %v2709
        %v2911 = vunpack.c.l.b16 %v2710
        %v2912 = vunpack.c.l.b16 %v2711
        %v2913 = vunpack.c.h.b16 %v2711
        %v2914 = vunpack.c.l.b16 %v2712
        %v2915 = vunpack.c.l.b16 %v2713
        %v2916 = vunpack.c.h.b16 %v2713
        %v2917 = vunpack.c.l.b16 %v2714
        %v2918 = vunpack.c.l.b16 %v2715
        %v2919 = vunpack.c.h.b16 %v2715
        %v2920 = vunpack.c.l.b16 %v2716
        %v2921 = vunpack.c.l.b16 %v2717
        %v2922 = vunpack.c.h.b16 %v2717
        %v2923 = vunpack.c.l.b16 %v2718
        %v2924 = vunpack.c.l.b16 %v2719
        %v2925 = vunpack.c.h.b16 %v2719
        %v2926 = vunpack.c.l.b16 %v2720
        %v2927 = vunpack.c.l.b16 %v2721
        %v2928 = vunpack.c.h.b16 %v2721
        %v2929 = vunpack.c.l.b16 %v2722
        %v2930 = vunpack.c.l.b16 %v2723
        %v2931 = vunpack.c.h.b16 %v2723
        %v2932 = vunpack.c.l.b16 %v2724
        %v2933 = vunpack.c.l.b16 %v2725
        %v2934 = vunpack.c.h.b16 %v2725
        %v2935 = vunpack.c.l.b16 %v2726
        %v2936 = vpack.c.b16 %v2843, %v2840
        %v2937 = vpack.c.b16 %v2844, %v2841
        %v2938 = vpack.c.b16 %v2845, %v2842
        %v2939 = vpack.c.b16 %v2849, %v2846
        %v2940 = vpack.c.b16 %v2850, %v2847
        %v2941 = vpack.c.b16 %v2851, %v2848
        %v2942 = vpack.c.b16 %v2855, %v2852
        %v2943 = vpack.c.b16 %v2856, %v2853
        %v2944 = vpack.c.b16 %v2857, %v2854
        %v2945 = vpack.c.b16 %v2861, %v2858
        %v2946 = vpack.c.b16 %v2862, %v2859
        %v2947 = vpack.c.b16 %v2863, %v2860
        %v2948 = vpack.c.b16 %v2867, %v2864
        %v2949 = vpack.c.b16 %v2868, %v2865
        %v2950 = vpack.c.b16 %v2869, %v2866
        %v2951 = vpack.c.b16 %v2873, %v2870
        %v2952 = vpack.c.b16 %v2874, %v2871
        %v2953 = vpack.c.b16 %v2875, %v2872
        %v2954 = vpack.c.b16 %v2879, %v2876
        %v2955 = vpack.c.b16 %v2880, %v2877
        %v2956 = vpack.c.b16 %v2881, %v2878
        %v2957 = vpack.c.b16 %v2885, %v2882
        %v2958 = vpack.c.b16 %v2886, %v2883
        %v2959 = vpack.c.b16 %v2887, %v2884
        %v2960 = vpack.c.b16 %v2891, %v2888
        %v2961 = vpack.c.b16 %v2892, %v2889
        %v2962 = vpack.c.b16 %v2893, %v2890
        %v2963 = vpack.c.b16 %v2897, %v2894
        %v2964 = vpack.c.b16 %v2898, %v2895
        %v2965 = vpack.c.b16 %v2899, %v2896
        %v2966 = vpack.c.b16 %v2903, %v2900
        %v2967 = vpack.c.b16 %v2904, %v2901
        %v2968 = vpack.c.b16 %v2905, %v2902
        %v2969 = vpack.c.b16 %v2909, %v2906
        %v2970 = vpack.c.b16 %v2910, %v2907
        %v2971 = vpack.c.b16 %v2911, %v2908
        %v2972 = vpack.c.b16 %v2915, %v2912
        %v2973 = vpack.c.b16 %v2916, %v2913
        %v2974 = vpack.c.b16 %v2917, %v2914
        %v2975 = vpack.c.b16 %v2921, %v2918
        %v2976 = vpack.c.b16 %v2922, %v2919
        %v2977 = vpack.c.b16 %v2923, %v2920
        %v2978 = vpack.c.b16 %v2927, %v2924
        %v2979 = vpack.c.b16 %v2928, %v2925
        %v2980 = vpack.c.b16 %v2929, %v2926
        %v2981 = vpack.c.b16 %v2933, %v2930
        %v2982 = vpack.c.b16 %v2934, %v2931
        %v2983 = vpack.c.b16 %v2935, %v2932
        %v3080 = vunpack.c.l.b16 %v2728
        %v3081 = vunpack.c.l.b16 %v2729
        %v3082 = vunpack.c.l.b16 %v2730
        %v3083 = vunpack.c.l.b16 %v2731
        %v3084 = vunpack.c.l.b16 %v2732
        %v3085 = vunpack.c.l.b16 %v2733
        %v3086 = vunpack.c.l.b16 %v2734
        %v3087 = vunpack.c.l.b16 %v2735
        %v3088 = vunpack.c.l.b16 %v2736
        %v3089 = vunpack.c.l.b16 %v2737
        %v3090 = vunpack.c.l.b16 %v2738
        %v3091 = vunpack.c.l.b16 %v2739
        %v3092 = vunpack.c.l.b16 %v2740
        %v3093 = vunpack.c.l.b16 %v2741
        %v3094 = vunpack.c.l.b16 %v2742
        %v3095 = vunpack.c.l.b16 %v2743
        %v3096 = vunpack.c.l.b16 %v2744
        %v3097 = vunpack.c.l.b16 %v2745
        %v3098 = vunpack.c.l.b16 %v2746
        %v3099 = vunpack.c.l.b16 %v2747
        %v3100 = vunpack.c.l.b16 %v2748
        %v3101 = vunpack.c.l.b16 %v2749
        %v3102 = vunpack.c.l.b16 %v2750
        %v3103 = vunpack.c.l.b16 %v2751
        %v3104 = vunpack.c.l.b16 %v2752
        %v3105 = vunpack.c.l.b16 %v2753
        %v3106 = vunpack.c.l.b16 %v2754
        %v3107 = vunpack.c.l.b16 %v2755
        %v3108 = vunpack.c.l.b16 %v2756
        %v3109 = vunpack.c.l.b16 %v2757
        %v3110 = vunpack.c.l.b16 %v2758
        %v3111 = vunpack.c.l.b16 %v2759
        %v3112 = vunpack.c.l.b16 %v2760
        %v3113 = vunpack.c.l.b16 %v2761
        %v3114 = vunpack.c.l.b16 %v2762
        %v3115 = vunpack.c.l.b16 %v2763
        %v3116 = vunpack.c.l.b16 %v2764
        %v3117 = vunpack.c.l.b16 %v2765
        %v3118 = vunpack.c.l.b16 %v2766
        %v3119 = vunpack.c.l.b16 %v2767
        %v3120 = vunpack.c.l.b16 %v2768
        %v3121 = vunpack.c.l.b16 %v2769
        %v3122 = vunpack.c.l.b16 %v2770
        %v3123 = vunpack.c.l.b16 %v2771
        %v3124 = vunpack.c.l.b16 %v2772
        %v3125 = vunpack.c.l.b16 %v2773
        %v3126 = vunpack.c.l.b16 %v2774
        %v3127 = vunpack.c.l.b16 %v2775
        %v3128 = vpack.c.b16 %v3081, %v3080
        %v3129 = vpack.c.b16 %v3083, %v3082
        %v3130 = vpack.c.b16 %v3085, %v3084
        %v3131 = vpack.c.b16 %v3087, %v3086
        %v3132 = vpack.c.b16 %v3089, %v3088
        %v3133 = vpack.c.b16 %v3091, %v3090
        %v3134 = vpack.c.b16 %v3093, %v3092
        %v3135 = vpack.c.b16 %v3095, %v3094
        %v3136 = vpack.c.b16 %v3097, %v3096
        %v3137 = vpack.c.b16 %v3099, %v3098
        %v3138 = vpack.c.b16 %v3101, %v3100
        %v3139 = vpack.c.b16 %v3103, %v3102
        %v3140 = vpack.c.b16 %v3105, %v3104
        %v3141 = vpack.c.b16 %v3107, %v3106
        %v3142 = vpack.c.b16 %v3109, %v3108
        %v3143 = vpack.c.b16 %v3111, %v3110
        %v3144 = vpack.c.b16 %v3113, %v3112
        %v3145 = vpack.c.b16 %v3115, %v3114
        %v3146 = vpack.c.b16 %v3117, %v3116
        %v3147 = vpack.c.b16 %v3119, %v3118
        %v3148 = vpack.c.b16 %v3121, %v3120
        %v3149 = vpack.c.b16 %v3123, %v3122
        %v3150 = vpack.c.b16 %v3125, %v3124
        %v3151 = vpack.c.b16 %v3127, %v3126
        %3176 = vmatprep.subr.bf16.mxu0 0
        %3177 = vmatpush1.bf16.msra.mxu0 %v3135
        %3178 = vmatprep.subr.bf16.mxu0 0
        %3179 = vmatpush1.bf16.msra.mxu0 %v3134
        %3180 = vmatprep.subr.bf16.mxu0 0
        %3181 = vmatpush1.bf16.msra.mxu0 %v3133
        %3182 = vmatprep.subr.bf16.mxu0 0
        %3183 = vmatpush1.bf16.msra.mxu0 %v3132
        %3184 = vmatprep.subr.bf16.mxu0 0
        %3185 = vmatpush1.bf16.msra.mxu0 %v3131
        %3186 = vmatprep.subr.bf16.mxu0 0
        %3187 = vmatpush1.bf16.msra.mxu0 %v3130
        %3188 = vmatprep.subr.bf16.mxu0 0
        %3189 = vmatpush1.bf16.msra.mxu0 %v3129
        %3190 = vmatprep.subr.bf16.mxu0 0
        %3191 = vmatpush1.bf16.msra.mxu0 %v3128
        %3192 = vmatprep.subr.bf16.mxu0 0
        %3193 = vmatpush2.bf16.msra.mxu0 %v3143
        %3194 = vmatprep.subr.bf16.mxu0 0
        %3195 = vmatpush2.bf16.msra.mxu0 %v3142
        %3196 = vmatprep.subr.bf16.mxu0 0
        %3197 = vmatpush2.bf16.msra.mxu0 %v3141
        %3198 = vmatprep.subr.bf16.mxu0 0
        %3199 = vmatpush2.bf16.msra.mxu0 %v3140
        %3200 = vmatprep.subr.bf16.mxu0 0
        %3201 = vmatpush2.bf16.msra.mxu0 %v3139
        %3202 = vmatprep.subr.bf16.mxu0 0
        %3203 = vmatpush2.bf16.msra.mxu0 %v3138
        %3204 = vmatprep.subr.bf16.mxu0 0
        %3205 = vmatpush2.bf16.msra.mxu0 %v3137
        %3206 = vmatprep.subr.bf16.mxu0 0
        %3207 = vmatpush2.bf16.msra.mxu0 %v3136
        %3208 = vmatprep.mubr.bf16.mxu0 %v2937
        %3209 = vmatmul.mubr.bf16.gmra.mxu0 %v2936
        %v3210 = vpop.f32.mrf.mxu0
        %v3211 = vadd.f32 0.0, %v3210
        %v3212 = vpop.f32.mrf.mxu0
        %v3213 = vpop.f32.mrf.mxu0
        %v3214 = vadd.f32 0.0, %v3213
        %v3215 = vpop.f32.mrf.mxu0
        %3216 = vmatprep.mubr.bf16.mxu0 %v2940
        %3217 = vmatmul.mubr.bf16.gmra.mxu0 %v2939
        %v3218 = vpop.f32.mrf.mxu0
        %v3219 = vadd.f32 0.0, %v3218
        %v3220 = vpop.f32.mrf.mxu0
        %v3221 = vpop.f32.mrf.mxu0
        %v3222 = vadd.f32 0.0, %v3221
        %v3223 = vpop.f32.mrf.mxu0
        %3224 = vmatprep.mubr.bf16.mxu0 %v2943
        %3225 = vmatmul.mubr.bf16.gmra.mxu0 %v2942
        %v3226 = vpop.f32.mrf.mxu0
        %v3227 = vadd.f32 0.0, %v3226
        %v3228 = vpop.f32.mrf.mxu0
        %v3229 = vpop.f32.mrf.mxu0
        %v3230 = vadd.f32 0.0, %v3229
        %v3231 = vpop.f32.mrf.mxu0
        %3232 = vmatprep.mubr.bf16.mxu0 %v2946
        %3233 = vmatmul.mubr.bf16.gmra.mxu0 %v2945
        %v3234 = vpop.f32.mrf.mxu0
        %v3235 = vadd.f32 0.0, %v3234
        %v3236 = vpop.f32.mrf.mxu0
        %v3237 = vpop.f32.mrf.mxu0
        %v3238 = vadd.f32 0.0, %v3237
        %v3239 = vpop.f32.mrf.mxu0
        %3240 = vmatprep.mubr.bf16.mxu0 %v2949
        %3241 = vmatmul.mubr.bf16.gmra.mxu0 %v2948
        %v3242 = vpop.f32.mrf.mxu0
        %v3243 = vadd.f32 0.0, %v3242
        %v3244 = vpop.f32.mrf.mxu0
        %v3245 = vpop.f32.mrf.mxu0
        %v3246 = vadd.f32 0.0, %v3245
        %v3247 = vpop.f32.mrf.mxu0
        %3248 = vmatprep.mubr.bf16.mxu0 %v2952
        %3249 = vmatmul.mubr.bf16.gmra.mxu0 %v2951
        %v3250 = vpop.f32.mrf.mxu0
        %v3251 = vadd.f32 0.0, %v3250
        %v3252 = vpop.f32.mrf.mxu0
        %v3253 = vpop.f32.mrf.mxu0
        %v3254 = vadd.f32 0.0, %v3253
        %v3255 = vpop.f32.mrf.mxu0
        %3256 = vmatprep.mubr.bf16.mxu0 %v2955
        %3257 = vmatmul.mubr.bf16.gmra.mxu0 %v2954
        %v3258 = vpop.f32.mrf.mxu0
        %v3259 = vadd.f32 0.0, %v3258
        %v3260 = vpop.f32.mrf.mxu0
        %v3261 = vpop.f32.mrf.mxu0
        %v3262 = vadd.f32 0.0, %v3261
        %v3263 = vpop.f32.mrf.mxu0
        %3264 = vmatprep.mubr.bf16.mxu0 %v2958
        %3265 = vmatmul.mubr.bf16.gmra.mxu0 %v2957
        %v3266 = vpop.f32.mrf.mxu0
        %v3267 = vadd.f32 0.0, %v3266
        %v3268 = vpop.f32.mrf.mxu0
        %v3269 = vpop.f32.mrf.mxu0
        %v3270 = vadd.f32 0.0, %v3269
        %v3271 = vpop.f32.mrf.mxu0
        %3272 = vmatprep.mubr.bf16.mxu0 %v2961
        %3273 = vmatmul.mubr.bf16.gmra.mxu0 %v2960
        %v3274 = vpop.f32.mrf.mxu0
        %v3275 = vadd.f32 0.0, %v3274
        %v3276 = vpop.f32.mrf.mxu0
        %v3277 = vpop.f32.mrf.mxu0
        %v3278 = vadd.f32 0.0, %v3277
        %v3279 = vpop.f32.mrf.mxu0
        %3280 = vmatprep.mubr.bf16.mxu0 %v2964
        %3281 = vmatmul.mubr.bf16.gmra.mxu0 %v2963
        %v3282 = vpop.f32.mrf.mxu0
        %v3283 = vadd.f32 0.0, %v3282
        %v3284 = vpop.f32.mrf.mxu0
        %v3285 = vpop.f32.mrf.mxu0
        %v3286 = vadd.f32 0.0, %v3285
        %v3287 = vpop.f32.mrf.mxu0
        %3288 = vmatprep.mubr.bf16.mxu0 %v2967
        %3289 = vmatmul.mubr.bf16.gmra.mxu0 %v2966
        %v3290 = vpop.f32.mrf.mxu0
        %v3291 = vadd.f32 0.0, %v3290
        %v3292 = vpop.f32.mrf.mxu0
        %v3293 = vpop.f32.mrf.mxu0
        %v3294 = vadd.f32 0.0, %v3293
        %v3295 = vpop.f32.mrf.mxu0
        %3296 = vmatprep.mubr.bf16.mxu0 %v2970
        %3297 = vmatmul.mubr.bf16.gmra.mxu0 %v2969
        %v3298 = vpop.f32.mrf.mxu0
        %v3299 = vadd.f32 0.0, %v3298
        %v3300 = vpop.f32.mrf.mxu0
        %v3301 = vpop.f32.mrf.mxu0
        %v3302 = vadd.f32 0.0, %v3301
        %v3303 = vpop.f32.mrf.mxu0
        %3304 = vmatprep.mubr.bf16.mxu0 %v2973
        %3305 = vmatmul.mubr.bf16.gmra.mxu0 %v2972
        %v3306 = vpop.f32.mrf.mxu0
        %v3307 = vadd.f32 0.0, %v3306
        %v3308 = vpop.f32.mrf.mxu0
        %v3309 = vpop.f32.mrf.mxu0
        %v3310 = vadd.f32 0.0, %v3309
        %v3311 = vpop.f32.mrf.mxu0
        %3312 = vmatprep.mubr.bf16.mxu0 %v2976
        %3313 = vmatmul.mubr.bf16.gmra.mxu0 %v2975
        %v3314 = vpop.f32.mrf.mxu0
        %v3315 = vadd.f32 0.0, %v3314
        %v3316 = vpop.f32.mrf.mxu0
        %v3317 = vpop.f32.mrf.mxu0
        %v3318 = vadd.f32 0.0, %v3317
        %v3319 = vpop.f32.mrf.mxu0
        %3320 = vmatprep.mubr.bf16.mxu0 %v2979
        %3321 = vmatmul.mubr.bf16.gmra.mxu0 %v2978
        %v3322 = vpop.f32.mrf.mxu0
        %v3323 = vadd.f32 0.0, %v3322
        %v3324 = vpop.f32.mrf.mxu0
        %v3325 = vpop.f32.mrf.mxu0
        %v3326 = vadd.f32 0.0, %v3325
        %v3327 = vpop.f32.mrf.mxu0
        %3328 = vmatprep.mubr.bf16.mxu0 %v2982
        %3329 = vmatmul.mubr.bf16.gmra.mxu0 %v2981
        %v3330 = vpop.f32.mrf.mxu0
        %v3331 = vadd.f32 0.0, %v3330
        %v3332 = vpop.f32.mrf.mxu0
        %v3333 = vpop.f32.mrf.mxu0
        %v3334 = vadd.f32 0.0, %v3333
        %v3335 = vpop.f32.mrf.mxu0
        %3336 = vdwg.mxu0
        %3337 = vmatprep.subr.bf16.mxu0 0
        %3338 = vmatpush1.bf16.msra.mxu0 %v3151
        %3339 = vmatprep.subr.bf16.mxu0 0
        %3340 = vmatpush1.bf16.msra.mxu0 %v3150
        %3341 = vmatprep.subr.bf16.mxu0 0
        %3342 = vmatpush1.bf16.msra.mxu0 %v3149
        %3343 = vmatprep.subr.bf16.mxu0 0
        %3344 = vmatpush1.bf16.msra.mxu0 %v3148
        %3345 = vmatprep.subr.bf16.mxu0 0
        %3346 = vmatpush1.bf16.msra.mxu0 %v3147
        %3347 = vmatprep.subr.bf16.mxu0 0
        %3348 = vmatpush1.bf16.msra.mxu0 %v3146
        %3349 = vmatprep.subr.bf16.mxu0 0
        %3350 = vmatpush1.bf16.msra.mxu0 %v3145
        %3351 = vmatprep.subr.bf16.mxu0 0
        %3352 = vmatpush1.bf16.msra.mxu0 %v3144
        %3353 = vmatprep.subr.bf16.mxu0 0
        %3354 = vmatpush2.bf16.msra.mxu0 0
        %3355 = vmatprep.subr.bf16.mxu0 0
        %3356 = vmatpush2.bf16.msra.mxu0 0
        %3357 = vmatprep.subr.bf16.mxu0 0
        %3358 = vmatpush2.bf16.msra.mxu0 0
        %3359 = vmatprep.subr.bf16.mxu0 0
        %3360 = vmatpush2.bf16.msra.mxu0 0
        %3361 = vmatprep.subr.bf16.mxu0 0
        %3362 = vmatpush2.bf16.msra.mxu0 0
        %3363 = vmatprep.subr.bf16.mxu0 0
        %3364 = vmatpush2.bf16.msra.mxu0 0
        %3365 = vmatprep.subr.bf16.mxu0 0
        %3366 = vmatpush2.bf16.msra.mxu0 0
        %3367 = vmatprep.subr.bf16.mxu0 0
        %3368 = vmatpush2.bf16.msra.mxu0 0
        %3369 = vmatprep.mubr.bf16.mxu0 0
        %3370 = vmatmul.mubr.bf16.gmra.mxu0 %v2938
        %v3371 = vpop.f32.mrf.mxu0
        %v3372 = vadd.f32 %v3211, %v3371
        %v3373 = vpop.f32.mrf.mxu0
        %v3374 = vpop.f32.mrf.mxu0
        %v3375 = vadd.f32 %v3214, %v3374
        %v3376 = vpop.f32.mrf.mxu0
        %3377 = vmatprep.mubr.bf16.mxu0 0
        %3378 = vmatmul.mubr.bf16.gmra.mxu0 %v2941
        %v3379 = vpop.f32.mrf.mxu0
        %v3380 = vadd.f32 %v3219, %v3379
        %v3381 = vpop.f32.mrf.mxu0
        %v3382 = vpop.f32.mrf.mxu0
        %v3383 = vadd.f32 %v3222, %v3382
        %v3384 = vpop.f32.mrf.mxu0
        %3385 = vmatprep.mubr.bf16.mxu0 0
        %3386 = vmatmul.mubr.bf16.gmra.mxu0 %v2944
        %v3387 = vpop.f32.mrf.mxu0
        %v3388 = vadd.f32 %v3227, %v3387
        %v3389 = vpop.f32.mrf.mxu0
        %v3390 = vpop.f32.mrf.mxu0
        %v3391 = vadd.f32 %v3230, %v3390
        %v3392 = vpop.f32.mrf.mxu0
        %3393 = vmatprep.mubr.bf16.mxu0 0
        %3394 = vmatmul.mubr.bf16.gmra.mxu0 %v2947
        %v3395 = vpop.f32.mrf.mxu0
        %v3396 = vadd.f32 %v3235, %v3395
        %v3397 = vpop.f32.mrf.mxu0
        %v3398 = vpop.f32.mrf.mxu0
        %v3399 = vadd.f32 %v3238, %v3398
        %v3400 = vpop.f32.mrf.mxu0
        %3401 = vmatprep.mubr.bf16.mxu0 0
        %3402 = vmatmul.mubr.bf16.gmra.mxu0 %v2950
        %v3403 = vpop.f32.mrf.mxu0
        %v3404 = vadd.f32 %v3243, %v3403
        %v3405 = vpop.f32.mrf.mxu0
        %v3406 = vpop.f32.mrf.mxu0
        %v3407 = vadd.f32 %v3246, %v3406
        %v3408 = vpop.f32.mrf.mxu0
        %3409 = vmatprep.mubr.bf16.mxu0 0
        %3410 = vmatmul.mubr.bf16.gmra.mxu0 %v2953
        %v3411 = vpop.f32.mrf.mxu0
        %v3412 = vadd.f32 %v3251, %v3411
        %v3413 = vpop.f32.mrf.mxu0
        %v3414 = vpop.f32.mrf.mxu0
        %v3415 = vadd.f32 %v3254, %v3414
        %v3416 = vpop.f32.mrf.mxu0
        %3417 = vmatprep.mubr.bf16.mxu0 0
        %3418 = vmatmul.mubr.bf16.gmra.mxu0 %v2956
        %v3419 = vpop.f32.mrf.mxu0
        %v3420 = vadd.f32 %v3259, %v3419
        %v3421 = vpop.f32.mrf.mxu0
        %v3422 = vpop.f32.mrf.mxu0
        %v3423 = vadd.f32 %v3262, %v3422
        %v3424 = vpop.f32.mrf.mxu0
        %3425 = vmatprep.mubr.bf16.mxu0 0
        %3426 = vmatmul.mubr.bf16.gmra.mxu0 %v2959
        %v3427 = vpop.f32.mrf.mxu0
        %v3428 = vadd.f32 %v3267, %v3427
        %v3429 = vpop.f32.mrf.mxu0
        %v3430 = vpop.f32.mrf.mxu0
        %v3431 = vadd.f32 %v3270, %v3430
        %v3432 = vpop.f32.mrf.mxu0
        %3433 = vmatprep.mubr.bf16.mxu0 0
        %3434 = vmatmul.mubr.bf16.gmra.mxu0 %v2962
        %v3435 = vpop.f32.mrf.mxu0
        %v3436 = vadd.f32 %v3275, %v3435
        %v3437 = vpop.f32.mrf.mxu0
        %v3438 = vpop.f32.mrf.mxu0
        %v3439 = vadd.f32 %v3278, %v3438
        %v3440 = vpop.f32.mrf.mxu0
        %3441 = vmatprep.mubr.bf16.mxu0 0
        %3442 = vmatmul.mubr.bf16.gmra.mxu0 %v2965
        %v3443 = vpop.f32.mrf.mxu0
        %v3444 = vadd.f32 %v3283, %v3443
        %v3445 = vpop.f32.mrf.mxu0
        %v3446 = vpop.f32.mrf.mxu0
        %v3447 = vadd.f32 %v3286, %v3446
        %v3448 = vpop.f32.mrf.mxu0
        %3449 = vmatprep.mubr.bf16.mxu0 0
        %3450 = vmatmul.mubr.bf16.gmra.mxu0 %v2968
        %v3451 = vpop.f32.mrf.mxu0
        %v3452 = vadd.f32 %v3291, %v3451
        %v3453 = vpop.f32.mrf.mxu0
        %v3454 = vpop.f32.mrf.mxu0
        %v3455 = vadd.f32 %v3294, %v3454
        %v3456 = vpop.f32.mrf.mxu0
        %3457 = vmatprep.mubr.bf16.mxu0 0
        %3458 = vmatmul.mubr.bf16.gmra.mxu0 %v2971
        %v3459 = vpop.f32.mrf.mxu0
        %v3460 = vadd.f32 %v3299, %v3459
        %v3461 = vpop.f32.mrf.mxu0
        %v3462 = vpop.f32.mrf.mxu0
        %v3463 = vadd.f32 %v3302, %v3462
        %v3464 = vpop.f32.mrf.mxu0
        %3465 = vmatprep.mubr.bf16.mxu0 0
        %3466 = vmatmul.mubr.bf16.gmra.mxu0 %v2974
        %v3467 = vpop.f32.mrf.mxu0
        %v3468 = vadd.f32 %v3307, %v3467
        %v3469 = vpop.f32.mrf.mxu0
        %v3470 = vpop.f32.mrf.mxu0
        %v3471 = vadd.f32 %v3310, %v3470
        %v3472 = vpop.f32.mrf.mxu0
        %3473 = vmatprep.mubr.bf16.mxu0 0
        %3474 = vmatmul.mubr.bf16.gmra.mxu0 %v2977
        %v3475 = vpop.f32.mrf.mxu0
        %v3476 = vadd.f32 %v3315, %v3475
        %v3477 = vpop.f32.mrf.mxu0
        %v3478 = vpop.f32.mrf.mxu0
        %v3479 = vadd.f32 %v3318, %v3478
        %v3480 = vpop.f32.mrf.mxu0
        %3481 = vmatprep.mubr.bf16.mxu0 0
        %3482 = vmatmul.mubr.bf16.gmra.mxu0 %v2980
        %v3483 = vpop.f32.mrf.mxu0
        %v3484 = vadd.f32 %v3323, %v3483
        %v3485 = vpop.f32.mrf.mxu0
        %v3486 = vpop.f32.mrf.mxu0
        %v3487 = vadd.f32 %v3326, %v3486
        %v3488 = vpop.f32.mrf.mxu0
        %3489 = vmatprep.mubr.bf16.mxu0 0
        %3490 = vmatmul.mubr.bf16.gmra.mxu0 %v2983
        %v3491 = vpop.f32.mrf.mxu0
        %v3492 = vadd.f32 %v3331, %v3491
        %v3493 = vpop.f32.mrf.mxu0
        %v3494 = vpop.f32.mrf.mxu0
        %v3495 = vadd.f32 %v3334, %v3494
        %v3496 = vpop.f32.mrf.mxu0
        %3497 = vdwg.mxu0
        %v3498 = vadd.f32 %v2630, %v3372
        %v3499 = vadd.f32 %v2631, %v3375
        %v3500 = vadd.f32 %v2632, %v3380
        %v3501 = vadd.f32 %v2633, %v3383
        %v3502 = vadd.f32 %v2634, %v3388
        %v3503 = vadd.f32 %v2635, %v3391
        %v3504 = vadd.f32 %v2636, %v3396
        %v3505 = vadd.f32 %v2637, %v3399
        %v3506 = vadd.f32 %v2638, %v3404
        %v3507 = vadd.f32 %v2639, %v3407
        %v3508 = vadd.f32 %v2640, %v3412
        %v3509 = vadd.f32 %v2641, %v3415
        %v3510 = vadd.f32 %v2642, %v3420
        %v3511 = vadd.f32 %v2643, %v3423
        %v3512 = vadd.f32 %v2644, %v3428
        %v3513 = vadd.f32 %v2645, %v3431
        %v3514 = vadd.f32 %v2646, %v3436
        %v3515 = vadd.f32 %v2647, %v3439
        %v3516 = vadd.f32 %v2648, %v3444
        %v3517 = vadd.f32 %v2649, %v3447
        %v3518 = vadd.f32 %v2650, %v3452
        %v3519 = vadd.f32 %v2651, %v3455
        %v3520 = vadd.f32 %v2652, %v3460
        %v3521 = vadd.f32 %v2653, %v3463
        %v3522 = vadd.f32 %v2654, %v3468
        %v3523 = vadd.f32 %v2655, %v3471
        %v3524 = vadd.f32 %v2656, %v3476
        %v3525 = vadd.f32 %v2657, %v3479
        %v3526 = vadd.f32 %v2658, %v3484
        %v3527 = vadd.f32 %v2659, %v3487
        %v3528 = vadd.f32 %v2660, %v3492
        %v3529 = vadd.f32 %v2661, %v3495
        %vm3530 = vcmp.gt.f32.partialorder %v3498, 0.0
        %vm3531 = vcmp.gt.f32.partialorder %v3499, 0.0
        %vm3532 = vcmp.gt.f32.partialorder %v3500, 0.0
        %vm3533 = vcmp.gt.f32.partialorder %v3501, 0.0
        %vm3534 = vcmp.gt.f32.partialorder %v3502, 0.0
        %vm3535 = vcmp.gt.f32.partialorder %v3503, 0.0
        %vm3536 = vcmp.gt.f32.partialorder %v3504, 0.0
        %vm3537 = vcmp.gt.f32.partialorder %v3505, 0.0
        %vm3538 = vcmp.gt.f32.partialorder %v3506, 0.0
        %vm3539 = vcmp.gt.f32.partialorder %v3507, 0.0
        %vm3540 = vcmp.gt.f32.partialorder %v3508, 0.0
        %vm3541 = vcmp.gt.f32.partialorder %v3509, 0.0
        %vm3542 = vcmp.gt.f32.partialorder %v3510, 0.0
        %vm3543 = vcmp.gt.f32.partialorder %v3511, 0.0
        %vm3544 = vcmp.gt.f32.partialorder %v3512, 0.0
        %vm3545 = vcmp.gt.f32.partialorder %v3513, 0.0
        %vm3546 = vcmp.gt.f32.partialorder %v3514, 0.0
        %vm3547 = vcmp.gt.f32.partialorder %v3515, 0.0
        %vm3548 = vcmp.gt.f32.partialorder %v3516, 0.0
        %vm3549 = vcmp.gt.f32.partialorder %v3517, 0.0
        %vm3550 = vcmp.gt.f32.partialorder %v3518, 0.0
        %vm3551 = vcmp.gt.f32.partialorder %v3519, 0.0
        %vm3552 = vcmp.gt.f32.partialorder %v3520, 0.0
        %vm3553 = vcmp.gt.f32.partialorder %v3521, 0.0
        %vm3554 = vcmp.gt.f32.partialorder %v3522, 0.0
        %vm3555 = vcmp.gt.f32.partialorder %v3523, 0.0
        %vm3556 = vcmp.gt.f32.partialorder %v3524, 0.0
        %vm3557 = vcmp.gt.f32.partialorder %v3525, 0.0
        %vm3558 = vcmp.gt.f32.partialorder %v3526, 0.0
        %vm3559 = vcmp.gt.f32.partialorder %v3527, 0.0
        %vm3560 = vcmp.gt.f32.partialorder %v3528, 0.0
        %vm3561 = vcmp.gt.f32.partialorder %v3529, 0.0
        %v3562 = vmul.f32 %v3498, 0.2
        %v3563 = vmul.f32 %v3499, 0.2
        %v3564 = vmul.f32 %v3500, 0.2
        %v3565 = vmul.f32 %v3501, 0.2
        %v3566 = vmul.f32 %v3502, 0.2
        %v3567 = vmul.f32 %v3503, 0.2
        %v3568 = vmul.f32 %v3504, 0.2
        %v3569 = vmul.f32 %v3505, 0.2
        %v3570 = vmul.f32 %v3506, 0.2
        %v3571 = vmul.f32 %v3507, 0.2
        %v3572 = vmul.f32 %v3508, 0.2
        %v3573 = vmul.f32 %v3509, 0.2
        %v3574 = vmul.f32 %v3510, 0.2
        %v3575 = vmul.f32 %v3511, 0.2
        %v3576 = vmul.f32 %v3512, 0.2
        %v3577 = vmul.f32 %v3513, 0.2
        %v3578 = vmul.f32 %v3514, 0.2
        %v3579 = vmul.f32 %v3515, 0.2
        %v3580 = vmul.f32 %v3516, 0.2
        %v3581 = vmul.f32 %v3517, 0.2
        %v3582 = vmul.f32 %v3518, 0.2
        %v3583 = vmul.f32 %v3519, 0.2
        %v3584 = vmul.f32 %v3520, 0.2
        %v3585 = vmul.f32 %v3521, 0.2
        %v3586 = vmul.f32 %v3522, 0.2
        %v3587 = vmul.f32 %v3523, 0.2
        %v3588 = vmul.f32 %v3524, 0.2
        %v3589 = vmul.f32 %v3525, 0.2
        %v3590 = vmul.f32 %v3526, 0.2
        %v3591 = vmul.f32 %v3527, 0.2
        %v3592 = vmul.f32 %v3528, 0.2
        %v3593 = vmul.f32 %v3529, 0.2
        %v3594 = vsel %vm3530, %v3498, %v3562
        %v3595 = vsel %vm3531, %v3499, %v3563
        %v3596 = vsel %vm3532, %v3500, %v3564
        %v3597 = vsel %vm3533, %v3501, %v3565
        %v3598 = vsel %vm3534, %v3502, %v3566
        %v3599 = vsel %vm3535, %v3503, %v3567
        %v3600 = vsel %vm3536, %v3504, %v3568
        %v3601 = vsel %vm3537, %v3505, %v3569
        %v3602 = vsel %vm3538, %v3506, %v3570
        %v3603 = vsel %vm3539, %v3507, %v3571
        %v3604 = vsel %vm3540, %v3508, %v3572
        %v3605 = vsel %vm3541, %v3509, %v3573
        %v3606 = vsel %vm3542, %v3510, %v3574
        %v3607 = vsel %vm3543, %v3511, %v3575
        %v3608 = vsel %vm3544, %v3512, %v3576
        %v3609 = vsel %vm3545, %v3513, %v3577
        %v3610 = vsel %vm3546, %v3514, %v3578
        %v3611 = vsel %vm3547, %v3515, %v3579
        %v3612 = vsel %vm3548, %v3516, %v3580
        %v3613 = vsel %vm3549, %v3517, %v3581
        %v3614 = vsel %vm3550, %v3518, %v3582
        %v3615 = vsel %vm3551, %v3519, %v3583
        %v3616 = vsel %vm3552, %v3520, %v3584
        %v3617 = vsel %vm3553, %v3521, %v3585
        %v3618 = vsel %vm3554, %v3522, %v3586
        %v3619 = vsel %vm3555, %v3523, %v3587
        %v3620 = vsel %vm3556, %v3524, %v3588
        %v3621 = vsel %vm3557, %v3525, %v3589
        %v3622 = vsel %vm3558, %v3526, %v3590
        %v3623 = vsel %vm3559, %v3527, %v3591
        %v3624 = vsel %vm3560, %v3528, %v3592
        %v3625 = vsel %vm3561, %v3529, %v3593
        %v3626 = vpack.c.bf16 %v3595, %v3594
        %v3627 = vpack.c.bf16 %v3597, %v3596
        %v3628 = vpack.c.bf16 %v3599, %v3598
        %v3629 = vpack.c.bf16 %v3601, %v3600
        %v3630 = vpack.c.bf16 %v3603, %v3602
        %v3631 = vpack.c.bf16 %v3605, %v3604
        %v3632 = vpack.c.bf16 %v3607, %v3606
        %v3633 = vpack.c.bf16 %v3609, %v3608
        %v3634 = vpack.c.bf16 %v3611, %v3610
        %v3635 = vpack.c.bf16 %v3613, %v3612
        %v3636 = vpack.c.bf16 %v3615, %v3614
        %v3637 = vpack.c.bf16 %v3617, %v3616
        %v3638 = vpack.c.bf16 %v3619, %v3618
        %v3639 = vpack.c.bf16 %v3621, %v3620
        %v3640 = vpack.c.bf16 %v3623, %v3622
        %v3641 = vpack.c.bf16 %v3625, %v3624
        %3642 = vst [vmem:[#allocation3] sm:$0xff] 0
        %3643 = vst [vmem:[#allocation3 + $0x8] sm:$0xf] 0
        %3644 = vst [vmem:[#allocation3 + $0xc] sm:$0xff] 0
        %3645 = vst [vmem:[#allocation3 + $0x14] sm:$0xf] 0
        %s3646 = scalar_lea.vmem [#allocation3], 408
        %3647 = vst [vmem:[%s3646] sm:$0xff] 0
        %3648 = vst [vmem:[%s3646 + $0x8] sm:$0xf] 0
        %3649 = vst [vmem:[%s3646 + $0xc] sm:$0xff] 0
        %3650 = vst [vmem:[%s3646 + $0x14] sm:$0xf] 0
        %v3667 = vunpack.c.l.b16 %v3626
        %v3668 = vunpack.c.h.b16 %v3626
        %v3669 = vunpack.c.l.b16 %v3627
        %v3670 = vunpack.c.h.b16 %v3627
        %v3671 = vunpack.c.l.b16 %v3628
        %v3672 = vunpack.c.h.b16 %v3628
        %v3673 = vunpack.c.l.b16 %v3629
        %v3674 = vunpack.c.h.b16 %v3629
        %v3675 = vunpack.c.l.b16 %v3630
        %v3676 = vunpack.c.h.b16 %v3630
        %v3677 = vunpack.c.l.b16 %v3631
        %v3678 = vunpack.c.h.b16 %v3631
        %v3679 = vunpack.c.l.b16 %v3632
        %v3680 = vunpack.c.h.b16 %v3632
        %v3681 = vunpack.c.l.b16 %v3633
        %v3682 = vunpack.c.h.b16 %v3633
        %v3683 = vunpack.c.l.b16 %v3634
        %v3684 = vunpack.c.h.b16 %v3634
        %v3685 = vunpack.c.l.b16 %v3635
        %v3686 = vunpack.c.h.b16 %v3635
        %v3687 = vunpack.c.l.b16 %v3636
        %v3688 = vunpack.c.h.b16 %v3636
        %v3689 = vunpack.c.l.b16 %v3637
        %v3690 = vunpack.c.h.b16 %v3637
        %v3691 = vunpack.c.l.b16 %v3638
        %v3692 = vunpack.c.h.b16 %v3638
        %v3693 = vunpack.c.l.b16 %v3639
        %v3694 = vunpack.c.h.b16 %v3639
        %v3695 = vunpack.c.l.b16 %v3640
        %v3696 = vunpack.c.h.b16 %v3640
        %v3697 = vunpack.c.l.b16 %v3641
        %v3698 = vunpack.c.h.b16 %v3641
        %v3699 = vpack.c.b16 %v3667, %v3667
        %v3700 = vpack.c.b16 %v3668, %v3668
        %v3701 = vpack.c.b16 %v3669, %v3669
        %v3702 = vpack.c.b16 %v3670, %v3670
        %v3703 = vpack.c.b16 %v3671, %v3671
        %v3704 = vpack.c.b16 %v3672, %v3672
        %v3705 = vpack.c.b16 %v3673, %v3673
        %v3706 = vpack.c.b16 %v3674, %v3674
        %v3707 = vpack.c.b16 %v3675, %v3675
        %v3708 = vpack.c.b16 %v3676, %v3676
        %v3709 = vpack.c.b16 %v3677, %v3677
        %v3710 = vpack.c.b16 %v3678, %v3678
        %v3711 = vpack.c.b16 %v3679, %v3679
        %v3712 = vpack.c.b16 %v3680, %v3680
        %v3713 = vpack.c.b16 %v3681, %v3681
        %v3714 = vpack.c.b16 %v3682, %v3682
        %v3715 = vpack.c.b16 %v3683, %v3683
        %v3716 = vpack.c.b16 %v3684, %v3684
        %v3717 = vpack.c.b16 %v3685, %v3685
        %v3718 = vpack.c.b16 %v3686, %v3686
        %v3719 = vpack.c.b16 %v3687, %v3687
        %v3720 = vpack.c.b16 %v3688, %v3688
        %v3721 = vpack.c.b16 %v3689, %v3689
        %v3722 = vpack.c.b16 %v3690, %v3690
        %v3723 = vpack.c.b16 %v3691, %v3691
        %v3724 = vpack.c.b16 %v3692, %v3692
        %v3725 = vpack.c.b16 %v3693, %v3693
        %v3726 = vpack.c.b16 %v3694, %v3694
        %v3727 = vpack.c.b16 %v3695, %v3695
        %v3728 = vpack.c.b16 %v3696, %v3696
        %v3729 = vpack.c.b16 %v3697, %v3697
        %v3730 = vpack.c.b16 %v3698, %v3698
        %s3763 = scalar_lea.vmem [#allocation3], 24
        %3764 = vst [vmem:[%s3763 + $0x4] sm:$0xf] %v3699
        %3765 = vst [vmem:[%s3763 + $0x10] sm:$0xf] %v3700
        %3766 = vst [vmem:[%s3763 + $0x1c] sm:$0xf] %v3701
        %3767 = vst [vmem:[%s3763 + $0x28] sm:$0xf] %v3702
        %3768 = vst [vmem:[%s3763 + $0x34] sm:$0xf] %v3703
        %3769 = vst [vmem:[%s3763 + $0x40] sm:$0xf] %v3704
        %3770 = vst [vmem:[%s3763 + $0x4c] sm:$0xf] %v3705
        %3771 = vst [vmem:[%s3763 + $0x58] sm:$0xf] %v3706
        %3772 = vst [vmem:[%s3763 + $0x64] sm:$0xf] %v3707
        %3773 = vst [vmem:[%s3763 + $0x70] sm:$0xf] %v3708
        %3774 = vst [vmem:[%s3763 + $0x7c] sm:$0xf] %v3709
        %3775 = vst [vmem:[%s3763 + $0x88] sm:$0xf] %v3710
        %3776 = vst [vmem:[%s3763 + $0x94] sm:$0xf] %v3711
        %3777 = vst [vmem:[%s3763 + $0xa0] sm:$0xf] %v3712
        %3778 = vst [vmem:[%s3763 + $0xac] sm:$0xf] %v3713
        %3779 = vst [vmem:[%s3763 + $0xb8] sm:$0xf] %v3714
        %3780 = vst [vmem:[%s3763 + $0xc4] sm:$0xf] %v3715
        %3781 = vst [vmem:[%s3763 + $0xd0] sm:$0xf] %v3716
        %3782 = vst [vmem:[%s3763 + $0xdc] sm:$0xf] %v3717
        %3783 = vst [vmem:[%s3763 + $0xe8] sm:$0xf] %v3718
        %3784 = vst [vmem:[%s3763 + $0xf4] sm:$0xf] %v3719
        %3785 = vst [vmem:[%s3763 + $0x100] sm:$0xf] %v3720
        %3786 = vst [vmem:[%s3763 + $0x10c] sm:$0xf] %v3721
        %3787 = vst [vmem:[%s3763 + $0x118] sm:$0xf] %v3722
        %3788 = vst [vmem:[%s3763 + $0x124] sm:$0xf] %v3723
        %3789 = vst [vmem:[%s3763 + $0x130] sm:$0xf] %v3724
        %3790 = vst [vmem:[%s3763 + $0x13c] sm:$0xf] %v3725
        %3791 = vst [vmem:[%s3763 + $0x148] sm:$0xf] %v3726
        %3792 = vst [vmem:[%s3763 + $0x154] sm:$0xf] %v3727
        %3793 = vst [vmem:[%s3763 + $0x160] sm:$0xf] %v3728
        %3794 = vst [vmem:[%s3763 + $0x16c] sm:$0xf] %v3729
        %3795 = vst [vmem:[%s3763 + $0x178] sm:$0xf] %v3730
        %v3797 = vshrl.u32 %v3626, 16
        %v3799 = vrot.slane %v3797, 7
        %v3800 = vshll.u32 %v3626, 16
        %v3802 = vor.u32 %v3799, %v3800
        %v3804 = vshrl.u32 %v3627, 16
        %v3806 = vrot.slane %v3804, 7
        %v3807 = vshll.u32 %v3627, 16
        %v3809 = vor.u32 %v3806, %v3807
        %v3811 = vshrl.u32 %v3628, 16
        %v3813 = vrot.slane %v3811, 7
        %v3814 = vshll.u32 %v3628, 16
        %v3816 = vor.u32 %v3813, %v3814
        %v3818 = vshrl.u32 %v3629, 16
        %v3820 = vrot.slane %v3818, 7
        %v3821 = vshll.u32 %v3629, 16
        %v3823 = vor.u32 %v3820, %v3821
        %v3825 = vshrl.u32 %v3630, 16
        %v3827 = vrot.slane %v3825, 7
        %v3828 = vshll.u32 %v3630, 16
        %v3830 = vor.u32 %v3827, %v3828
        %v3832 = vshrl.u32 %v3631, 16
        %v3834 = vrot.slane %v3832, 7
        %v3835 = vshll.u32 %v3631, 16
        %v3837 = vor.u32 %v3834, %v3835
        %v3839 = vshrl.u32 %v3632, 16
        %v3841 = vrot.slane %v3839, 7
        %v3842 = vshll.u32 %v3632, 16
        %v3844 = vor.u32 %v3841, %v3842
        %v3846 = vshrl.u32 %v3633, 16
        %v3848 = vrot.slane %v3846, 7
        %v3849 = vshll.u32 %v3633, 16
        %v3851 = vor.u32 %v3848, %v3849
        %v3853 = vshrl.u32 %v3634, 16
        %v3855 = vrot.slane %v3853, 7
        %v3856 = vshll.u32 %v3634, 16
        %v3858 = vor.u32 %v3855, %v3856
        %v3860 = vshrl.u32 %v3635, 16
        %v3862 = vrot.slane %v3860, 7
        %v3863 = vshll.u32 %v3635, 16
        %v3865 = vor.u32 %v3862, %v3863
        %v3867 = vshrl.u32 %v3636, 16
        %v3869 = vrot.slane %v3867, 7
        %v3870 = vshll.u32 %v3636, 16
        %v3872 = vor.u32 %v3869, %v3870
        %v3874 = vshrl.u32 %v3637, 16
        %v3876 = vrot.slane %v3874, 7
        %v3877 = vshll.u32 %v3637, 16
        %v3879 = vor.u32 %v3876, %v3877
        %v3881 = vshrl.u32 %v3638, 16
        %v3883 = vrot.slane %v3881, 7
        %v3884 = vshll.u32 %v3638, 16
        %v3886 = vor.u32 %v3883, %v3884
        %v3888 = vshrl.u32 %v3639, 16
        %v3890 = vrot.slane %v3888, 7
        %v3891 = vshll.u32 %v3639, 16
        %v3893 = vor.u32 %v3890, %v3891
        %v3895 = vshrl.u32 %v3640, 16
        %v3897 = vrot.slane %v3895, 7
        %v3898 = vshll.u32 %v3640, 16
        %v3900 = vor.u32 %v3897, %v3898
        %v3902 = vshrl.u32 %v3641, 16
        %v3904 = vrot.slane %v3902, 7
        %v3905 = vshll.u32 %v3641, 16
        %v3907 = vor.u32 %v3904, %v3905
        %vm3924 = vcmask 1040384
        %vm3925 = vsmask.f32 256
        %vm3926 = vmand %vm3924, %vm3925
        %v3927 = vsel %vm3926, 0, %v3802
        %v3928 = vsel %vm3926, 0, %v3809
        %v3929 = vsel %vm3926, 0, %v3816
        %v3930 = vsel %vm3926, 0, %v3823
        %v3931 = vsel %vm3926, 0, %v3830
        %v3932 = vsel %vm3926, 0, %v3837
        %v3933 = vsel %vm3926, 0, %v3844
        %v3934 = vsel %vm3926, 0, %v3851
        %v3935 = vsel %vm3926, 0, %v3858
        %v3936 = vsel %vm3926, 0, %v3865
        %v3937 = vsel %vm3926, 0, %v3872
        %v3938 = vsel %vm3926, 0, %v3879
        %v3939 = vsel %vm3926, 0, %v3886
        %v3940 = vsel %vm3926, 0, %v3893
        %v3941 = vsel %vm3926, 0, %v3900
        %v3942 = vsel %vm3926, 0, %v3907
        %v3959 = vunpack.c.l.b16 %v3927
        %v3960 = vunpack.c.h.b16 %v3927
        %v3961 = vunpack.c.l.b16 %v3928
        %v3962 = vunpack.c.h.b16 %v3928
        %v3963 = vunpack.c.l.b16 %v3929
        %v3964 = vunpack.c.h.b16 %v3929
        %v3965 = vunpack.c.l.b16 %v3930
        %v3966 = vunpack.c.h.b16 %v3930
        %v3967 = vunpack.c.l.b16 %v3931
        %v3968 = vunpack.c.h.b16 %v3931
        %v3969 = vunpack.c.l.b16 %v3932
        %v3970 = vunpack.c.h.b16 %v3932
        %v3971 = vunpack.c.l.b16 %v3933
        %v3972 = vunpack.c.h.b16 %v3933
        %v3973 = vunpack.c.l.b16 %v3934
        %v3974 = vunpack.c.h.b16 %v3934
        %v3975 = vunpack.c.l.b16 %v3935
        %v3976 = vunpack.c.h.b16 %v3935
        %v3977 = vunpack.c.l.b16 %v3936
        %v3978 = vunpack.c.h.b16 %v3936
        %v3979 = vunpack.c.l.b16 %v3937
        %v3980 = vunpack.c.h.b16 %v3937
        %v3981 = vunpack.c.l.b16 %v3938
        %v3982 = vunpack.c.h.b16 %v3938
        %v3983 = vunpack.c.l.b16 %v3939
        %v3984 = vunpack.c.h.b16 %v3939
        %v3985 = vunpack.c.l.b16 %v3940
        %v3986 = vunpack.c.h.b16 %v3940
        %v3987 = vunpack.c.l.b16 %v3941
        %v3988 = vunpack.c.h.b16 %v3941
        %v3989 = vunpack.c.l.b16 %v3942
        %v3990 = vunpack.c.h.b16 %v3942
        %v3991 = vpack.c.b16 %v3959, %v3959
        %v3992 = vpack.c.b16 %v3960, %v3960
        %v3993 = vpack.c.b16 %v3961, %v3961
        %v3994 = vpack.c.b16 %v3962, %v3962
        %v3995 = vpack.c.b16 %v3963, %v3963
        %v3996 = vpack.c.b16 %v3964, %v3964
        %v3997 = vpack.c.b16 %v3965, %v3965
        %v3998 = vpack.c.b16 %v3966, %v3966
        %v3999 = vpack.c.b16 %v3967, %v3967
        %v4000 = vpack.c.b16 %v3968, %v3968
        %v4001 = vpack.c.b16 %v3969, %v3969
        %v4002 = vpack.c.b16 %v3970, %v3970
        %v4003 = vpack.c.b16 %v3971, %v3971
        %v4004 = vpack.c.b16 %v3972, %v3972
        %v4005 = vpack.c.b16 %v3973, %v3973
        %v4006 = vpack.c.b16 %v3974, %v3974
        %v4007 = vpack.c.b16 %v3975, %v3975
        %v4008 = vpack.c.b16 %v3976, %v3976
        %v4009 = vpack.c.b16 %v3977, %v3977
        %v4010 = vpack.c.b16 %v3978, %v3978
        %v4011 = vpack.c.b16 %v3979, %v3979
        %v4012 = vpack.c.b16 %v3980, %v3980
        %v4013 = vpack.c.b16 %v3981, %v3981
        %v4014 = vpack.c.b16 %v3982, %v3982
        %v4015 = vpack.c.b16 %v3983, %v3983
        %v4016 = vpack.c.b16 %v3984, %v3984
        %v4017 = vpack.c.b16 %v3985, %v3985
        %v4018 = vpack.c.b16 %v3986, %v3986
        %v4019 = vpack.c.b16 %v3987, %v3987
        %v4020 = vpack.c.b16 %v3988, %v3988
        %v4021 = vpack.c.b16 %v3989, %v3989
        %v4022 = vpack.c.b16 %v3990, %v3990
        %4055 = vst [vmem:[%s3763] sm:$0xf] %v3991
        %4056 = vst [vmem:[%s3763 + $0xc] sm:$0xf] %v3992
        %4057 = vst [vmem:[%s3763 + $0x18] sm:$0xf] %v3993
        %4058 = vst [vmem:[%s3763 + $0x24] sm:$0xf] %v3994
        %4059 = vst [vmem:[%s3763 + $0x30] sm:$0xf] %v3995
        %4060 = vst [vmem:[%s3763 + $0x3c] sm:$0xf] %v3996
        %4061 = vst [vmem:[%s3763 + $0x48] sm:$0xf] %v3997
        %4062 = vst [vmem:[%s3763 + $0x54] sm:$0xf] %v3998
        %4063 = vst [vmem:[%s3763 + $0x60] sm:$0xf] %v3999
        %4064 = vst [vmem:[%s3763 + $0x6c] sm:$0xf] %v4000
        %4065 = vst [vmem:[%s3763 + $0x78] sm:$0xf] %v4001
        %4066 = vst [vmem:[%s3763 + $0x84] sm:$0xf] %v4002
        %4067 = vst [vmem:[%s3763 + $0x90] sm:$0xf] %v4003
        %4068 = vst [vmem:[%s3763 + $0x9c] sm:$0xf] %v4004
        %4069 = vst [vmem:[%s3763 + $0xa8] sm:$0xf] %v4005
        %4070 = vst [vmem:[%s3763 + $0xb4] sm:$0xf] %v4006
        %4071 = vst [vmem:[%s3763 + $0xc0] sm:$0xf] %v4007
        %4072 = vst [vmem:[%s3763 + $0xcc] sm:$0xf] %v4008
        %4073 = vst [vmem:[%s3763 + $0xd8] sm:$0xf] %v4009
        %4074 = vst [vmem:[%s3763 + $0xe4] sm:$0xf] %v4010
        %4075 = vst [vmem:[%s3763 + $0xf0] sm:$0xf] %v4011
        %4076 = vst [vmem:[%s3763 + $0xfc] sm:$0xf] %v4012
        %4077 = vst [vmem:[%s3763 + $0x108] sm:$0xf] %v4013
        %4078 = vst [vmem:[%s3763 + $0x114] sm:$0xf] %v4014
        %4079 = vst [vmem:[%s3763 + $0x120] sm:$0xf] %v4015
        %4080 = vst [vmem:[%s3763 + $0x12c] sm:$0xf] %v4016
        %4081 = vst [vmem:[%s3763 + $0x138] sm:$0xf] %v4017
        %4082 = vst [vmem:[%s3763 + $0x144] sm:$0xf] %v4018
        %4083 = vst [vmem:[%s3763 + $0x150] sm:$0xf] %v4019
        %4084 = vst [vmem:[%s3763 + $0x15c] sm:$0xf] %v4020
        %4085 = vst [vmem:[%s3763 + $0x168] sm:$0xf] %v4021
        %4086 = vst [vmem:[%s3763 + $0x174] sm:$0xf] %v4022
        %v4087 = vrot.slane %v3800, 1
        %v4088 = vor.u32 %v3797, %v4087
        %v4089 = vrot.slane %v3807, 1
        %v4090 = vor.u32 %v3804, %v4089
        %v4091 = vrot.slane %v3814, 1
        %v4092 = vor.u32 %v3811, %v4091
        %v4093 = vrot.slane %v3821, 1
        %v4094 = vor.u32 %v3818, %v4093
        %v4095 = vrot.slane %v3828, 1
        %v4096 = vor.u32 %v3825, %v4095
        %v4097 = vrot.slane %v3835, 1
        %v4098 = vor.u32 %v3832, %v4097
        %v4099 = vrot.slane %v3842, 1
        %v4100 = vor.u32 %v3839, %v4099
        %v4101 = vrot.slane %v3849, 1
        %v4102 = vor.u32 %v3846, %v4101
        %v4103 = vrot.slane %v3856, 1
        %v4104 = vor.u32 %v3853, %v4103
        %v4105 = vrot.slane %v3863, 1
        %v4106 = vor.u32 %v3860, %v4105
        %v4107 = vrot.slane %v3870, 1
        %v4108 = vor.u32 %v3867, %v4107
        %v4109 = vrot.slane %v3877, 1
        %v4110 = vor.u32 %v3874, %v4109
        %v4111 = vrot.slane %v3884, 1
        %v4112 = vor.u32 %v3881, %v4111
        %v4113 = vrot.slane %v3891, 1
        %v4114 = vor.u32 %v3888, %v4113
        %v4115 = vrot.slane %v3898, 1
        %v4116 = vor.u32 %v3895, %v4115
        %v4117 = vrot.slane %v3905, 1
        %v4118 = vor.u32 %v3902, %v4117
        %vm4135 = vcmask 1047552
        %vm4136 = vsmask.f32 7424
        %vm4137 = vmand %vm4135, %vm4136
        %v4138 = vsel %vm4137, %v4088, 0
        %v4139 = vsel %vm4137, %v4090, 0
        %v4140 = vsel %vm4137, %v4092, 0
        %v4141 = vsel %vm4137, %v4094, 0
        %v4142 = vsel %vm4137, %v4096, 0
        %v4143 = vsel %vm4137, %v4098, 0
        %v4144 = vsel %vm4137, %v4100, 0
        %v4145 = vsel %vm4137, %v4102, 0
        %v4146 = vsel %vm4137, %v4104, 0
        %v4147 = vsel %vm4137, %v4106, 0
        %v4148 = vsel %vm4137, %v4108, 0
        %v4149 = vsel %vm4137, %v4110, 0
        %v4150 = vsel %vm4137, %v4112, 0
        %v4151 = vsel %vm4137, %v4114, 0
        %v4152 = vsel %vm4137, %v4116, 0
        %v4153 = vsel %vm4137, %v4118, 0
        %v4170 = vunpack.c.l.b16 %v4138
        %v4171 = vunpack.c.h.b16 %v4138
        %v4172 = vunpack.c.l.b16 %v4139
        %v4173 = vunpack.c.h.b16 %v4139
        %v4174 = vunpack.c.l.b16 %v4140
        %v4175 = vunpack.c.h.b16 %v4140
        %v4176 = vunpack.c.l.b16 %v4141
        %v4177 = vunpack.c.h.b16 %v4141
        %v4178 = vunpack.c.l.b16 %v4142
        %v4179 = vunpack.c.h.b16 %v4142
        %v4180 = vunpack.c.l.b16 %v4143
        %v4181 = vunpack.c.h.b16 %v4143
        %v4182 = vunpack.c.l.b16 %v4144
        %v4183 = vunpack.c.h.b16 %v4144
        %v4184 = vunpack.c.l.b16 %v4145
        %v4185 = vunpack.c.h.b16 %v4145
        %v4186 = vunpack.c.l.b16 %v4146
        %v4187 = vunpack.c.h.b16 %v4146
        %v4188 = vunpack.c.l.b16 %v4147
        %v4189 = vunpack.c.h.b16 %v4147
        %v4190 = vunpack.c.l.b16 %v4148
        %v4191 = vunpack.c.h.b16 %v4148
        %v4192 = vunpack.c.l.b16 %v4149
        %v4193 = vunpack.c.h.b16 %v4149
        %v4194 = vunpack.c.l.b16 %v4150
        %v4195 = vunpack.c.h.b16 %v4150
        %v4196 = vunpack.c.l.b16 %v4151
        %v4197 = vunpack.c.h.b16 %v4151
        %v4198 = vunpack.c.l.b16 %v4152
        %v4199 = vunpack.c.h.b16 %v4152
        %v4200 = vunpack.c.l.b16 %v4153
        %v4201 = vunpack.c.h.b16 %v4153
        %v4202 = vpack.c.b16 %v4170, %v4170
        %v4203 = vpack.c.b16 %v4171, %v4171
        %v4204 = vpack.c.b16 %v4172, %v4172
        %v4205 = vpack.c.b16 %v4173, %v4173
        %v4206 = vpack.c.b16 %v4174, %v4174
        %v4207 = vpack.c.b16 %v4175, %v4175
        %v4208 = vpack.c.b16 %v4176, %v4176
        %v4209 = vpack.c.b16 %v4177, %v4177
        %v4210 = vpack.c.b16 %v4178, %v4178
        %v4211 = vpack.c.b16 %v4179, %v4179
        %v4212 = vpack.c.b16 %v4180, %v4180
        %v4213 = vpack.c.b16 %v4181, %v4181
        %v4214 = vpack.c.b16 %v4182, %v4182
        %v4215 = vpack.c.b16 %v4183, %v4183
        %v4216 = vpack.c.b16 %v4184, %v4184
        %v4217 = vpack.c.b16 %v4185, %v4185
        %v4218 = vpack.c.b16 %v4186, %v4186
        %v4219 = vpack.c.b16 %v4187, %v4187
        %v4220 = vpack.c.b16 %v4188, %v4188
        %v4221 = vpack.c.b16 %v4189, %v4189
        %v4222 = vpack.c.b16 %v4190, %v4190
        %v4223 = vpack.c.b16 %v4191, %v4191
        %v4224 = vpack.c.b16 %v4192, %v4192
        %v4225 = vpack.c.b16 %v4193, %v4193
        %v4226 = vpack.c.b16 %v4194, %v4194
        %v4227 = vpack.c.b16 %v4195, %v4195
        %v4228 = vpack.c.b16 %v4196, %v4196
        %v4229 = vpack.c.b16 %v4197, %v4197
        %v4230 = vpack.c.b16 %v4198, %v4198
        %v4231 = vpack.c.b16 %v4199, %v4199
        %v4232 = vpack.c.b16 %v4200, %v4200
        %v4233 = vpack.c.b16 %v4201, %v4201
        %4266 = vst [vmem:[%s3763 + $0x8] sm:$0xf] %v4202
        %4267 = vst [vmem:[%s3763 + $0x14] sm:$0xf] %v4203
        %4268 = vst [vmem:[%s3763 + $0x20] sm:$0xf] %v4204
        %4269 = vst [vmem:[%s3763 + $0x2c] sm:$0xf] %v4205
        %4270 = vst [vmem:[%s3763 + $0x38] sm:$0xf] %v4206
        %4271 = vst [vmem:[%s3763 + $0x44] sm:$0xf] %v4207
        %4272 = vst [vmem:[%s3763 + $0x50] sm:$0xf] %v4208
        %4273 = vst [vmem:[%s3763 + $0x5c] sm:$0xf] %v4209
        %4274 = vst [vmem:[%s3763 + $0x68] sm:$0xf] %v4210
        %4275 = vst [vmem:[%s3763 + $0x74] sm:$0xf] %v4211
        %4276 = vst [vmem:[%s3763 + $0x80] sm:$0xf] %v4212
        %4277 = vst [vmem:[%s3763 + $0x8c] sm:$0xf] %v4213
        %4278 = vst [vmem:[%s3763 + $0x98] sm:$0xf] %v4214
        %4279 = vst [vmem:[%s3763 + $0xa4] sm:$0xf] %v4215
        %4280 = vst [vmem:[%s3763 + $0xb0] sm:$0xf] %v4216
        %4281 = vst [vmem:[%s3763 + $0xbc] sm:$0xf] %v4217
        %4282 = vst [vmem:[%s3763 + $0xc8] sm:$0xf] %v4218
        %4283 = vst [vmem:[%s3763 + $0xd4] sm:$0xf] %v4219
        %4284 = vst [vmem:[%s3763 + $0xe0] sm:$0xf] %v4220
        %4285 = vst [vmem:[%s3763 + $0xec] sm:$0xf] %v4221
        %4286 = vst [vmem:[%s3763 + $0xf8] sm:$0xf] %v4222
        %4287 = vst [vmem:[%s3763 + $0x104] sm:$0xf] %v4223
        %4288 = vst [vmem:[%s3763 + $0x110] sm:$0xf] %v4224
        %4289 = vst [vmem:[%s3763 + $0x11c] sm:$0xf] %v4225
        %4290 = vst [vmem:[%s3763 + $0x128] sm:$0xf] %v4226
        %4291 = vst [vmem:[%s3763 + $0x134] sm:$0xf] %v4227
        %4292 = vst [vmem:[%s3763 + $0x140] sm:$0xf] %v4228
        %4293 = vst [vmem:[%s3763 + $0x14c] sm:$0xf] %v4229
        %4294 = vst [vmem:[%s3763 + $0x158] sm:$0xf] %v4230
        %4295 = vst [vmem:[%s3763 + $0x164] sm:$0xf] %v4231
        %4296 = vst [vmem:[%s3763 + $0x170] sm:$0xf] %v4232
        %4297 = vst [vmem:[%s3763 + $0x17c] sm:$0xf] %v4233
        %v4298 = vld [vmem:[%s4] sm:$0x1]
        %v4300 = vlaneseq
        %v4301 = vshrl.u32 %v4300, 7
        %v4302 = vsub.s32 0, %v4301
        %v4303 = vrot.slane %v4298, %v4302
        %v4305 = vld [vmem:[#allocation3] sm:$0xff]
        %v4306 = vld [vmem:[#allocation3 + $0x8] sm:$0xf]
        %v4307 = vld [vmem:[#allocation3 + $0xc] sm:$0xff]
        %v4308 = vld [vmem:[#allocation3 + $0x14] sm:$0xf]
        %v4309 = vld [vmem:[#allocation3 + $0x18] sm:$0xff]
        %v4310 = vld [vmem:[#allocation3 + $0x20] sm:$0xf]
        %v4311 = vld [vmem:[#allocation3 + $0x24] sm:$0xff]
        %v4312 = vld [vmem:[#allocation3 + $0x2c] sm:$0xf]
        %v4313 = vld [vmem:[#allocation3 + $0x30] sm:$0xff]
        %v4314 = vld [vmem:[#allocation3 + $0x38] sm:$0xf]
        %v4315 = vld [vmem:[#allocation3 + $0x3c] sm:$0xff]
        %v4316 = vld [vmem:[#allocation3 + $0x44] sm:$0xf]
        %v4317 = vld [vmem:[#allocation3 + $0x48] sm:$0xff]
        %v4318 = vld [vmem:[#allocation3 + $0x50] sm:$0xf]
        %v4319 = vld [vmem:[#allocation3 + $0x54] sm:$0xff]
        %v4320 = vld [vmem:[#allocation3 + $0x5c] sm:$0xf]
        %v4321 = vld [vmem:[#allocation3 + $0x60] sm:$0xff]
        %v4322 = vld [vmem:[#allocation3 + $0x68] sm:$0xf]
        %v4323 = vld [vmem:[#allocation3 + $0x6c] sm:$0xff]
        %v4324 = vld [vmem:[#allocation3 + $0x74] sm:$0xf]
        %v4325 = vld [vmem:[#allocation3 + $0x78] sm:$0xff]
        %v4326 = vld [vmem:[#allocation3 + $0x80] sm:$0xf]
        %v4327 = vld [vmem:[#allocation3 + $0x84] sm:$0xff]
        %v4328 = vld [vmem:[#allocation3 + $0x8c] sm:$0xf]
        %v4329 = vld [vmem:[#allocation3 + $0x90] sm:$0xff]
        %v4330 = vld [vmem:[#allocation3 + $0x98] sm:$0xf]
        %v4331 = vld [vmem:[#allocation3 + $0x9c] sm:$0xff]
        %v4332 = vld [vmem:[#allocation3 + $0xa4] sm:$0xf]
        %v4333 = vld [vmem:[#allocation3 + $0xa8] sm:$0xff]
        %v4334 = vld [vmem:[#allocation3 + $0xb0] sm:$0xf]
        %v4335 = vld [vmem:[#allocation3 + $0xb4] sm:$0xff]
        %v4336 = vld [vmem:[#allocation3 + $0xbc] sm:$0xf]
        %v4337 = vld [vmem:[#allocation3 + $0xc0] sm:$0xff]
        %v4338 = vld [vmem:[#allocation3 + $0xc8] sm:$0xf]
        %v4339 = vld [vmem:[#allocation3 + $0xcc] sm:$0xff]
        %v4340 = vld [vmem:[#allocation3 + $0xd4] sm:$0xf]
        %v4341 = vld [vmem:[#allocation3 + $0xd8] sm:$0xff]
        %v4342 = vld [vmem:[#allocation3 + $0xe0] sm:$0xf]
        %v4343 = vld [vmem:[#allocation3 + $0xe4] sm:$0xff]
        %v4344 = vld [vmem:[#allocation3 + $0xec] sm:$0xf]
        %v4345 = vld [vmem:[#allocation3 + $0xf0] sm:$0xff]
        %v4346 = vld [vmem:[#allocation3 + $0xf8] sm:$0xf]
        %v4347 = vld [vmem:[#allocation3 + $0xfc] sm:$0xff]
        %v4348 = vld [vmem:[#allocation3 + $0x104] sm:$0xf]
        %v4349 = vld [vmem:[#allocation3 + $0x108] sm:$0xff]
        %v4350 = vld [vmem:[#allocation3 + $0x110] sm:$0xf]
        %v4351 = vld [vmem:[#allocation3 + $0x114] sm:$0xff]
        %v4352 = vld [vmem:[#allocation3 + $0x11c] sm:$0xf]
        %v4353 = vld [vmem:[#allocation3 + $0x120] sm:$0xff]
        %v4354 = vld [vmem:[#allocation3 + $0x128] sm:$0xf]
        %v4355 = vld [vmem:[#allocation3 + $0x12c] sm:$0xff]
        %v4356 = vld [vmem:[#allocation3 + $0x134] sm:$0xf]
        %v4357 = vld [vmem:[#allocation3 + $0x138] sm:$0xff]
        %v4358 = vld [vmem:[#allocation3 + $0x140] sm:$0xf]
        %v4359 = vld [vmem:[#allocation3 + $0x144] sm:$0xff]
        %v4360 = vld [vmem:[#allocation3 + $0x14c] sm:$0xf]
        %v4361 = vld [vmem:[#allocation3 + $0x150] sm:$0xff]
        %v4362 = vld [vmem:[#allocation3 + $0x158] sm:$0xf]
        %v4363 = vld [vmem:[#allocation3 + $0x15c] sm:$0xff]
        %v4364 = vld [vmem:[#allocation3 + $0x164] sm:$0xf]
        %v4365 = vld [vmem:[#allocation3 + $0x168] sm:$0xff]
        %v4366 = vld [vmem:[#allocation3 + $0x170] sm:$0xf]
        %v4367 = vld [vmem:[#allocation3 + $0x174] sm:$0xff]
        %v4368 = vld [vmem:[#allocation3 + $0x17c] sm:$0xf]
        %v4369 = vld [vmem:[#allocation9] sm:$0xf]
        %v4370 = vld [vmem:[#allocation9 + $0x4] sm:$0xf]
        %v4371 = vld [vmem:[#allocation9 + $0x8] sm:$0xf]
        %v4372 = vld [vmem:[#allocation9 + $0xc] sm:$0xf]
        %v4373 = vld [vmem:[#allocation9 + $0x10] sm:$0xf]
        %v4374 = vld [vmem:[#allocation9 + $0x14] sm:$0xf]
        %v4375 = vld [vmem:[#allocation9 + $0x18] sm:$0xf]
        %v4376 = vld [vmem:[#allocation9 + $0x1c] sm:$0xf]
        %v4377 = vld [vmem:[#allocation9 + $0x20] sm:$0xf]
        %v4378 = vld [vmem:[#allocation9 + $0x24] sm:$0xf]
        %v4379 = vld [vmem:[#allocation9 + $0x28] sm:$0xf]
        %v4380 = vld [vmem:[#allocation9 + $0x2c] sm:$0xf]
        %v4381 = vld [vmem:[#allocation9 + $0x30] sm:$0xf]
        %v4382 = vld [vmem:[#allocation9 + $0x34] sm:$0xf]
        %v4383 = vld [vmem:[#allocation9 + $0x38] sm:$0xf]
        %v4384 = vld [vmem:[#allocation9 + $0x3c] sm:$0xf]
        %v4385 = vld [vmem:[#allocation9 + $0x40] sm:$0xf]
        %v4386 = vld [vmem:[#allocation9 + $0x44] sm:$0xf]
        %v4387 = vld [vmem:[#allocation9 + $0x48] sm:$0xf]
        %v4388 = vld [vmem:[#allocation9 + $0x4c] sm:$0xf]
        %v4389 = vld [vmem:[#allocation9 + $0x50] sm:$0xf]
        %v4390 = vld [vmem:[#allocation9 + $0x54] sm:$0xf]
        %v4391 = vld [vmem:[#allocation9 + $0x58] sm:$0xf]
        %v4392 = vld [vmem:[#allocation9 + $0x5c] sm:$0xf]
        %v4393 = vld [vmem:[#allocation9 + $0x60] sm:$0xf]
        %v4394 = vld [vmem:[#allocation9 + $0x64] sm:$0xf]
        %v4395 = vld [vmem:[#allocation9 + $0x68] sm:$0xf]
        %v4396 = vld [vmem:[#allocation9 + $0x6c] sm:$0xf]
        %v4397 = vld [vmem:[#allocation9 + $0x70] sm:$0xf]
        %v4398 = vld [vmem:[#allocation9 + $0x74] sm:$0xf]
        %v4399 = vld [vmem:[#allocation9 + $0x78] sm:$0xf]
        %v4400 = vld [vmem:[#allocation9 + $0x7c] sm:$0xf]
        %v4401 = vld [vmem:[#allocation9 + $0x80] sm:$0xf]
        %v4402 = vld [vmem:[#allocation9 + $0x84] sm:$0xf]
        %v4403 = vld [vmem:[#allocation9 + $0x88] sm:$0xf]
        %v4404 = vld [vmem:[#allocation9 + $0x8c] sm:$0xf]
        %v4405 = vld [vmem:[#allocation9 + $0x90] sm:$0xf]
        %v4406 = vld [vmem:[#allocation9 + $0x94] sm:$0xf]
        %v4407 = vld [vmem:[#allocation9 + $0x98] sm:$0xf]
        %v4408 = vld [vmem:[#allocation9 + $0x9c] sm:$0xf]
        %v4409 = vld [vmem:[#allocation9 + $0xa0] sm:$0xf]
        %v4410 = vld [vmem:[#allocation9 + $0xa4] sm:$0xf]
        %v4411 = vld [vmem:[#allocation9 + $0xa8] sm:$0xf]
        %v4412 = vld [vmem:[#allocation9 + $0xac] sm:$0xf]
        %v4413 = vld [vmem:[#allocation9 + $0xb0] sm:$0xf]
        %v4414 = vld [vmem:[#allocation9 + $0xb4] sm:$0xf]
        %v4415 = vld [vmem:[#allocation9 + $0xb8] sm:$0xf]
        %v4416 = vld [vmem:[#allocation9 + $0xbc] sm:$0xf]
        %v4481 = vunpack.c.l.b16 %v4305
        %v4482 = vunpack.c.h.b16 %v4305
        %v4483 = vunpack.c.l.b16 %v4306
        %v4484 = vunpack.c.l.b16 %v4307
        %v4485 = vunpack.c.h.b16 %v4307
        %v4486 = vunpack.c.l.b16 %v4308
        %v4487 = vunpack.c.l.b16 %v4309
        %v4488 = vunpack.c.h.b16 %v4309
        %v4489 = vunpack.c.l.b16 %v4310
        %v4490 = vunpack.c.l.b16 %v4311
        %v4491 = vunpack.c.h.b16 %v4311
        %v4492 = vunpack.c.l.b16 %v4312
        %v4493 = vunpack.c.l.b16 %v4313
        %v4494 = vunpack.c.h.b16 %v4313
        %v4495 = vunpack.c.l.b16 %v4314
        %v4496 = vunpack.c.l.b16 %v4315
        %v4497 = vunpack.c.h.b16 %v4315
        %v4498 = vunpack.c.l.b16 %v4316
        %v4499 = vunpack.c.l.b16 %v4317
        %v4500 = vunpack.c.h.b16 %v4317
        %v4501 = vunpack.c.l.b16 %v4318
        %v4502 = vunpack.c.l.b16 %v4319
        %v4503 = vunpack.c.h.b16 %v4319
        %v4504 = vunpack.c.l.b16 %v4320
        %v4505 = vunpack.c.l.b16 %v4321
        %v4506 = vunpack.c.h.b16 %v4321
        %v4507 = vunpack.c.l.b16 %v4322
        %v4508 = vunpack.c.l.b16 %v4323
        %v4509 = vunpack.c.h.b16 %v4323
        %v4510 = vunpack.c.l.b16 %v4324
        %v4511 = vunpack.c.l.b16 %v4325
        %v4512 = vunpack.c.h.b16 %v4325
        %v4513 = vunpack.c.l.b16 %v4326
        %v4514 = vunpack.c.l.b16 %v4327
        %v4515 = vunpack.c.h.b16 %v4327
        %v4516 = vunpack.c.l.b16 %v4328
        %v4517 = vunpack.c.l.b16 %v4329
        %v4518 = vunpack.c.h.b16 %v4329
        %v4519 = vunpack.c.l.b16 %v4330
        %v4520 = vunpack.c.l.b16 %v4331
        %v4521 = vunpack.c.h.b16 %v4331
        %v4522 = vunpack.c.l.b16 %v4332
        %v4523 = vunpack.c.l.b16 %v4333
        %v4524 = vunpack.c.h.b16 %v4333
        %v4525 = vunpack.c.l.b16 %v4334
        %v4526 = vunpack.c.l.b16 %v4335
        %v4527 = vunpack.c.h.b16 %v4335
        %v4528 = vunpack.c.l.b16 %v4336
        %v4529 = vunpack.c.l.b16 %v4337
        %v4530 = vunpack.c.h.b16 %v4337
        %v4531 = vunpack.c.l.b16 %v4338
        %v4532 = vunpack.c.l.b16 %v4339
        %v4533 = vunpack.c.h.b16 %v4339
        %v4534 = vunpack.c.l.b16 %v4340
        %v4535 = vunpack.c.l.b16 %v4341
        %v4536 = vunpack.c.h.b16 %v4341
        %v4537 = vunpack.c.l.b16 %v4342
        %v4538 = vunpack.c.l.b16 %v4343
        %v4539 = vunpack.c.h.b16 %v4343
        %v4540 = vunpack.c.l.b16 %v4344
        %v4541 = vunpack.c.l.b16 %v4345
        %v4542 = vunpack.c.h.b16 %v4345
        %v4543 = vunpack.c.l.b16 %v4346
        %v4544 = vunpack.c.l.b16 %v4347
        %v4545 = vunpack.c.h.b16 %v4347
        %v4546 = vunpack.c.l.b16 %v4348
        %v4547 = vunpack.c.l.b16 %v4349
        %v4548 = vunpack.c.h.b16 %v4349
        %v4549 = vunpack.c.l.b16 %v4350
        %v4550 = vunpack.c.l.b16 %v4351
        %v4551 = vunpack.c.h.b16 %v4351
        %v4552 = vunpack.c.l.b16 %v4352
        %v4553 = vunpack.c.l.b16 %v4353
        %v4554 = vunpack.c.h.b16 %v4353
        %v4555 = vunpack.c.l.b16 %v4354
        %v4556 = vunpack.c.l.b16 %v4355
        %v4557 = vunpack.c.h.b16 %v4355
        %v4558 = vunpack.c.l.b16 %v4356
        %v4559 = vunpack.c.l.b16 %v4357
        %v4560 = vunpack.c.h.b16 %v4357
        %v4561 = vunpack.c.l.b16 %v4358
        %v4562 = vunpack.c.l.b16 %v4359
        %v4563 = vunpack.c.h.b16 %v4359
        %v4564 = vunpack.c.l.b16 %v4360
        %v4565 = vunpack.c.l.b16 %v4361
        %v4566 = vunpack.c.h.b16 %v4361
        %v4567 = vunpack.c.l.b16 %v4362
        %v4568 = vunpack.c.l.b16 %v4363
        %v4569 = vunpack.c.h.b16 %v4363
        %v4570 = vunpack.c.l.b16 %v4364
        %v4571 = vunpack.c.l.b16 %v4365
        %v4572 = vunpack.c.h.b16 %v4365
        %v4573 = vunpack.c.l.b16 %v4366
        %v4574 = vunpack.c.l.b16 %v4367
        %v4575 = vunpack.c.h.b16 %v4367
        %v4576 = vunpack.c.l.b16 %v4368
        %v4577 = vpack.c.b16 %v4484, %v4481
        %v4578 = vpack.c.b16 %v4485, %v4482
        %v4579 = vpack.c.b16 %v4486, %v4483
        %v4580 = vpack.c.b16 %v4490, %v4487
        %v4581 = vpack.c.b16 %v4491, %v4488
        %v4582 = vpack.c.b16 %v4492, %v4489
        %v4583 = vpack.c.b16 %v4496, %v4493
        %v4584 = vpack.c.b16 %v4497, %v4494
        %v4585 = vpack.c.b16 %v4498, %v4495
        %v4586 = vpack.c.b16 %v4502, %v4499
        %v4587 = vpack.c.b16 %v4503, %v4500
        %v4588 = vpack.c.b16 %v4504, %v4501
        %v4589 = vpack.c.b16 %v4508, %v4505
        %v4590 = vpack.c.b16 %v4509, %v4506
        %v4591 = vpack.c.b16 %v4510, %v4507
        %v4592 = vpack.c.b16 %v4514, %v4511
        %v4593 = vpack.c.b16 %v4515, %v4512
        %v4594 = vpack.c.b16 %v4516, %v4513
        %v4595 = vpack.c.b16 %v4520, %v4517
        %v4596 = vpack.c.b16 %v4521, %v4518
        %v4597 = vpack.c.b16 %v4522, %v4519
        %v4598 = vpack.c.b16 %v4526, %v4523
        %v4599 = vpack.c.b16 %v4527, %v4524
        %v4600 = vpack.c.b16 %v4528, %v4525
        %v4601 = vpack.c.b16 %v4532, %v4529
        %v4602 = vpack.c.b16 %v4533, %v4530
        %v4603 = vpack.c.b16 %v4534, %v4531
        %v4604 = vpack.c.b16 %v4538, %v4535
        %v4605 = vpack.c.b16 %v4539, %v4536
        %v4606 = vpack.c.b16 %v4540, %v4537
        %v4607 = vpack.c.b16 %v4544, %v4541
        %v4608 = vpack.c.b16 %v4545, %v4542
        %v4609 = vpack.c.b16 %v4546, %v4543
        %v4610 = vpack.c.b16 %v4550, %v4547
        %v4611 = vpack.c.b16 %v4551, %v4548
        %v4612 = vpack.c.b16 %v4552, %v4549
        %v4613 = vpack.c.b16 %v4556, %v4553
        %v4614 = vpack.c.b16 %v4557, %v4554
        %v4615 = vpack.c.b16 %v4558, %v4555
        %v4616 = vpack.c.b16 %v4562, %v4559
        %v4617 = vpack.c.b16 %v4563, %v4560
        %v4618 = vpack.c.b16 %v4564, %v4561
        %v4619 = vpack.c.b16 %v4568, %v4565
        %v4620 = vpack.c.b16 %v4569, %v4566
        %v4621 = vpack.c.b16 %v4570, %v4567
        %v4622 = vpack.c.b16 %v4574, %v4571
        %v4623 = vpack.c.b16 %v4575, %v4572
        %v4624 = vpack.c.b16 %v4576, %v4573
        %v4721 = vunpack.c.l.b16 %v4369
        %v4722 = vunpack.c.l.b16 %v4370
        %v4723 = vunpack.c.l.b16 %v4371
        %v4724 = vunpack.c.l.b16 %v4372
        %v4725 = vunpack.c.l.b16 %v4373
        %v4726 = vunpack.c.l.b16 %v4374
        %v4727 = vunpack.c.l.b16 %v4375
        %v4728 = vunpack.c.l.b16 %v4376
        %v4729 = vunpack.c.l.b16 %v4377
        %v4730 = vunpack.c.l.b16 %v4378
        %v4731 = vunpack.c.l.b16 %v4379
        %v4732 = vunpack.c.l.b16 %v4380
        %v4733 = vunpack.c.l.b16 %v4381
        %v4734 = vunpack.c.l.b16 %v4382
        %v4735 = vunpack.c.l.b16 %v4383
        %v4736 = vunpack.c.l.b16 %v4384
        %v4737 = vunpack.c.l.b16 %v4385
        %v4738 = vunpack.c.l.b16 %v4386
        %v4739 = vunpack.c.l.b16 %v4387
        %v4740 = vunpack.c.l.b16 %v4388
        %v4741 = vunpack.c.l.b16 %v4389
        %v4742 = vunpack.c.l.b16 %v4390
        %v4743 = vunpack.c.l.b16 %v4391
        %v4744 = vunpack.c.l.b16 %v4392
        %v4745 = vunpack.c.l.b16 %v4393
        %v4746 = vunpack.c.l.b16 %v4394
        %v4747 = vunpack.c.l.b16 %v4395
        %v4748 = vunpack.c.l.b16 %v4396
        %v4749 = vunpack.c.l.b16 %v4397
        %v4750 = vunpack.c.l.b16 %v4398
        %v4751 = vunpack.c.l.b16 %v4399
        %v4752 = vunpack.c.l.b16 %v4400
        %v4753 = vunpack.c.l.b16 %v4401
        %v4754 = vunpack.c.l.b16 %v4402
        %v4755 = vunpack.c.l.b16 %v4403
        %v4756 = vunpack.c.l.b16 %v4404
        %v4757 = vunpack.c.l.b16 %v4405
        %v4758 = vunpack.c.l.b16 %v4406
        %v4759 = vunpack.c.l.b16 %v4407
        %v4760 = vunpack.c.l.b16 %v4408
        %v4761 = vunpack.c.l.b16 %v4409
        %v4762 = vunpack.c.l.b16 %v4410
        %v4763 = vunpack.c.l.b16 %v4411
        %v4764 = vunpack.c.l.b16 %v4412
        %v4765 = vunpack.c.l.b16 %v4413
        %v4766 = vunpack.c.l.b16 %v4414
        %v4767 = vunpack.c.l.b16 %v4415
        %v4768 = vunpack.c.l.b16 %v4416
        %v4769 = vpack.c.b16 %v4722, %v4721
        %v4770 = vpack.c.b16 %v4724, %v4723
        %v4771 = vpack.c.b16 %v4726, %v4725
        %v4772 = vpack.c.b16 %v4728, %v4727
        %v4773 = vpack.c.b16 %v4730, %v4729
        %v4774 = vpack.c.b16 %v4732, %v4731
        %v4775 = vpack.c.b16 %v4734, %v4733
        %v4776 = vpack.c.b16 %v4736, %v4735
        %v4777 = vpack.c.b16 %v4738, %v4737
        %v4778 = vpack.c.b16 %v4740, %v4739
        %v4779 = vpack.c.b16 %v4742, %v4741
        %v4780 = vpack.c.b16 %v4744, %v4743
        %v4781 = vpack.c.b16 %v4746, %v4745
        %v4782 = vpack.c.b16 %v4748, %v4747
        %v4783 = vpack.c.b16 %v4750, %v4749
        %v4784 = vpack.c.b16 %v4752, %v4751
        %v4785 = vpack.c.b16 %v4754, %v4753
        %v4786 = vpack.c.b16 %v4756, %v4755
        %v4787 = vpack.c.b16 %v4758, %v4757
        %v4788 = vpack.c.b16 %v4760, %v4759
        %v4789 = vpack.c.b16 %v4762, %v4761
        %v4790 = vpack.c.b16 %v4764, %v4763
        %v4791 = vpack.c.b16 %v4766, %v4765
        %v4792 = vpack.c.b16 %v4768, %v4767
        %4817 = vmatprep.subr.bf16.mxu0 0
        %4818 = vmatpush1.bf16.msra.mxu0 %v4776
        %4819 = vmatprep.subr.bf16.mxu0 0
        %4820 = vmatpush1.bf16.msra.mxu0 %v4775
        %4821 = vmatprep.subr.bf16.mxu0 0
        %4822 = vmatpush1.bf16.msra.mxu0 %v4774
        %4823 = vmatprep.subr.bf16.mxu0 0
        %4824 = vmatpush1.bf16.msra.mxu0 %v4773
        %4825 = vmatprep.subr.bf16.mxu0 0
        %4826 = vmatpush1.bf16.msra.mxu0 %v4772
        %4827 = vmatprep.subr.bf16.mxu0 0
        %4828 = vmatpush1.bf16.msra.mxu0 %v4771
        %4829 = vmatprep.subr.bf16.mxu0 0
        %4830 = vmatpush1.bf16.msra.mxu0 %v4770
        %4831 = vmatprep.subr.bf16.mxu0 0
        %4832 = vmatpush1.bf16.msra.mxu0 %v4769
        %4833 = vmatprep.subr.bf16.mxu0 0
        %4834 = vmatpush2.bf16.msra.mxu0 %v4784
        %4835 = vmatprep.subr.bf16.mxu0 0
        %4836 = vmatpush2.bf16.msra.mxu0 %v4783
        %4837 = vmatprep.subr.bf16.mxu0 0
        %4838 = vmatpush2.bf16.msra.mxu0 %v4782
        %4839 = vmatprep.subr.bf16.mxu0 0
        %4840 = vmatpush2.bf16.msra.mxu0 %v4781
        %4841 = vmatprep.subr.bf16.mxu0 0
        %4842 = vmatpush2.bf16.msra.mxu0 %v4780
        %4843 = vmatprep.subr.bf16.mxu0 0
        %4844 = vmatpush2.bf16.msra.mxu0 %v4779
        %4845 = vmatprep.subr.bf16.mxu0 0
        %4846 = vmatpush2.bf16.msra.mxu0 %v4778
        %4847 = vmatprep.subr.bf16.mxu0 0
        %4848 = vmatpush2.bf16.msra.mxu0 %v4777
        %4849 = vmatprep.mubr.bf16.mxu0 %v4578
        %4850 = vmatmul.mubr.bf16.gmra.mxu0 %v4577
        %v4851 = vpop.f32.mrf.mxu0
        %v4852 = vadd.f32 0.0, %v4851
        %v4853 = vpop.f32.mrf.mxu0
        %v4854 = vpop.f32.mrf.mxu0
        %v4855 = vadd.f32 0.0, %v4854
        %v4856 = vpop.f32.mrf.mxu0
        %4857 = vmatprep.mubr.bf16.mxu0 %v4581
        %4858 = vmatmul.mubr.bf16.gmra.mxu0 %v4580
        %v4859 = vpop.f32.mrf.mxu0
        %v4860 = vadd.f32 0.0, %v4859
        %v4861 = vpop.f32.mrf.mxu0
        %v4862 = vpop.f32.mrf.mxu0
        %v4863 = vadd.f32 0.0, %v4862
        %v4864 = vpop.f32.mrf.mxu0
        %4865 = vmatprep.mubr.bf16.mxu0 %v4584
        %4866 = vmatmul.mubr.bf16.gmra.mxu0 %v4583
        %v4867 = vpop.f32.mrf.mxu0
        %v4868 = vadd.f32 0.0, %v4867
        %v4869 = vpop.f32.mrf.mxu0
        %v4870 = vpop.f32.mrf.mxu0
        %v4871 = vadd.f32 0.0, %v4870
        %v4872 = vpop.f32.mrf.mxu0
        %4873 = vmatprep.mubr.bf16.mxu0 %v4587
        %4874 = vmatmul.mubr.bf16.gmra.mxu0 %v4586
        %v4875 = vpop.f32.mrf.mxu0
        %v4876 = vadd.f32 0.0, %v4875
        %v4877 = vpop.f32.mrf.mxu0
        %v4878 = vpop.f32.mrf.mxu0
        %v4879 = vadd.f32 0.0, %v4878
        %v4880 = vpop.f32.mrf.mxu0
        %4881 = vmatprep.mubr.bf16.mxu0 %v4590
        %4882 = vmatmul.mubr.bf16.gmra.mxu0 %v4589
        %v4883 = vpop.f32.mrf.mxu0
        %v4884 = vadd.f32 0.0, %v4883
        %v4885 = vpop.f32.mrf.mxu0
        %v4886 = vpop.f32.mrf.mxu0
        %v4887 = vadd.f32 0.0, %v4886
        %v4888 = vpop.f32.mrf.mxu0
        %4889 = vmatprep.mubr.bf16.mxu0 %v4593
        %4890 = vmatmul.mubr.bf16.gmra.mxu0 %v4592
        %v4891 = vpop.f32.mrf.mxu0
        %v4892 = vadd.f32 0.0, %v4891
        %v4893 = vpop.f32.mrf.mxu0
        %v4894 = vpop.f32.mrf.mxu0
        %v4895 = vadd.f32 0.0, %v4894
        %v4896 = vpop.f32.mrf.mxu0
        %4897 = vmatprep.mubr.bf16.mxu0 %v4596
        %4898 = vmatmul.mubr.bf16.gmra.mxu0 %v4595
        %v4899 = vpop.f32.mrf.mxu0
        %v4900 = vadd.f32 0.0, %v4899
        %v4901 = vpop.f32.mrf.mxu0
        %v4902 = vpop.f32.mrf.mxu0
        %v4903 = vadd.f32 0.0, %v4902
        %v4904 = vpop.f32.mrf.mxu0
        %4905 = vmatprep.mubr.bf16.mxu0 %v4599
        %4906 = vmatmul.mubr.bf16.gmra.mxu0 %v4598
        %v4907 = vpop.f32.mrf.mxu0
        %v4908 = vadd.f32 0.0, %v4907
        %v4909 = vpop.f32.mrf.mxu0
        %v4910 = vpop.f32.mrf.mxu0
        %v4911 = vadd.f32 0.0, %v4910
        %v4912 = vpop.f32.mrf.mxu0
        %4913 = vmatprep.mubr.bf16.mxu0 %v4602
        %4914 = vmatmul.mubr.bf16.gmra.mxu0 %v4601
        %v4915 = vpop.f32.mrf.mxu0
        %v4916 = vadd.f32 0.0, %v4915
        %v4917 = vpop.f32.mrf.mxu0
        %v4918 = vpop.f32.mrf.mxu0
        %v4919 = vadd.f32 0.0, %v4918
        %v4920 = vpop.f32.mrf.mxu0
        %4921 = vmatprep.mubr.bf16.mxu0 %v4605
        %4922 = vmatmul.mubr.bf16.gmra.mxu0 %v4604
        %v4923 = vpop.f32.mrf.mxu0
        %v4924 = vadd.f32 0.0, %v4923
        %v4925 = vpop.f32.mrf.mxu0
        %v4926 = vpop.f32.mrf.mxu0
        %v4927 = vadd.f32 0.0, %v4926
        %v4928 = vpop.f32.mrf.mxu0
        %4929 = vmatprep.mubr.bf16.mxu0 %v4608
        %4930 = vmatmul.mubr.bf16.gmra.mxu0 %v4607
        %v4931 = vpop.f32.mrf.mxu0
        %v4932 = vadd.f32 0.0, %v4931
        %v4933 = vpop.f32.mrf.mxu0
        %v4934 = vpop.f32.mrf.mxu0
        %v4935 = vadd.f32 0.0, %v4934
        %v4936 = vpop.f32.mrf.mxu0
        %4937 = vmatprep.mubr.bf16.mxu0 %v4611
        %4938 = vmatmul.mubr.bf16.gmra.mxu0 %v4610
        %v4939 = vpop.f32.mrf.mxu0
        %v4940 = vadd.f32 0.0, %v4939
        %v4941 = vpop.f32.mrf.mxu0
        %v4942 = vpop.f32.mrf.mxu0
        %v4943 = vadd.f32 0.0, %v4942
        %v4944 = vpop.f32.mrf.mxu0
        %4945 = vmatprep.mubr.bf16.mxu0 %v4614
        %4946 = vmatmul.mubr.bf16.gmra.mxu0 %v4613
        %v4947 = vpop.f32.mrf.mxu0
        %v4948 = vadd.f32 0.0, %v4947
        %v4949 = vpop.f32.mrf.mxu0
        %v4950 = vpop.f32.mrf.mxu0
        %v4951 = vadd.f32 0.0, %v4950
        %v4952 = vpop.f32.mrf.mxu0
        %4953 = vmatprep.mubr.bf16.mxu0 %v4617
        %4954 = vmatmul.mubr.bf16.gmra.mxu0 %v4616
        %v4955 = vpop.f32.mrf.mxu0
        %v4956 = vadd.f32 0.0, %v4955
        %v4957 = vpop.f32.mrf.mxu0
        %v4958 = vpop.f32.mrf.mxu0
        %v4959 = vadd.f32 0.0, %v4958
        %v4960 = vpop.f32.mrf.mxu0
        %4961 = vmatprep.mubr.bf16.mxu0 %v4620
        %4962 = vmatmul.mubr.bf16.gmra.mxu0 %v4619
        %v4963 = vpop.f32.mrf.mxu0
        %v4964 = vadd.f32 0.0, %v4963
        %v4965 = vpop.f32.mrf.mxu0
        %v4966 = vpop.f32.mrf.mxu0
        %v4967 = vadd.f32 0.0, %v4966
        %v4968 = vpop.f32.mrf.mxu0
        %4969 = vmatprep.mubr.bf16.mxu0 %v4623
        %4970 = vmatmul.mubr.bf16.gmra.mxu0 %v4622
        %v4971 = vpop.f32.mrf.mxu0
        %v4972 = vadd.f32 0.0, %v4971
        %v4973 = vpop.f32.mrf.mxu0
        %v4974 = vpop.f32.mrf.mxu0
        %v4975 = vadd.f32 0.0, %v4974
        %v4976 = vpop.f32.mrf.mxu0
        %4977 = vdwg.mxu0
        %4978 = vmatprep.subr.bf16.mxu0 0
        %4979 = vmatpush1.bf16.msra.mxu0 %v4792
        %4980 = vmatprep.subr.bf16.mxu0 0
        %4981 = vmatpush1.bf16.msra.mxu0 %v4791
        %4982 = vmatprep.subr.bf16.mxu0 0
        %4983 = vmatpush1.bf16.msra.mxu0 %v4790
        %4984 = vmatprep.subr.bf16.mxu0 0
        %4985 = vmatpush1.bf16.msra.mxu0 %v4789
        %4986 = vmatprep.subr.bf16.mxu0 0
        %4987 = vmatpush1.bf16.msra.mxu0 %v4788
        %4988 = vmatprep.subr.bf16.mxu0 0
        %4989 = vmatpush1.bf16.msra.mxu0 %v4787
        %4990 = vmatprep.subr.bf16.mxu0 0
        %4991 = vmatpush1.bf16.msra.mxu0 %v4786
        %4992 = vmatprep.subr.bf16.mxu0 0
        %4993 = vmatpush1.bf16.msra.mxu0 %v4785
        %4994 = vmatprep.subr.bf16.mxu0 0
        %4995 = vmatpush2.bf16.msra.mxu0 0
        %4996 = vmatprep.subr.bf16.mxu0 0
        %4997 = vmatpush2.bf16.msra.mxu0 0
        %4998 = vmatprep.subr.bf16.mxu0 0
        %4999 = vmatpush2.bf16.msra.mxu0 0
        %5000 = vmatprep.subr.bf16.mxu0 0
        %5001 = vmatpush2.bf16.msra.mxu0 0
        %5002 = vmatprep.subr.bf16.mxu0 0
        %5003 = vmatpush2.bf16.msra.mxu0 0
        %5004 = vmatprep.subr.bf16.mxu0 0
        %5005 = vmatpush2.bf16.msra.mxu0 0
        %5006 = vmatprep.subr.bf16.mxu0 0
        %5007 = vmatpush2.bf16.msra.mxu0 0
        %5008 = vmatprep.subr.bf16.mxu0 0
        %5009 = vmatpush2.bf16.msra.mxu0 0
        %5010 = vmatprep.mubr.bf16.mxu0 0
        %5011 = vmatmul.mubr.bf16.gmra.mxu0 %v4579
        %v5012 = vpop.f32.mrf.mxu0
        %v5013 = vadd.f32 %v4852, %v5012
        %v5014 = vpop.f32.mrf.mxu0
        %v5015 = vpop.f32.mrf.mxu0
        %v5016 = vadd.f32 %v4855, %v5015
        %v5017 = vpop.f32.mrf.mxu0
        %5018 = vmatprep.mubr.bf16.mxu0 0
        %5019 = vmatmul.mubr.bf16.gmra.mxu0 %v4582
        %v5020 = vpop.f32.mrf.mxu0
        %v5021 = vadd.f32 %v4860, %v5020
        %v5022 = vpop.f32.mrf.mxu0
        %v5023 = vpop.f32.mrf.mxu0
        %v5024 = vadd.f32 %v4863, %v5023
        %v5025 = vpop.f32.mrf.mxu0
        %5026 = vmatprep.mubr.bf16.mxu0 0
        %5027 = vmatmul.mubr.bf16.gmra.mxu0 %v4585
        %v5028 = vpop.f32.mrf.mxu0
        %v5029 = vadd.f32 %v4868, %v5028
        %v5030 = vpop.f32.mrf.mxu0
        %v5031 = vpop.f32.mrf.mxu0
        %v5032 = vadd.f32 %v4871, %v5031
        %v5033 = vpop.f32.mrf.mxu0
        %5034 = vmatprep.mubr.bf16.mxu0 0
        %5035 = vmatmul.mubr.bf16.gmra.mxu0 %v4588
        %v5036 = vpop.f32.mrf.mxu0
        %v5037 = vadd.f32 %v4876, %v5036
        %v5038 = vpop.f32.mrf.mxu0
        %v5039 = vpop.f32.mrf.mxu0
        %v5040 = vadd.f32 %v4879, %v5039
        %v5041 = vpop.f32.mrf.mxu0
        %5042 = vmatprep.mubr.bf16.mxu0 0
        %5043 = vmatmul.mubr.bf16.gmra.mxu0 %v4591
        %v5044 = vpop.f32.mrf.mxu0
        %v5045 = vadd.f32 %v4884, %v5044
        %v5046 = vpop.f32.mrf.mxu0
        %v5047 = vpop.f32.mrf.mxu0
        %v5048 = vadd.f32 %v4887, %v5047
        %v5049 = vpop.f32.mrf.mxu0
        %5050 = vmatprep.mubr.bf16.mxu0 0
        %5051 = vmatmul.mubr.bf16.gmra.mxu0 %v4594
        %v5052 = vpop.f32.mrf.mxu0
        %v5053 = vadd.f32 %v4892, %v5052
        %v5054 = vpop.f32.mrf.mxu0
        %v5055 = vpop.f32.mrf.mxu0
        %v5056 = vadd.f32 %v4895, %v5055
        %v5057 = vpop.f32.mrf.mxu0
        %5058 = vmatprep.mubr.bf16.mxu0 0
        %5059 = vmatmul.mubr.bf16.gmra.mxu0 %v4597
        %v5060 = vpop.f32.mrf.mxu0
        %v5061 = vadd.f32 %v4900, %v5060
        %v5062 = vpop.f32.mrf.mxu0
        %v5063 = vpop.f32.mrf.mxu0
        %v5064 = vadd.f32 %v4903, %v5063
        %v5065 = vpop.f32.mrf.mxu0
        %5066 = vmatprep.mubr.bf16.mxu0 0
        %5067 = vmatmul.mubr.bf16.gmra.mxu0 %v4600
        %v5068 = vpop.f32.mrf.mxu0
        %v5069 = vadd.f32 %v4908, %v5068
        %v5070 = vpop.f32.mrf.mxu0
        %v5071 = vpop.f32.mrf.mxu0
        %v5072 = vadd.f32 %v4911, %v5071
        %v5073 = vpop.f32.mrf.mxu0
        %5074 = vmatprep.mubr.bf16.mxu0 0
        %5075 = vmatmul.mubr.bf16.gmra.mxu0 %v4603
        %v5076 = vpop.f32.mrf.mxu0
        %v5077 = vadd.f32 %v4916, %v5076
        %v5078 = vpop.f32.mrf.mxu0
        %v5079 = vpop.f32.mrf.mxu0
        %v5080 = vadd.f32 %v4919, %v5079
        %v5081 = vpop.f32.mrf.mxu0
        %5082 = vmatprep.mubr.bf16.mxu0 0
        %5083 = vmatmul.mubr.bf16.gmra.mxu0 %v4606
        %v5084 = vpop.f32.mrf.mxu0
        %v5085 = vadd.f32 %v4924, %v5084
        %v5086 = vpop.f32.mrf.mxu0
        %v5087 = vpop.f32.mrf.mxu0
        %v5088 = vadd.f32 %v4927, %v5087
        %v5089 = vpop.f32.mrf.mxu0
        %5090 = vmatprep.mubr.bf16.mxu0 0
        %5091 = vmatmul.mubr.bf16.gmra.mxu0 %v4609
        %v5092 = vpop.f32.mrf.mxu0
        %v5093 = vadd.f32 %v4932, %v5092
        %v5094 = vpop.f32.mrf.mxu0
        %v5095 = vpop.f32.mrf.mxu0
        %v5096 = vadd.f32 %v4935, %v5095
        %v5097 = vpop.f32.mrf.mxu0
        %5098 = vmatprep.mubr.bf16.mxu0 0
        %5099 = vmatmul.mubr.bf16.gmra.mxu0 %v4612
        %v5100 = vpop.f32.mrf.mxu0
        %v5101 = vadd.f32 %v4940, %v5100
        %v5102 = vpop.f32.mrf.mxu0
        %v5103 = vpop.f32.mrf.mxu0
        %v5104 = vadd.f32 %v4943, %v5103
        %v5105 = vpop.f32.mrf.mxu0
        %5106 = vmatprep.mubr.bf16.mxu0 0
        %5107 = vmatmul.mubr.bf16.gmra.mxu0 %v4615
        %v5108 = vpop.f32.mrf.mxu0
        %v5109 = vadd.f32 %v4948, %v5108
        %v5110 = vpop.f32.mrf.mxu0
        %v5111 = vpop.f32.mrf.mxu0
        %v5112 = vadd.f32 %v4951, %v5111
        %v5113 = vpop.f32.mrf.mxu0
        %5114 = vmatprep.mubr.bf16.mxu0 0
        %5115 = vmatmul.mubr.bf16.gmra.mxu0 %v4618
        %v5116 = vpop.f32.mrf.mxu0
        %v5117 = vadd.f32 %v4956, %v5116
        %v5118 = vpop.f32.mrf.mxu0
        %v5119 = vpop.f32.mrf.mxu0
        %v5120 = vadd.f32 %v4959, %v5119
        %v5121 = vpop.f32.mrf.mxu0
        %5122 = vmatprep.mubr.bf16.mxu0 0
        %5123 = vmatmul.mubr.bf16.gmra.mxu0 %v4621
        %v5124 = vpop.f32.mrf.mxu0
        %v5125 = vadd.f32 %v4964, %v5124
        %v5126 = vpop.f32.mrf.mxu0
        %v5127 = vpop.f32.mrf.mxu0
        %v5128 = vadd.f32 %v4967, %v5127
        %v5129 = vpop.f32.mrf.mxu0
        %5130 = vmatprep.mubr.bf16.mxu0 0
        %5131 = vmatmul.mubr.bf16.gmra.mxu0 %v4624
        %v5132 = vpop.f32.mrf.mxu0
        %v5133 = vadd.f32 %v4972, %v5132
        %v5134 = vpop.f32.mrf.mxu0
        %v5135 = vpop.f32.mrf.mxu0
        %v5136 = vadd.f32 %v4975, %v5135
        %v5137 = vpop.f32.mrf.mxu0
        %5138 = vdwg.mxu0
        %v5139 = vadd.f32 %v4303, %v5013
        %v5140 = vadd.f32 %v4303, %v5016
        %v5141 = vadd.f32 %v4303, %v5021
        %v5142 = vadd.f32 %v4303, %v5024
        %v5143 = vadd.f32 %v4303, %v5029
        %v5144 = vadd.f32 %v4303, %v5032
        %v5145 = vadd.f32 %v4303, %v5037
        %v5146 = vadd.f32 %v4303, %v5040
        %v5147 = vadd.f32 %v4303, %v5045
        %v5148 = vadd.f32 %v4303, %v5048
        %v5149 = vadd.f32 %v4303, %v5053
        %v5150 = vadd.f32 %v4303, %v5056
        %v5151 = vadd.f32 %v4303, %v5061
        %v5152 = vadd.f32 %v4303, %v5064
        %v5153 = vadd.f32 %v4303, %v5069
        %v5154 = vadd.f32 %v4303, %v5072
        %v5155 = vadd.f32 %v4303, %v5077
        %v5156 = vadd.f32 %v4303, %v5080
        %v5157 = vadd.f32 %v4303, %v5085
        %v5158 = vadd.f32 %v4303, %v5088
        %v5159 = vadd.f32 %v4303, %v5093
        %v5160 = vadd.f32 %v4303, %v5096
        %v5161 = vadd.f32 %v4303, %v5101
        %v5162 = vadd.f32 %v4303, %v5104
        %v5163 = vadd.f32 %v4303, %v5109
        %v5164 = vadd.f32 %v4303, %v5112
        %v5165 = vadd.f32 %v4303, %v5117
        %v5166 = vadd.f32 %v4303, %v5120
        %v5167 = vadd.f32 %v4303, %v5125
        %v5168 = vadd.f32 %v4303, %v5128
        %v5169 = vadd.f32 %v4303, %v5133
        %v5170 = vadd.f32 %v4303, %v5136
        %v5171 = vld [vmem:[%s3763] sm:$0xff]
        %v5172 = vld [vmem:[%s3763 + $0x8] sm:$0xf]
        %v5173 = vld [vmem:[%s3763 + $0xc] sm:$0xff]
        %v5174 = vld [vmem:[%s3763 + $0x14] sm:$0xf]
        %v5175 = vld [vmem:[%s3763 + $0x18] sm:$0xff]
        %v5176 = vld [vmem:[%s3763 + $0x20] sm:$0xf]
        %v5177 = vld [vmem:[%s3763 + $0x24] sm:$0xff]
        %v5178 = vld [vmem:[%s3763 + $0x2c] sm:$0xf]
        %v5179 = vld [vmem:[%s3763 + $0x30] sm:$0xff]
        %v5180 = vld [vmem:[%s3763 + $0x38] sm:$0xf]
        %v5181 = vld [vmem:[%s3763 + $0x3c] sm:$0xff]
        %v5182 = vld [vmem:[%s3763 + $0x44] sm:$0xf]
        %v5183 = vld [vmem:[%s3763 + $0x48] sm:$0xff]
        %v5184 = vld [vmem:[%s3763 + $0x50] sm:$0xf]
        %v5185 = vld [vmem:[%s3763 + $0x54] sm:$0xff]
        %v5186 = vld [vmem:[%s3763 + $0x5c] sm:$0xf]
        %v5187 = vld [vmem:[%s3763 + $0x60] sm:$0xff]
        %v5188 = vld [vmem:[%s3763 + $0x68] sm:$0xf]
        %v5189 = vld [vmem:[%s3763 + $0x6c] sm:$0xff]
        %v5190 = vld [vmem:[%s3763 + $0x74] sm:$0xf]
        %v5191 = vld [vmem:[%s3763 + $0x78] sm:$0xff]
        %v5192 = vld [vmem:[%s3763 + $0x80] sm:$0xf]
        %v5193 = vld [vmem:[%s3763 + $0x84] sm:$0xff]
        %v5194 = vld [vmem:[%s3763 + $0x8c] sm:$0xf]
        %v5195 = vld [vmem:[%s3763 + $0x90] sm:$0xff]
        %v5196 = vld [vmem:[%s3763 + $0x98] sm:$0xf]
        %v5197 = vld [vmem:[%s3763 + $0x9c] sm:$0xff]
        %v5198 = vld [vmem:[%s3763 + $0xa4] sm:$0xf]
        %v5199 = vld [vmem:[%s3763 + $0xa8] sm:$0xff]
        %v5200 = vld [vmem:[%s3763 + $0xb0] sm:$0xf]
        %v5201 = vld [vmem:[%s3763 + $0xb4] sm:$0xff]
        %v5202 = vld [vmem:[%s3763 + $0xbc] sm:$0xf]
        %v5203 = vld [vmem:[%s3763 + $0xc0] sm:$0xff]
        %v5204 = vld [vmem:[%s3763 + $0xc8] sm:$0xf]
        %v5205 = vld [vmem:[%s3763 + $0xcc] sm:$0xff]
        %v5206 = vld [vmem:[%s3763 + $0xd4] sm:$0xf]
        %v5207 = vld [vmem:[%s3763 + $0xd8] sm:$0xff]
        %v5208 = vld [vmem:[%s3763 + $0xe0] sm:$0xf]
        %v5209 = vld [vmem:[%s3763 + $0xe4] sm:$0xff]
        %v5210 = vld [vmem:[%s3763 + $0xec] sm:$0xf]
        %v5211 = vld [vmem:[%s3763 + $0xf0] sm:$0xff]
        %v5212 = vld [vmem:[%s3763 + $0xf8] sm:$0xf]
        %v5213 = vld [vmem:[%s3763 + $0xfc] sm:$0xff]
        %v5214 = vld [vmem:[%s3763 + $0x104] sm:$0xf]
        %v5215 = vld [vmem:[%s3763 + $0x108] sm:$0xff]
        %v5216 = vld [vmem:[%s3763 + $0x110] sm:$0xf]
        %v5217 = vld [vmem:[%s3763 + $0x114] sm:$0xff]
        %v5218 = vld [vmem:[%s3763 + $0x11c] sm:$0xf]
        %v5219 = vld [vmem:[%s3763 + $0x120] sm:$0xff]
        %v5220 = vld [vmem:[%s3763 + $0x128] sm:$0xf]
        %v5221 = vld [vmem:[%s3763 + $0x12c] sm:$0xff]
        %v5222 = vld [vmem:[%s3763 + $0x134] sm:$0xf]
        %v5223 = vld [vmem:[%s3763 + $0x138] sm:$0xff]
        %v5224 = vld [vmem:[%s3763 + $0x140] sm:$0xf]
        %v5225 = vld [vmem:[%s3763 + $0x144] sm:$0xff]
        %v5226 = vld [vmem:[%s3763 + $0x14c] sm:$0xf]
        %v5227 = vld [vmem:[%s3763 + $0x150] sm:$0xff]
        %v5228 = vld [vmem:[%s3763 + $0x158] sm:$0xf]
        %v5229 = vld [vmem:[%s3763 + $0x15c] sm:$0xff]
        %v5230 = vld [vmem:[%s3763 + $0x164] sm:$0xf]
        %v5231 = vld [vmem:[%s3763 + $0x168] sm:$0xff]
        %v5232 = vld [vmem:[%s3763 + $0x170] sm:$0xf]
        %v5233 = vld [vmem:[%s3763 + $0x174] sm:$0xff]
        %v5234 = vld [vmem:[%s3763 + $0x17c] sm:$0xf]
        %s5235 = scalar_lea.vmem [#allocation9], 192
        %v5236 = vld [vmem:[%s5235] sm:$0xf]
        %v5237 = vld [vmem:[%s5235 + $0x4] sm:$0xf]
        %v5238 = vld [vmem:[%s5235 + $0x8] sm:$0xf]
        %v5239 = vld [vmem:[%s5235 + $0xc] sm:$0xf]
        %v5240 = vld [vmem:[%s5235 + $0x10] sm:$0xf]
        %v5241 = vld [vmem:[%s5235 + $0x14] sm:$0xf]
        %v5242 = vld [vmem:[%s5235 + $0x18] sm:$0xf]
        %v5243 = vld [vmem:[%s5235 + $0x1c] sm:$0xf]
        %v5244 = vld [vmem:[%s5235 + $0x20] sm:$0xf]
        %v5245 = vld [vmem:[%s5235 + $0x24] sm:$0xf]
        %v5246 = vld [vmem:[%s5235 + $0x28] sm:$0xf]
        %v5247 = vld [vmem:[%s5235 + $0x2c] sm:$0xf]
        %v5248 = vld [vmem:[%s5235 + $0x30] sm:$0xf]
        %v5249 = vld [vmem:[%s5235 + $0x34] sm:$0xf]
        %v5250 = vld [vmem:[%s5235 + $0x38] sm:$0xf]
        %v5251 = vld [vmem:[%s5235 + $0x3c] sm:$0xf]
        %v5252 = vld [vmem:[%s5235 + $0x40] sm:$0xf]
        %v5253 = vld [vmem:[%s5235 + $0x44] sm:$0xf]
        %v5254 = vld [vmem:[%s5235 + $0x48] sm:$0xf]
        %v5255 = vld [vmem:[%s5235 + $0x4c] sm:$0xf]
        %v5256 = vld [vmem:[%s5235 + $0x50] sm:$0xf]
        %v5257 = vld [vmem:[%s5235 + $0x54] sm:$0xf]
        %v5258 = vld [vmem:[%s5235 + $0x58] sm:$0xf]
        %v5259 = vld [vmem:[%s5235 + $0x5c] sm:$0xf]
        %v5260 = vld [vmem:[%s5235 + $0x60] sm:$0xf]
        %v5261 = vld [vmem:[%s5235 + $0x64] sm:$0xf]
        %v5262 = vld [vmem:[%s5235 + $0x68] sm:$0xf]
        %v5263 = vld [vmem:[%s5235 + $0x6c] sm:$0xf]
        %v5264 = vld [vmem:[%s5235 + $0x70] sm:$0xf]
        %v5265 = vld [vmem:[%s5235 + $0x74] sm:$0xf]
        %v5266 = vld [vmem:[%s5235 + $0x78] sm:$0xf]
        %v5267 = vld [vmem:[%s5235 + $0x7c] sm:$0xf]
        %v5268 = vld [vmem:[%s5235 + $0x80] sm:$0xf]
        %v5269 = vld [vmem:[%s5235 + $0x84] sm:$0xf]
        %v5270 = vld [vmem:[%s5235 + $0x88] sm:$0xf]
        %v5271 = vld [vmem:[%s5235 + $0x8c] sm:$0xf]
        %v5272 = vld [vmem:[%s5235 + $0x90] sm:$0xf]
        %v5273 = vld [vmem:[%s5235 + $0x94] sm:$0xf]
        %v5274 = vld [vmem:[%s5235 + $0x98] sm:$0xf]
        %v5275 = vld [vmem:[%s5235 + $0x9c] sm:$0xf]
        %v5276 = vld [vmem:[%s5235 + $0xa0] sm:$0xf]
        %v5277 = vld [vmem:[%s5235 + $0xa4] sm:$0xf]
        %v5278 = vld [vmem:[%s5235 + $0xa8] sm:$0xf]
        %v5279 = vld [vmem:[%s5235 + $0xac] sm:$0xf]
        %v5280 = vld [vmem:[%s5235 + $0xb0] sm:$0xf]
        %v5281 = vld [vmem:[%s5235 + $0xb4] sm:$0xf]
        %v5282 = vld [vmem:[%s5235 + $0xb8] sm:$0xf]
        %v5283 = vld [vmem:[%s5235 + $0xbc] sm:$0xf]
        %v5348 = vunpack.c.l.b16 %v5171
        %v5349 = vunpack.c.h.b16 %v5171
        %v5350 = vunpack.c.l.b16 %v5172
        %v5351 = vunpack.c.l.b16 %v5173
        %v5352 = vunpack.c.h.b16 %v5173
        %v5353 = vunpack.c.l.b16 %v5174
        %v5354 = vunpack.c.l.b16 %v5175
        %v5355 = vunpack.c.h.b16 %v5175
        %v5356 = vunpack.c.l.b16 %v5176
        %v5357 = vunpack.c.l.b16 %v5177
        %v5358 = vunpack.c.h.b16 %v5177
        %v5359 = vunpack.c.l.b16 %v5178
        %v5360 = vunpack.c.l.b16 %v5179
        %v5361 = vunpack.c.h.b16 %v5179
        %v5362 = vunpack.c.l.b16 %v5180
        %v5363 = vunpack.c.l.b16 %v5181
        %v5364 = vunpack.c.h.b16 %v5181
        %v5365 = vunpack.c.l.b16 %v5182
        %v5366 = vunpack.c.l.b16 %v5183
        %v5367 = vunpack.c.h.b16 %v5183
        %v5368 = vunpack.c.l.b16 %v5184
        %v5369 = vunpack.c.l.b16 %v5185
        %v5370 = vunpack.c.h.b16 %v5185
        %v5371 = vunpack.c.l.b16 %v5186
        %v5372 = vunpack.c.l.b16 %v5187
        %v5373 = vunpack.c.h.b16 %v5187
        %v5374 = vunpack.c.l.b16 %v5188
        %v5375 = vunpack.c.l.b16 %v5189
        %v5376 = vunpack.c.h.b16 %v5189
        %v5377 = vunpack.c.l.b16 %v5190
        %v5378 = vunpack.c.l.b16 %v5191
        %v5379 = vunpack.c.h.b16 %v5191
        %v5380 = vunpack.c.l.b16 %v5192
        %v5381 = vunpack.c.l.b16 %v5193
        %v5382 = vunpack.c.h.b16 %v5193
        %v5383 = vunpack.c.l.b16 %v5194
        %v5384 = vunpack.c.l.b16 %v5195
        %v5385 = vunpack.c.h.b16 %v5195
        %v5386 = vunpack.c.l.b16 %v5196
        %v5387 = vunpack.c.l.b16 %v5197
        %v5388 = vunpack.c.h.b16 %v5197
        %v5389 = vunpack.c.l.b16 %v5198
        %v5390 = vunpack.c.l.b16 %v5199
        %v5391 = vunpack.c.h.b16 %v5199
        %v5392 = vunpack.c.l.b16 %v5200
        %v5393 = vunpack.c.l.b16 %v5201
        %v5394 = vunpack.c.h.b16 %v5201
        %v5395 = vunpack.c.l.b16 %v5202
        %v5396 = vunpack.c.l.b16 %v5203
        %v5397 = vunpack.c.h.b16 %v5203
        %v5398 = vunpack.c.l.b16 %v5204
        %v5399 = vunpack.c.l.b16 %v5205
        %v5400 = vunpack.c.h.b16 %v5205
        %v5401 = vunpack.c.l.b16 %v5206
        %v5402 = vunpack.c.l.b16 %v5207
        %v5403 = vunpack.c.h.b16 %v5207
        %v5404 = vunpack.c.l.b16 %v5208
        %v5405 = vunpack.c.l.b16 %v5209
        %v5406 = vunpack.c.h.b16 %v5209
        %v5407 = vunpack.c.l.b16 %v5210
        %v5408 = vunpack.c.l.b16 %v5211
        %v5409 = vunpack.c.h.b16 %v5211
        %v5410 = vunpack.c.l.b16 %v5212
        %v5411 = vunpack.c.l.b16 %v5213
        %v5412 = vunpack.c.h.b16 %v5213
        %v5413 = vunpack.c.l.b16 %v5214
        %v5414 = vunpack.c.l.b16 %v5215
        %v5415 = vunpack.c.h.b16 %v5215
        %v5416 = vunpack.c.l.b16 %v5216
        %v5417 = vunpack.c.l.b16 %v5217
        %v5418 = vunpack.c.h.b16 %v5217
        %v5419 = vunpack.c.l.b16 %v5218
        %v5420 = vunpack.c.l.b16 %v5219
        %v5421 = vunpack.c.h.b16 %v5219
        %v5422 = vunpack.c.l.b16 %v5220
        %v5423 = vunpack.c.l.b16 %v5221
        %v5424 = vunpack.c.h.b16 %v5221
        %v5425 = vunpack.c.l.b16 %v5222
        %v5426 = vunpack.c.l.b16 %v5223
        %v5427 = vunpack.c.h.b16 %v5223
        %v5428 = vunpack.c.l.b16 %v5224
        %v5429 = vunpack.c.l.b16 %v5225
        %v5430 = vunpack.c.h.b16 %v5225
        %v5431 = vunpack.c.l.b16 %v5226
        %v5432 = vunpack.c.l.b16 %v5227
        %v5433 = vunpack.c.h.b16 %v5227
        %v5434 = vunpack.c.l.b16 %v5228
        %v5435 = vunpack.c.l.b16 %v5229
        %v5436 = vunpack.c.h.b16 %v5229
        %v5437 = vunpack.c.l.b16 %v5230
        %v5438 = vunpack.c.l.b16 %v5231
        %v5439 = vunpack.c.h.b16 %v5231
        %v5440 = vunpack.c.l.b16 %v5232
        %v5441 = vunpack.c.l.b16 %v5233
        %v5442 = vunpack.c.h.b16 %v5233
        %v5443 = vunpack.c.l.b16 %v5234
        %v5444 = vpack.c.b16 %v5351, %v5348
        %v5445 = vpack.c.b16 %v5352, %v5349
        %v5446 = vpack.c.b16 %v5353, %v5350
        %v5447 = vpack.c.b16 %v5357, %v5354
        %v5448 = vpack.c.b16 %v5358, %v5355
        %v5449 = vpack.c.b16 %v5359, %v5356
        %v5450 = vpack.c.b16 %v5363, %v5360
        %v5451 = vpack.c.b16 %v5364, %v5361
        %v5452 = vpack.c.b16 %v5365, %v5362
        %v5453 = vpack.c.b16 %v5369, %v5366
        %v5454 = vpack.c.b16 %v5370, %v5367
        %v5455 = vpack.c.b16 %v5371, %v5368
        %v5456 = vpack.c.b16 %v5375, %v5372
        %v5457 = vpack.c.b16 %v5376, %v5373
        %v5458 = vpack.c.b16 %v5377, %v5374
        %v5459 = vpack.c.b16 %v5381, %v5378
        %v5460 = vpack.c.b16 %v5382, %v5379
        %v5461 = vpack.c.b16 %v5383, %v5380
        %v5462 = vpack.c.b16 %v5387, %v5384
        %v5463 = vpack.c.b16 %v5388, %v5385
        %v5464 = vpack.c.b16 %v5389, %v5386
        %v5465 = vpack.c.b16 %v5393, %v5390
        %v5466 = vpack.c.b16 %v5394, %v5391
        %v5467 = vpack.c.b16 %v5395, %v5392
        %v5468 = vpack.c.b16 %v5399, %v5396
        %v5469 = vpack.c.b16 %v5400, %v5397
        %v5470 = vpack.c.b16 %v5401, %v5398
        %v5471 = vpack.c.b16 %v5405, %v5402
        %v5472 = vpack.c.b16 %v5406, %v5403
        %v5473 = vpack.c.b16 %v5407, %v5404
        %v5474 = vpack.c.b16 %v5411, %v5408
        %v5475 = vpack.c.b16 %v5412, %v5409
        %v5476 = vpack.c.b16 %v5413, %v5410
        %v5477 = vpack.c.b16 %v5417, %v5414
        %v5478 = vpack.c.b16 %v5418, %v5415
        %v5479 = vpack.c.b16 %v5419, %v5416
        %v5480 = vpack.c.b16 %v5423, %v5420
        %v5481 = vpack.c.b16 %v5424, %v5421
        %v5482 = vpack.c.b16 %v5425, %v5422
        %v5483 = vpack.c.b16 %v5429, %v5426
        %v5484 = vpack.c.b16 %v5430, %v5427
        %v5485 = vpack.c.b16 %v5431, %v5428
        %v5486 = vpack.c.b16 %v5435, %v5432
        %v5487 = vpack.c.b16 %v5436, %v5433
        %v5488 = vpack.c.b16 %v5437, %v5434
        %v5489 = vpack.c.b16 %v5441, %v5438
        %v5490 = vpack.c.b16 %v5442, %v5439
        %v5491 = vpack.c.b16 %v5443, %v5440
        %v5588 = vunpack.c.l.b16 %v5236
        %v5589 = vunpack.c.l.b16 %v5237
        %v5590 = vunpack.c.l.b16 %v5238
        %v5591 = vunpack.c.l.b16 %v5239
        %v5592 = vunpack.c.l.b16 %v5240
        %v5593 = vunpack.c.l.b16 %v5241
        %v5594 = vunpack.c.l.b16 %v5242
        %v5595 = vunpack.c.l.b16 %v5243
        %v5596 = vunpack.c.l.b16 %v5244
        %v5597 = vunpack.c.l.b16 %v5245
        %v5598 = vunpack.c.l.b16 %v5246
        %v5599 = vunpack.c.l.b16 %v5247
        %v5600 = vunpack.c.l.b16 %v5248
        %v5601 = vunpack.c.l.b16 %v5249
        %v5602 = vunpack.c.l.b16 %v5250
        %v5603 = vunpack.c.l.b16 %v5251
        %v5604 = vunpack.c.l.b16 %v5252
        %v5605 = vunpack.c.l.b16 %v5253
        %v5606 = vunpack.c.l.b16 %v5254
        %v5607 = vunpack.c.l.b16 %v5255
        %v5608 = vunpack.c.l.b16 %v5256
        %v5609 = vunpack.c.l.b16 %v5257
        %v5610 = vunpack.c.l.b16 %v5258
        %v5611 = vunpack.c.l.b16 %v5259
        %v5612 = vunpack.c.l.b16 %v5260
        %v5613 = vunpack.c.l.b16 %v5261
        %v5614 = vunpack.c.l.b16 %v5262
        %v5615 = vunpack.c.l.b16 %v5263
        %v5616 = vunpack.c.l.b16 %v5264
        %v5617 = vunpack.c.l.b16 %v5265
        %v5618 = vunpack.c.l.b16 %v5266
        %v5619 = vunpack.c.l.b16 %v5267
        %v5620 = vunpack.c.l.b16 %v5268
        %v5621 = vunpack.c.l.b16 %v5269
        %v5622 = vunpack.c.l.b16 %v5270
        %v5623 = vunpack.c.l.b16 %v5271
        %v5624 = vunpack.c.l.b16 %v5272
        %v5625 = vunpack.c.l.b16 %v5273
        %v5626 = vunpack.c.l.b16 %v5274
        %v5627 = vunpack.c.l.b16 %v5275
        %v5628 = vunpack.c.l.b16 %v5276
        %v5629 = vunpack.c.l.b16 %v5277
        %v5630 = vunpack.c.l.b16 %v5278
        %v5631 = vunpack.c.l.b16 %v5279
        %v5632 = vunpack.c.l.b16 %v5280
        %v5633 = vunpack.c.l.b16 %v5281
        %v5634 = vunpack.c.l.b16 %v5282
        %v5635 = vunpack.c.l.b16 %v5283
        %v5636 = vpack.c.b16 %v5589, %v5588
        %v5637 = vpack.c.b16 %v5591, %v5590
        %v5638 = vpack.c.b16 %v5593, %v5592
        %v5639 = vpack.c.b16 %v5595, %v5594
        %v5640 = vpack.c.b16 %v5597, %v5596
        %v5641 = vpack.c.b16 %v5599, %v5598
        %v5642 = vpack.c.b16 %v5601, %v5600
        %v5643 = vpack.c.b16 %v5603, %v5602
        %v5644 = vpack.c.b16 %v5605, %v5604
        %v5645 = vpack.c.b16 %v5607, %v5606
        %v5646 = vpack.c.b16 %v5609, %v5608
        %v5647 = vpack.c.b16 %v5611, %v5610
        %v5648 = vpack.c.b16 %v5613, %v5612
        %v5649 = vpack.c.b16 %v5615, %v5614
        %v5650 = vpack.c.b16 %v5617, %v5616
        %v5651 = vpack.c.b16 %v5619, %v5618
        %v5652 = vpack.c.b16 %v5621, %v5620
        %v5653 = vpack.c.b16 %v5623, %v5622
        %v5654 = vpack.c.b16 %v5625, %v5624
        %v5655 = vpack.c.b16 %v5627, %v5626
        %v5656 = vpack.c.b16 %v5629, %v5628
        %v5657 = vpack.c.b16 %v5631, %v5630
        %v5658 = vpack.c.b16 %v5633, %v5632
        %v5659 = vpack.c.b16 %v5635, %v5634
        %5684 = vmatprep.subr.bf16.mxu0 0
        %5685 = vmatpush1.bf16.msra.mxu0 %v5643
        %5686 = vmatprep.subr.bf16.mxu0 0
        %5687 = vmatpush1.bf16.msra.mxu0 %v5642
        %5688 = vmatprep.subr.bf16.mxu0 0
        %5689 = vmatpush1.bf16.msra.mxu0 %v5641
        %5690 = vmatprep.subr.bf16.mxu0 0
        %5691 = vmatpush1.bf16.msra.mxu0 %v5640
        %5692 = vmatprep.subr.bf16.mxu0 0
        %5693 = vmatpush1.bf16.msra.mxu0 %v5639
        %5694 = vmatprep.subr.bf16.mxu0 0
        %5695 = vmatpush1.bf16.msra.mxu0 %v5638
        %5696 = vmatprep.subr.bf16.mxu0 0
        %5697 = vmatpush1.bf16.msra.mxu0 %v5637
        %5698 = vmatprep.subr.bf16.mxu0 0
        %5699 = vmatpush1.bf16.msra.mxu0 %v5636
        %5700 = vmatprep.subr.bf16.mxu0 0
        %5701 = vmatpush2.bf16.msra.mxu0 %v5651
        %5702 = vmatprep.subr.bf16.mxu0 0
        %5703 = vmatpush2.bf16.msra.mxu0 %v5650
        %5704 = vmatprep.subr.bf16.mxu0 0
        %5705 = vmatpush2.bf16.msra.mxu0 %v5649
        %5706 = vmatprep.subr.bf16.mxu0 0
        %5707 = vmatpush2.bf16.msra.mxu0 %v5648
        %5708 = vmatprep.subr.bf16.mxu0 0
        %5709 = vmatpush2.bf16.msra.mxu0 %v5647
        %5710 = vmatprep.subr.bf16.mxu0 0
        %5711 = vmatpush2.bf16.msra.mxu0 %v5646
        %5712 = vmatprep.subr.bf16.mxu0 0
        %5713 = vmatpush2.bf16.msra.mxu0 %v5645
        %5714 = vmatprep.subr.bf16.mxu0 0
        %5715 = vmatpush2.bf16.msra.mxu0 %v5644
        %5716 = vmatprep.mubr.bf16.mxu0 %v5445
        %5717 = vmatmul.mubr.bf16.gmra.mxu0 %v5444
        %v5718 = vpop.f32.mrf.mxu0
        %v5719 = vadd.f32 0.0, %v5718
        %v5720 = vpop.f32.mrf.mxu0
        %v5721 = vpop.f32.mrf.mxu0
        %v5722 = vadd.f32 0.0, %v5721
        %v5723 = vpop.f32.mrf.mxu0
        %5724 = vmatprep.mubr.bf16.mxu0 %v5448
        %5725 = vmatmul.mubr.bf16.gmra.mxu0 %v5447
        %v5726 = vpop.f32.mrf.mxu0
        %v5727 = vadd.f32 0.0, %v5726
        %v5728 = vpop.f32.mrf.mxu0
        %v5729 = vpop.f32.mrf.mxu0
        %v5730 = vadd.f32 0.0, %v5729
        %v5731 = vpop.f32.mrf.mxu0
        %5732 = vmatprep.mubr.bf16.mxu0 %v5451
        %5733 = vmatmul.mubr.bf16.gmra.mxu0 %v5450
        %v5734 = vpop.f32.mrf.mxu0
        %v5735 = vadd.f32 0.0, %v5734
        %v5736 = vpop.f32.mrf.mxu0
        %v5737 = vpop.f32.mrf.mxu0
        %v5738 = vadd.f32 0.0, %v5737
        %v5739 = vpop.f32.mrf.mxu0
        %5740 = vmatprep.mubr.bf16.mxu0 %v5454
        %5741 = vmatmul.mubr.bf16.gmra.mxu0 %v5453
        %v5742 = vpop.f32.mrf.mxu0
        %v5743 = vadd.f32 0.0, %v5742
        %v5744 = vpop.f32.mrf.mxu0
        %v5745 = vpop.f32.mrf.mxu0
        %v5746 = vadd.f32 0.0, %v5745
        %v5747 = vpop.f32.mrf.mxu0
        %5748 = vmatprep.mubr.bf16.mxu0 %v5457
        %5749 = vmatmul.mubr.bf16.gmra.mxu0 %v5456
        %v5750 = vpop.f32.mrf.mxu0
        %v5751 = vadd.f32 0.0, %v5750
        %v5752 = vpop.f32.mrf.mxu0
        %v5753 = vpop.f32.mrf.mxu0
        %v5754 = vadd.f32 0.0, %v5753
        %v5755 = vpop.f32.mrf.mxu0
        %5756 = vmatprep.mubr.bf16.mxu0 %v5460
        %5757 = vmatmul.mubr.bf16.gmra.mxu0 %v5459
        %v5758 = vpop.f32.mrf.mxu0
        %v5759 = vadd.f32 0.0, %v5758
        %v5760 = vpop.f32.mrf.mxu0
        %v5761 = vpop.f32.mrf.mxu0
        %v5762 = vadd.f32 0.0, %v5761
        %v5763 = vpop.f32.mrf.mxu0
        %5764 = vmatprep.mubr.bf16.mxu0 %v5463
        %5765 = vmatmul.mubr.bf16.gmra.mxu0 %v5462
        %v5766 = vpop.f32.mrf.mxu0
        %v5767 = vadd.f32 0.0, %v5766
        %v5768 = vpop.f32.mrf.mxu0
        %v5769 = vpop.f32.mrf.mxu0
        %v5770 = vadd.f32 0.0, %v5769
        %v5771 = vpop.f32.mrf.mxu0
        %5772 = vmatprep.mubr.bf16.mxu0 %v5466
        %5773 = vmatmul.mubr.bf16.gmra.mxu0 %v5465
        %v5774 = vpop.f32.mrf.mxu0
        %v5775 = vadd.f32 0.0, %v5774
        %v5776 = vpop.f32.mrf.mxu0
        %v5777 = vpop.f32.mrf.mxu0
        %v5778 = vadd.f32 0.0, %v5777
        %v5779 = vpop.f32.mrf.mxu0
        %5780 = vmatprep.mubr.bf16.mxu0 %v5469
        %5781 = vmatmul.mubr.bf16.gmra.mxu0 %v5468
        %v5782 = vpop.f32.mrf.mxu0
        %v5783 = vadd.f32 0.0, %v5782
        %v5784 = vpop.f32.mrf.mxu0
        %v5785 = vpop.f32.mrf.mxu0
        %v5786 = vadd.f32 0.0, %v5785
        %v5787 = vpop.f32.mrf.mxu0
        %5788 = vmatprep.mubr.bf16.mxu0 %v5472
        %5789 = vmatmul.mubr.bf16.gmra.mxu0 %v5471
        %v5790 = vpop.f32.mrf.mxu0
        %v5791 = vadd.f32 0.0, %v5790
        %v5792 = vpop.f32.mrf.mxu0
        %v5793 = vpop.f32.mrf.mxu0
        %v5794 = vadd.f32 0.0, %v5793
        %v5795 = vpop.f32.mrf.mxu0
        %5796 = vmatprep.mubr.bf16.mxu0 %v5475
        %5797 = vmatmul.mubr.bf16.gmra.mxu0 %v5474
        %v5798 = vpop.f32.mrf.mxu0
        %v5799 = vadd.f32 0.0, %v5798
        %v5800 = vpop.f32.mrf.mxu0
        %v5801 = vpop.f32.mrf.mxu0
        %v5802 = vadd.f32 0.0, %v5801
        %v5803 = vpop.f32.mrf.mxu0
        %5804 = vmatprep.mubr.bf16.mxu0 %v5478
        %5805 = vmatmul.mubr.bf16.gmra.mxu0 %v5477
        %v5806 = vpop.f32.mrf.mxu0
        %v5807 = vadd.f32 0.0, %v5806
        %v5808 = vpop.f32.mrf.mxu0
        %v5809 = vpop.f32.mrf.mxu0
        %v5810 = vadd.f32 0.0, %v5809
        %v5811 = vpop.f32.mrf.mxu0
        %5812 = vmatprep.mubr.bf16.mxu0 %v5481
        %5813 = vmatmul.mubr.bf16.gmra.mxu0 %v5480
        %v5814 = vpop.f32.mrf.mxu0
        %v5815 = vadd.f32 0.0, %v5814
        %v5816 = vpop.f32.mrf.mxu0
        %v5817 = vpop.f32.mrf.mxu0
        %v5818 = vadd.f32 0.0, %v5817
        %v5819 = vpop.f32.mrf.mxu0
        %5820 = vmatprep.mubr.bf16.mxu0 %v5484
        %5821 = vmatmul.mubr.bf16.gmra.mxu0 %v5483
        %v5822 = vpop.f32.mrf.mxu0
        %v5823 = vadd.f32 0.0, %v5822
        %v5824 = vpop.f32.mrf.mxu0
        %v5825 = vpop.f32.mrf.mxu0
        %v5826 = vadd.f32 0.0, %v5825
        %v5827 = vpop.f32.mrf.mxu0
        %5828 = vmatprep.mubr.bf16.mxu0 %v5487
        %5829 = vmatmul.mubr.bf16.gmra.mxu0 %v5486
        %v5830 = vpop.f32.mrf.mxu0
        %v5831 = vadd.f32 0.0, %v5830
        %v5832 = vpop.f32.mrf.mxu0
        %v5833 = vpop.f32.mrf.mxu0
        %v5834 = vadd.f32 0.0, %v5833
        %v5835 = vpop.f32.mrf.mxu0
        %5836 = vmatprep.mubr.bf16.mxu0 %v5490
        %5837 = vmatmul.mubr.bf16.gmra.mxu0 %v5489
        %v5838 = vpop.f32.mrf.mxu0
        %v5839 = vadd.f32 0.0, %v5838
        %v5840 = vpop.f32.mrf.mxu0
        %v5841 = vpop.f32.mrf.mxu0
        %v5842 = vadd.f32 0.0, %v5841
        %v5843 = vpop.f32.mrf.mxu0
        %5844 = vdwg.mxu0
        %5845 = vmatprep.subr.bf16.mxu0 0
        %5846 = vmatpush1.bf16.msra.mxu0 %v5659
        %5847 = vmatprep.subr.bf16.mxu0 0
        %5848 = vmatpush1.bf16.msra.mxu0 %v5658
        %5849 = vmatprep.subr.bf16.mxu0 0
        %5850 = vmatpush1.bf16.msra.mxu0 %v5657
        %5851 = vmatprep.subr.bf16.mxu0 0
        %5852 = vmatpush1.bf16.msra.mxu0 %v5656
        %5853 = vmatprep.subr.bf16.mxu0 0
        %5854 = vmatpush1.bf16.msra.mxu0 %v5655
        %5855 = vmatprep.subr.bf16.mxu0 0
        %5856 = vmatpush1.bf16.msra.mxu0 %v5654
        %5857 = vmatprep.subr.bf16.mxu0 0
        %5858 = vmatpush1.bf16.msra.mxu0 %v5653
        %5859 = vmatprep.subr.bf16.mxu0 0
        %5860 = vmatpush1.bf16.msra.mxu0 %v5652
        %5861 = vmatprep.subr.bf16.mxu0 0
        %5862 = vmatpush2.bf16.msra.mxu0 0
        %5863 = vmatprep.subr.bf16.mxu0 0
        %5864 = vmatpush2.bf16.msra.mxu0 0
        %5865 = vmatprep.subr.bf16.mxu0 0
        %5866 = vmatpush2.bf16.msra.mxu0 0
        %5867 = vmatprep.subr.bf16.mxu0 0
        %5868 = vmatpush2.bf16.msra.mxu0 0
        %5869 = vmatprep.subr.bf16.mxu0 0
        %5870 = vmatpush2.bf16.msra.mxu0 0
        %5871 = vmatprep.subr.bf16.mxu0 0
        %5872 = vmatpush2.bf16.msra.mxu0 0
        %5873 = vmatprep.subr.bf16.mxu0 0
        %5874 = vmatpush2.bf16.msra.mxu0 0
        %5875 = vmatprep.subr.bf16.mxu0 0
        %5876 = vmatpush2.bf16.msra.mxu0 0
        %5877 = vmatprep.mubr.bf16.mxu0 0
        %5878 = vmatmul.mubr.bf16.gmra.mxu0 %v5446
        %v5879 = vpop.f32.mrf.mxu0
        %v5880 = vadd.f32 %v5719, %v5879
        %v5881 = vpop.f32.mrf.mxu0
        %v5882 = vpop.f32.mrf.mxu0
        %v5883 = vadd.f32 %v5722, %v5882
        %v5884 = vpop.f32.mrf.mxu0
        %5885 = vmatprep.mubr.bf16.mxu0 0
        %5886 = vmatmul.mubr.bf16.gmra.mxu0 %v5449
        %v5887 = vpop.f32.mrf.mxu0
        %v5888 = vadd.f32 %v5727, %v5887
        %v5889 = vpop.f32.mrf.mxu0
        %v5890 = vpop.f32.mrf.mxu0
        %v5891 = vadd.f32 %v5730, %v5890
        %v5892 = vpop.f32.mrf.mxu0
        %5893 = vmatprep.mubr.bf16.mxu0 0
        %5894 = vmatmul.mubr.bf16.gmra.mxu0 %v5452
        %v5895 = vpop.f32.mrf.mxu0
        %v5896 = vadd.f32 %v5735, %v5895
        %v5897 = vpop.f32.mrf.mxu0
        %v5898 = vpop.f32.mrf.mxu0
        %v5899 = vadd.f32 %v5738, %v5898
        %v5900 = vpop.f32.mrf.mxu0
        %5901 = vmatprep.mubr.bf16.mxu0 0
        %5902 = vmatmul.mubr.bf16.gmra.mxu0 %v5455
        %v5903 = vpop.f32.mrf.mxu0
        %v5904 = vadd.f32 %v5743, %v5903
        %v5905 = vpop.f32.mrf.mxu0
        %v5906 = vpop.f32.mrf.mxu0
        %v5907 = vadd.f32 %v5746, %v5906
        %v5908 = vpop.f32.mrf.mxu0
        %5909 = vmatprep.mubr.bf16.mxu0 0
        %5910 = vmatmul.mubr.bf16.gmra.mxu0 %v5458
        %v5911 = vpop.f32.mrf.mxu0
        %v5912 = vadd.f32 %v5751, %v5911
        %v5913 = vpop.f32.mrf.mxu0
        %v5914 = vpop.f32.mrf.mxu0
        %v5915 = vadd.f32 %v5754, %v5914
        %v5916 = vpop.f32.mrf.mxu0
        %5917 = vmatprep.mubr.bf16.mxu0 0
        %5918 = vmatmul.mubr.bf16.gmra.mxu0 %v5461
        %v5919 = vpop.f32.mrf.mxu0
        %v5920 = vadd.f32 %v5759, %v5919
        %v5921 = vpop.f32.mrf.mxu0
        %v5922 = vpop.f32.mrf.mxu0
        %v5923 = vadd.f32 %v5762, %v5922
        %v5924 = vpop.f32.mrf.mxu0
        %5925 = vmatprep.mubr.bf16.mxu0 0
        %5926 = vmatmul.mubr.bf16.gmra.mxu0 %v5464
        %v5927 = vpop.f32.mrf.mxu0
        %v5928 = vadd.f32 %v5767, %v5927
        %v5929 = vpop.f32.mrf.mxu0
        %v5930 = vpop.f32.mrf.mxu0
        %v5931 = vadd.f32 %v5770, %v5930
        %v5932 = vpop.f32.mrf.mxu0
        %5933 = vmatprep.mubr.bf16.mxu0 0
        %5934 = vmatmul.mubr.bf16.gmra.mxu0 %v5467
        %v5935 = vpop.f32.mrf.mxu0
        %v5936 = vadd.f32 %v5775, %v5935
        %v5937 = vpop.f32.mrf.mxu0
        %v5938 = vpop.f32.mrf.mxu0
        %v5939 = vadd.f32 %v5778, %v5938
        %v5940 = vpop.f32.mrf.mxu0
        %5941 = vmatprep.mubr.bf16.mxu0 0
        %5942 = vmatmul.mubr.bf16.gmra.mxu0 %v5470
        %v5943 = vpop.f32.mrf.mxu0
        %v5944 = vadd.f32 %v5783, %v5943
        %v5945 = vpop.f32.mrf.mxu0
        %v5946 = vpop.f32.mrf.mxu0
        %v5947 = vadd.f32 %v5786, %v5946
        %v5948 = vpop.f32.mrf.mxu0
        %5949 = vmatprep.mubr.bf16.mxu0 0
        %5950 = vmatmul.mubr.bf16.gmra.mxu0 %v5473
        %v5951 = vpop.f32.mrf.mxu0
        %v5952 = vadd.f32 %v5791, %v5951
        %v5953 = vpop.f32.mrf.mxu0
        %v5954 = vpop.f32.mrf.mxu0
        %v5955 = vadd.f32 %v5794, %v5954
        %v5956 = vpop.f32.mrf.mxu0
        %5957 = vmatprep.mubr.bf16.mxu0 0
        %5958 = vmatmul.mubr.bf16.gmra.mxu0 %v5476
        %v5959 = vpop.f32.mrf.mxu0
        %v5960 = vadd.f32 %v5799, %v5959
        %v5961 = vpop.f32.mrf.mxu0
        %v5962 = vpop.f32.mrf.mxu0
        %v5963 = vadd.f32 %v5802, %v5962
        %v5964 = vpop.f32.mrf.mxu0
        %5965 = vmatprep.mubr.bf16.mxu0 0
        %5966 = vmatmul.mubr.bf16.gmra.mxu0 %v5479
        %v5967 = vpop.f32.mrf.mxu0
        %v5968 = vadd.f32 %v5807, %v5967
        %v5969 = vpop.f32.mrf.mxu0
        %v5970 = vpop.f32.mrf.mxu0
        %v5971 = vadd.f32 %v5810, %v5970
        %v5972 = vpop.f32.mrf.mxu0
        %5973 = vmatprep.mubr.bf16.mxu0 0
        %5974 = vmatmul.mubr.bf16.gmra.mxu0 %v5482
        %v5975 = vpop.f32.mrf.mxu0
        %v5976 = vadd.f32 %v5815, %v5975
        %v5977 = vpop.f32.mrf.mxu0
        %v5978 = vpop.f32.mrf.mxu0
        %v5979 = vadd.f32 %v5818, %v5978
        %v5980 = vpop.f32.mrf.mxu0
        %5981 = vmatprep.mubr.bf16.mxu0 0
        %5982 = vmatmul.mubr.bf16.gmra.mxu0 %v5485
        %v5983 = vpop.f32.mrf.mxu0
        %v5984 = vadd.f32 %v5823, %v5983
        %v5985 = vpop.f32.mrf.mxu0
        %v5986 = vpop.f32.mrf.mxu0
        %v5987 = vadd.f32 %v5826, %v5986
        %v5988 = vpop.f32.mrf.mxu0
        %5989 = vmatprep.mubr.bf16.mxu0 0
        %5990 = vmatmul.mubr.bf16.gmra.mxu0 %v5488
        %v5991 = vpop.f32.mrf.mxu0
        %v5992 = vadd.f32 %v5831, %v5991
        %v5993 = vpop.f32.mrf.mxu0
        %v5994 = vpop.f32.mrf.mxu0
        %v5995 = vadd.f32 %v5834, %v5994
        %v5996 = vpop.f32.mrf.mxu0
        %5997 = vmatprep.mubr.bf16.mxu0 0
        %5998 = vmatmul.mubr.bf16.gmra.mxu0 %v5491
        %v5999 = vpop.f32.mrf.mxu0
        %v6000 = vadd.f32 %v5839, %v5999
        %v6001 = vpop.f32.mrf.mxu0
        %v6002 = vpop.f32.mrf.mxu0
        %v6003 = vadd.f32 %v5842, %v6002
        %v6004 = vpop.f32.mrf.mxu0
        %6005 = vdwg.mxu0
        %v6006 = vadd.f32 %v5139, %v5880
        %v6007 = vadd.f32 %v5140, %v5883
        %v6008 = vadd.f32 %v5141, %v5888
        %v6009 = vadd.f32 %v5142, %v5891
        %v6010 = vadd.f32 %v5143, %v5896
        %v6011 = vadd.f32 %v5144, %v5899
        %v6012 = vadd.f32 %v5145, %v5904
        %v6013 = vadd.f32 %v5146, %v5907
        %v6014 = vadd.f32 %v5147, %v5912
        %v6015 = vadd.f32 %v5148, %v5915
        %v6016 = vadd.f32 %v5149, %v5920
        %v6017 = vadd.f32 %v5150, %v5923
        %v6018 = vadd.f32 %v5151, %v5928
        %v6019 = vadd.f32 %v5152, %v5931
        %v6020 = vadd.f32 %v5153, %v5936
        %v6021 = vadd.f32 %v5154, %v5939
        %v6022 = vadd.f32 %v5155, %v5944
        %v6023 = vadd.f32 %v5156, %v5947
        %v6024 = vadd.f32 %v5157, %v5952
        %v6025 = vadd.f32 %v5158, %v5955
        %v6026 = vadd.f32 %v5159, %v5960
        %v6027 = vadd.f32 %v5160, %v5963
        %v6028 = vadd.f32 %v5161, %v5968
        %v6029 = vadd.f32 %v5162, %v5971
        %v6030 = vadd.f32 %v5163, %v5976
        %v6031 = vadd.f32 %v5164, %v5979
        %v6032 = vadd.f32 %v5165, %v5984
        %v6033 = vadd.f32 %v5166, %v5987
        %v6034 = vadd.f32 %v5167, %v5992
        %v6035 = vadd.f32 %v5168, %v5995
        %v6036 = vadd.f32 %v5169, %v6000
        %v6037 = vadd.f32 %v5170, %v6003
        %s6038 = scalar_lea.vmem [#allocation3], 48
        %v6039 = vld [vmem:[%s6038] sm:$0xff]
        %v6040 = vld [vmem:[%s6038 + $0x8] sm:$0xf]
        %v6041 = vld [vmem:[%s6038 + $0xc] sm:$0xff]
        %v6042 = vld [vmem:[%s6038 + $0x14] sm:$0xf]
        %v6043 = vld [vmem:[%s6038 + $0x18] sm:$0xff]
        %v6044 = vld [vmem:[%s6038 + $0x20] sm:$0xf]
        %v6045 = vld [vmem:[%s6038 + $0x24] sm:$0xff]
        %v6046 = vld [vmem:[%s6038 + $0x2c] sm:$0xf]
        %v6047 = vld [vmem:[%s6038 + $0x30] sm:$0xff]
        %v6048 = vld [vmem:[%s6038 + $0x38] sm:$0xf]
        %v6049 = vld [vmem:[%s6038 + $0x3c] sm:$0xff]
        %v6050 = vld [vmem:[%s6038 + $0x44] sm:$0xf]
        %v6051 = vld [vmem:[%s6038 + $0x48] sm:$0xff]
        %v6052 = vld [vmem:[%s6038 + $0x50] sm:$0xf]
        %v6053 = vld [vmem:[%s6038 + $0x54] sm:$0xff]
        %v6054 = vld [vmem:[%s6038 + $0x5c] sm:$0xf]
        %v6055 = vld [vmem:[%s6038 + $0x60] sm:$0xff]
        %v6056 = vld [vmem:[%s6038 + $0x68] sm:$0xf]
        %v6057 = vld [vmem:[%s6038 + $0x6c] sm:$0xff]
        %v6058 = vld [vmem:[%s6038 + $0x74] sm:$0xf]
        %v6059 = vld [vmem:[%s6038 + $0x78] sm:$0xff]
        %v6060 = vld [vmem:[%s6038 + $0x80] sm:$0xf]
        %v6061 = vld [vmem:[%s6038 + $0x84] sm:$0xff]
        %v6062 = vld [vmem:[%s6038 + $0x8c] sm:$0xf]
        %v6063 = vld [vmem:[%s6038 + $0x90] sm:$0xff]
        %v6064 = vld [vmem:[%s6038 + $0x98] sm:$0xf]
        %v6065 = vld [vmem:[%s6038 + $0x9c] sm:$0xff]
        %v6066 = vld [vmem:[%s6038 + $0xa4] sm:$0xf]
        %v6067 = vld [vmem:[%s6038 + $0xa8] sm:$0xff]
        %v6068 = vld [vmem:[%s6038 + $0xb0] sm:$0xf]
        %v6069 = vld [vmem:[%s6038 + $0xb4] sm:$0xff]
        %v6070 = vld [vmem:[%s6038 + $0xbc] sm:$0xf]
        %v6071 = vld [vmem:[%s6038 + $0xc0] sm:$0xff]
        %v6072 = vld [vmem:[%s6038 + $0xc8] sm:$0xf]
        %v6073 = vld [vmem:[%s6038 + $0xcc] sm:$0xff]
        %v6074 = vld [vmem:[%s6038 + $0xd4] sm:$0xf]
        %v6075 = vld [vmem:[%s6038 + $0xd8] sm:$0xff]
        %v6076 = vld [vmem:[%s6038 + $0xe0] sm:$0xf]
        %v6077 = vld [vmem:[%s6038 + $0xe4] sm:$0xff]
        %v6078 = vld [vmem:[%s6038 + $0xec] sm:$0xf]
        %v6079 = vld [vmem:[%s6038 + $0xf0] sm:$0xff]
        %v6080 = vld [vmem:[%s6038 + $0xf8] sm:$0xf]
        %v6081 = vld [vmem:[%s6038 + $0xfc] sm:$0xff]
        %v6082 = vld [vmem:[%s6038 + $0x104] sm:$0xf]
        %v6083 = vld [vmem:[%s6038 + $0x108] sm:$0xff]
        %v6084 = vld [vmem:[%s6038 + $0x110] sm:$0xf]
        %v6085 = vld [vmem:[%s6038 + $0x114] sm:$0xff]
        %v6086 = vld [vmem:[%s6038 + $0x11c] sm:$0xf]
        %v6087 = vld [vmem:[%s6038 + $0x120] sm:$0xff]
        %v6088 = vld [vmem:[%s6038 + $0x128] sm:$0xf]
        %v6089 = vld [vmem:[%s6038 + $0x12c] sm:$0xff]
        %v6090 = vld [vmem:[%s6038 + $0x134] sm:$0xf]
        %v6091 = vld [vmem:[%s6038 + $0x138] sm:$0xff]
        %v6092 = vld [vmem:[%s6038 + $0x140] sm:$0xf]
        %v6093 = vld [vmem:[%s6038 + $0x144] sm:$0xff]
        %v6094 = vld [vmem:[%s6038 + $0x14c] sm:$0xf]
        %v6095 = vld [vmem:[%s6038 + $0x150] sm:$0xff]
        %v6096 = vld [vmem:[%s6038 + $0x158] sm:$0xf]
        %v6097 = vld [vmem:[%s6038 + $0x15c] sm:$0xff]
        %v6098 = vld [vmem:[%s6038 + $0x164] sm:$0xf]
        %v6099 = vld [vmem:[%s6038 + $0x168] sm:$0xff]
        %v6100 = vld [vmem:[%s6038 + $0x170] sm:$0xf]
        %v6101 = vld [vmem:[%s6038 + $0x174] sm:$0xff]
        %v6102 = vld [vmem:[%s6038 + $0x17c] sm:$0xf]
        %s6103 = scalar_lea.vmem [#allocation9], 384
        %v6104 = vld [vmem:[%s6103] sm:$0xf]
        %v6105 = vld [vmem:[%s6103 + $0x4] sm:$0xf]
        %v6106 = vld [vmem:[%s6103 + $0x8] sm:$0xf]
        %v6107 = vld [vmem:[%s6103 + $0xc] sm:$0xf]
        %v6108 = vld [vmem:[%s6103 + $0x10] sm:$0xf]
        %v6109 = vld [vmem:[%s6103 + $0x14] sm:$0xf]
        %v6110 = vld [vmem:[%s6103 + $0x18] sm:$0xf]
        %v6111 = vld [vmem:[%s6103 + $0x1c] sm:$0xf]
        %v6112 = vld [vmem:[%s6103 + $0x20] sm:$0xf]
        %v6113 = vld [vmem:[%s6103 + $0x24] sm:$0xf]
        %v6114 = vld [vmem:[%s6103 + $0x28] sm:$0xf]
        %v6115 = vld [vmem:[%s6103 + $0x2c] sm:$0xf]
        %v6116 = vld [vmem:[%s6103 + $0x30] sm:$0xf]
        %v6117 = vld [vmem:[%s6103 + $0x34] sm:$0xf]
        %v6118 = vld [vmem:[%s6103 + $0x38] sm:$0xf]
        %v6119 = vld [vmem:[%s6103 + $0x3c] sm:$0xf]
        %v6120 = vld [vmem:[%s6103 + $0x40] sm:$0xf]
        %v6121 = vld [vmem:[%s6103 + $0x44] sm:$0xf]
        %v6122 = vld [vmem:[%s6103 + $0x48] sm:$0xf]
        %v6123 = vld [vmem:[%s6103 + $0x4c] sm:$0xf]
        %v6124 = vld [vmem:[%s6103 + $0x50] sm:$0xf]
        %v6125 = vld [vmem:[%s6103 + $0x54] sm:$0xf]
        %v6126 = vld [vmem:[%s6103 + $0x58] sm:$0xf]
        %v6127 = vld [vmem:[%s6103 + $0x5c] sm:$0xf]
        %v6128 = vld [vmem:[%s6103 + $0x60] sm:$0xf]
        %v6129 = vld [vmem:[%s6103 + $0x64] sm:$0xf]
        %v6130 = vld [vmem:[%s6103 + $0x68] sm:$0xf]
        %v6131 = vld [vmem:[%s6103 + $0x6c] sm:$0xf]
        %v6132 = vld [vmem:[%s6103 + $0x70] sm:$0xf]
        %v6133 = vld [vmem:[%s6103 + $0x74] sm:$0xf]
        %v6134 = vld [vmem:[%s6103 + $0x78] sm:$0xf]
        %v6135 = vld [vmem:[%s6103 + $0x7c] sm:$0xf]
        %v6136 = vld [vmem:[%s6103 + $0x80] sm:$0xf]
        %v6137 = vld [vmem:[%s6103 + $0x84] sm:$0xf]
        %v6138 = vld [vmem:[%s6103 + $0x88] sm:$0xf]
        %v6139 = vld [vmem:[%s6103 + $0x8c] sm:$0xf]
        %v6140 = vld [vmem:[%s6103 + $0x90] sm:$0xf]
        %v6141 = vld [vmem:[%s6103 + $0x94] sm:$0xf]
        %v6142 = vld [vmem:[%s6103 + $0x98] sm:$0xf]
        %v6143 = vld [vmem:[%s6103 + $0x9c] sm:$0xf]
        %v6144 = vld [vmem:[%s6103 + $0xa0] sm:$0xf]
        %v6145 = vld [vmem:[%s6103 + $0xa4] sm:$0xf]
        %v6146 = vld [vmem:[%s6103 + $0xa8] sm:$0xf]
        %v6147 = vld [vmem:[%s6103 + $0xac] sm:$0xf]
        %v6148 = vld [vmem:[%s6103 + $0xb0] sm:$0xf]
        %v6149 = vld [vmem:[%s6103 + $0xb4] sm:$0xf]
        %v6150 = vld [vmem:[%s6103 + $0xb8] sm:$0xf]
        %v6151 = vld [vmem:[%s6103 + $0xbc] sm:$0xf]
        %v6216 = vunpack.c.l.b16 %v6039
        %v6217 = vunpack.c.h.b16 %v6039
        %v6218 = vunpack.c.l.b16 %v6040
        %v6219 = vunpack.c.l.b16 %v6041
        %v6220 = vunpack.c.h.b16 %v6041
        %v6221 = vunpack.c.l.b16 %v6042
        %v6222 = vunpack.c.l.b16 %v6043
        %v6223 = vunpack.c.h.b16 %v6043
        %v6224 = vunpack.c.l.b16 %v6044
        %v6225 = vunpack.c.l.b16 %v6045
        %v6226 = vunpack.c.h.b16 %v6045
        %v6227 = vunpack.c.l.b16 %v6046
        %v6228 = vunpack.c.l.b16 %v6047
        %v6229 = vunpack.c.h.b16 %v6047
        %v6230 = vunpack.c.l.b16 %v6048
        %v6231 = vunpack.c.l.b16 %v6049
        %v6232 = vunpack.c.h.b16 %v6049
        %v6233 = vunpack.c.l.b16 %v6050
        %v6234 = vunpack.c.l.b16 %v6051
        %v6235 = vunpack.c.h.b16 %v6051
        %v6236 = vunpack.c.l.b16 %v6052
        %v6237 = vunpack.c.l.b16 %v6053
        %v6238 = vunpack.c.h.b16 %v6053
        %v6239 = vunpack.c.l.b16 %v6054
        %v6240 = vunpack.c.l.b16 %v6055
        %v6241 = vunpack.c.h.b16 %v6055
        %v6242 = vunpack.c.l.b16 %v6056
        %v6243 = vunpack.c.l.b16 %v6057
        %v6244 = vunpack.c.h.b16 %v6057
        %v6245 = vunpack.c.l.b16 %v6058
        %v6246 = vunpack.c.l.b16 %v6059
        %v6247 = vunpack.c.h.b16 %v6059
        %v6248 = vunpack.c.l.b16 %v6060
        %v6249 = vunpack.c.l.b16 %v6061
        %v6250 = vunpack.c.h.b16 %v6061
        %v6251 = vunpack.c.l.b16 %v6062
        %v6252 = vunpack.c.l.b16 %v6063
        %v6253 = vunpack.c.h.b16 %v6063
        %v6254 = vunpack.c.l.b16 %v6064
        %v6255 = vunpack.c.l.b16 %v6065
        %v6256 = vunpack.c.h.b16 %v6065
        %v6257 = vunpack.c.l.b16 %v6066
        %v6258 = vunpack.c.l.b16 %v6067
        %v6259 = vunpack.c.h.b16 %v6067
        %v6260 = vunpack.c.l.b16 %v6068
        %v6261 = vunpack.c.l.b16 %v6069
        %v6262 = vunpack.c.h.b16 %v6069
        %v6263 = vunpack.c.l.b16 %v6070
        %v6264 = vunpack.c.l.b16 %v6071
        %v6265 = vunpack.c.h.b16 %v6071
        %v6266 = vunpack.c.l.b16 %v6072
        %v6267 = vunpack.c.l.b16 %v6073
        %v6268 = vunpack.c.h.b16 %v6073
        %v6269 = vunpack.c.l.b16 %v6074
        %v6270 = vunpack.c.l.b16 %v6075
        %v6271 = vunpack.c.h.b16 %v6075
        %v6272 = vunpack.c.l.b16 %v6076
        %v6273 = vunpack.c.l.b16 %v6077
        %v6274 = vunpack.c.h.b16 %v6077
        %v6275 = vunpack.c.l.b16 %v6078
        %v6276 = vunpack.c.l.b16 %v6079
        %v6277 = vunpack.c.h.b16 %v6079
        %v6278 = vunpack.c.l.b16 %v6080
        %v6279 = vunpack.c.l.b16 %v6081
        %v6280 = vunpack.c.h.b16 %v6081
        %v6281 = vunpack.c.l.b16 %v6082
        %v6282 = vunpack.c.l.b16 %v6083
        %v6283 = vunpack.c.h.b16 %v6083
        %v6284 = vunpack.c.l.b16 %v6084
        %v6285 = vunpack.c.l.b16 %v6085
        %v6286 = vunpack.c.h.b16 %v6085
        %v6287 = vunpack.c.l.b16 %v6086
        %v6288 = vunpack.c.l.b16 %v6087
        %v6289 = vunpack.c.h.b16 %v6087
        %v6290 = vunpack.c.l.b16 %v6088
        %v6291 = vunpack.c.l.b16 %v6089
        %v6292 = vunpack.c.h.b16 %v6089
        %v6293 = vunpack.c.l.b16 %v6090
        %v6294 = vunpack.c.l.b16 %v6091
        %v6295 = vunpack.c.h.b16 %v6091
        %v6296 = vunpack.c.l.b16 %v6092
        %v6297 = vunpack.c.l.b16 %v6093
        %v6298 = vunpack.c.h.b16 %v6093
        %v6299 = vunpack.c.l.b16 %v6094
        %v6300 = vunpack.c.l.b16 %v6095
        %v6301 = vunpack.c.h.b16 %v6095
        %v6302 = vunpack.c.l.b16 %v6096
        %v6303 = vunpack.c.l.b16 %v6097
        %v6304 = vunpack.c.h.b16 %v6097
        %v6305 = vunpack.c.l.b16 %v6098
        %v6306 = vunpack.c.l.b16 %v6099
        %v6307 = vunpack.c.h.b16 %v6099
        %v6308 = vunpack.c.l.b16 %v6100
        %v6309 = vunpack.c.l.b16 %v6101
        %v6310 = vunpack.c.h.b16 %v6101
        %v6311 = vunpack.c.l.b16 %v6102
        %v6312 = vpack.c.b16 %v6219, %v6216
        %v6313 = vpack.c.b16 %v6220, %v6217
        %v6314 = vpack.c.b16 %v6221, %v6218
        %v6315 = vpack.c.b16 %v6225, %v6222
        %v6316 = vpack.c.b16 %v6226, %v6223
        %v6317 = vpack.c.b16 %v6227, %v6224
        %v6318 = vpack.c.b16 %v6231, %v6228
        %v6319 = vpack.c.b16 %v6232, %v6229
        %v6320 = vpack.c.b16 %v6233, %v6230
        %v6321 = vpack.c.b16 %v6237, %v6234
        %v6322 = vpack.c.b16 %v6238, %v6235
        %v6323 = vpack.c.b16 %v6239, %v6236
        %v6324 = vpack.c.b16 %v6243, %v6240
        %v6325 = vpack.c.b16 %v6244, %v6241
        %v6326 = vpack.c.b16 %v6245, %v6242
        %v6327 = vpack.c.b16 %v6249, %v6246
        %v6328 = vpack.c.b16 %v6250, %v6247
        %v6329 = vpack.c.b16 %v6251, %v6248
        %v6330 = vpack.c.b16 %v6255, %v6252
        %v6331 = vpack.c.b16 %v6256, %v6253
        %v6332 = vpack.c.b16 %v6257, %v6254
        %v6333 = vpack.c.b16 %v6261, %v6258
        %v6334 = vpack.c.b16 %v6262, %v6259
        %v6335 = vpack.c.b16 %v6263, %v6260
        %v6336 = vpack.c.b16 %v6267, %v6264
        %v6337 = vpack.c.b16 %v6268, %v6265
        %v6338 = vpack.c.b16 %v6269, %v6266
        %v6339 = vpack.c.b16 %v6273, %v6270
        %v6340 = vpack.c.b16 %v6274, %v6271
        %v6341 = vpack.c.b16 %v6275, %v6272
        %v6342 = vpack.c.b16 %v6279, %v6276
        %v6343 = vpack.c.b16 %v6280, %v6277
        %v6344 = vpack.c.b16 %v6281, %v6278
        %v6345 = vpack.c.b16 %v6285, %v6282
        %v6346 = vpack.c.b16 %v6286, %v6283
        %v6347 = vpack.c.b16 %v6287, %v6284
        %v6348 = vpack.c.b16 %v6291, %v6288
        %v6349 = vpack.c.b16 %v6292, %v6289
        %v6350 = vpack.c.b16 %v6293, %v6290
        %v6351 = vpack.c.b16 %v6297, %v6294
        %v6352 = vpack.c.b16 %v6298, %v6295
        %v6353 = vpack.c.b16 %v6299, %v6296
        %v6354 = vpack.c.b16 %v6303, %v6300
        %v6355 = vpack.c.b16 %v6304, %v6301
        %v6356 = vpack.c.b16 %v6305, %v6302
        %v6357 = vpack.c.b16 %v6309, %v6306
        %v6358 = vpack.c.b16 %v6310, %v6307
        %v6359 = vpack.c.b16 %v6311, %v6308
        %v6456 = vunpack.c.l.b16 %v6104
        %v6457 = vunpack.c.l.b16 %v6105
        %v6458 = vunpack.c.l.b16 %v6106
        %v6459 = vunpack.c.l.b16 %v6107
        %v6460 = vunpack.c.l.b16 %v6108
        %v6461 = vunpack.c.l.b16 %v6109
        %v6462 = vunpack.c.l.b16 %v6110
        %v6463 = vunpack.c.l.b16 %v6111
        %v6464 = vunpack.c.l.b16 %v6112
        %v6465 = vunpack.c.l.b16 %v6113
        %v6466 = vunpack.c.l.b16 %v6114
        %v6467 = vunpack.c.l.b16 %v6115
        %v6468 = vunpack.c.l.b16 %v6116
        %v6469 = vunpack.c.l.b16 %v6117
        %v6470 = vunpack.c.l.b16 %v6118
        %v6471 = vunpack.c.l.b16 %v6119
        %v6472 = vunpack.c.l.b16 %v6120
        %v6473 = vunpack.c.l.b16 %v6121
        %v6474 = vunpack.c.l.b16 %v6122
        %v6475 = vunpack.c.l.b16 %v6123
        %v6476 = vunpack.c.l.b16 %v6124
        %v6477 = vunpack.c.l.b16 %v6125
        %v6478 = vunpack.c.l.b16 %v6126
        %v6479 = vunpack.c.l.b16 %v6127
        %v6480 = vunpack.c.l.b16 %v6128
        %v6481 = vunpack.c.l.b16 %v6129
        %v6482 = vunpack.c.l.b16 %v6130
        %v6483 = vunpack.c.l.b16 %v6131
        %v6484 = vunpack.c.l.b16 %v6132
        %v6485 = vunpack.c.l.b16 %v6133
        %v6486 = vunpack.c.l.b16 %v6134
        %v6487 = vunpack.c.l.b16 %v6135
        %v6488 = vunpack.c.l.b16 %v6136
        %v6489 = vunpack.c.l.b16 %v6137
        %v6490 = vunpack.c.l.b16 %v6138
        %v6491 = vunpack.c.l.b16 %v6139
        %v6492 = vunpack.c.l.b16 %v6140
        %v6493 = vunpack.c.l.b16 %v6141
        %v6494 = vunpack.c.l.b16 %v6142
        %v6495 = vunpack.c.l.b16 %v6143
        %v6496 = vunpack.c.l.b16 %v6144
        %v6497 = vunpack.c.l.b16 %v6145
        %v6498 = vunpack.c.l.b16 %v6146
        %v6499 = vunpack.c.l.b16 %v6147
        %v6500 = vunpack.c.l.b16 %v6148
        %v6501 = vunpack.c.l.b16 %v6149
        %v6502 = vunpack.c.l.b16 %v6150
        %v6503 = vunpack.c.l.b16 %v6151
        %v6504 = vpack.c.b16 %v6457, %v6456
        %v6505 = vpack.c.b16 %v6459, %v6458
        %v6506 = vpack.c.b16 %v6461, %v6460
        %v6507 = vpack.c.b16 %v6463, %v6462
        %v6508 = vpack.c.b16 %v6465, %v6464
        %v6509 = vpack.c.b16 %v6467, %v6466
        %v6510 = vpack.c.b16 %v6469, %v6468
        %v6511 = vpack.c.b16 %v6471, %v6470
        %v6512 = vpack.c.b16 %v6473, %v6472
        %v6513 = vpack.c.b16 %v6475, %v6474
        %v6514 = vpack.c.b16 %v6477, %v6476
        %v6515 = vpack.c.b16 %v6479, %v6478
        %v6516 = vpack.c.b16 %v6481, %v6480
        %v6517 = vpack.c.b16 %v6483, %v6482
        %v6518 = vpack.c.b16 %v6485, %v6484
        %v6519 = vpack.c.b16 %v6487, %v6486
        %v6520 = vpack.c.b16 %v6489, %v6488
        %v6521 = vpack.c.b16 %v6491, %v6490
        %v6522 = vpack.c.b16 %v6493, %v6492
        %v6523 = vpack.c.b16 %v6495, %v6494
        %v6524 = vpack.c.b16 %v6497, %v6496
        %v6525 = vpack.c.b16 %v6499, %v6498
        %v6526 = vpack.c.b16 %v6501, %v6500
        %v6527 = vpack.c.b16 %v6503, %v6502
        %6552 = vmatprep.subr.bf16.mxu0 0
        %6553 = vmatpush1.bf16.msra.mxu0 %v6511
        %6554 = vmatprep.subr.bf16.mxu0 0
        %6555 = vmatpush1.bf16.msra.mxu0 %v6510
        %6556 = vmatprep.subr.bf16.mxu0 0
        %6557 = vmatpush1.bf16.msra.mxu0 %v6509
        %6558 = vmatprep.subr.bf16.mxu0 0
        %6559 = vmatpush1.bf16.msra.mxu0 %v6508
        %6560 = vmatprep.subr.bf16.mxu0 0
        %6561 = vmatpush1.bf16.msra.mxu0 %v6507
        %6562 = vmatprep.subr.bf16.mxu0 0
        %6563 = vmatpush1.bf16.msra.mxu0 %v6506
        %6564 = vmatprep.subr.bf16.mxu0 0
        %6565 = vmatpush1.bf16.msra.mxu0 %v6505
        %6566 = vmatprep.subr.bf16.mxu0 0
        %6567 = vmatpush1.bf16.msra.mxu0 %v6504
        %6568 = vmatprep.subr.bf16.mxu0 0
        %6569 = vmatpush2.bf16.msra.mxu0 %v6519
        %6570 = vmatprep.subr.bf16.mxu0 0
        %6571 = vmatpush2.bf16.msra.mxu0 %v6518
        %6572 = vmatprep.subr.bf16.mxu0 0
        %6573 = vmatpush2.bf16.msra.mxu0 %v6517
        %6574 = vmatprep.subr.bf16.mxu0 0
        %6575 = vmatpush2.bf16.msra.mxu0 %v6516
        %6576 = vmatprep.subr.bf16.mxu0 0
        %6577 = vmatpush2.bf16.msra.mxu0 %v6515
        %6578 = vmatprep.subr.bf16.mxu0 0
        %6579 = vmatpush2.bf16.msra.mxu0 %v6514
        %6580 = vmatprep.subr.bf16.mxu0 0
        %6581 = vmatpush2.bf16.msra.mxu0 %v6513
        %6582 = vmatprep.subr.bf16.mxu0 0
        %6583 = vmatpush2.bf16.msra.mxu0 %v6512
        %6584 = vmatprep.mubr.bf16.mxu0 %v6313
        %6585 = vmatmul.mubr.bf16.gmra.mxu0 %v6312
        %v6586 = vpop.f32.mrf.mxu0
        %v6587 = vadd.f32 0.0, %v6586
        %v6588 = vpop.f32.mrf.mxu0
        %v6589 = vpop.f32.mrf.mxu0
        %v6590 = vadd.f32 0.0, %v6589
        %v6591 = vpop.f32.mrf.mxu0
        %6592 = vmatprep.mubr.bf16.mxu0 %v6316
        %6593 = vmatmul.mubr.bf16.gmra.mxu0 %v6315
        %v6594 = vpop.f32.mrf.mxu0
        %v6595 = vadd.f32 0.0, %v6594
        %v6596 = vpop.f32.mrf.mxu0
        %v6597 = vpop.f32.mrf.mxu0
        %v6598 = vadd.f32 0.0, %v6597
        %v6599 = vpop.f32.mrf.mxu0
        %6600 = vmatprep.mubr.bf16.mxu0 %v6319
        %6601 = vmatmul.mubr.bf16.gmra.mxu0 %v6318
        %v6602 = vpop.f32.mrf.mxu0
        %v6603 = vadd.f32 0.0, %v6602
        %v6604 = vpop.f32.mrf.mxu0
        %v6605 = vpop.f32.mrf.mxu0
        %v6606 = vadd.f32 0.0, %v6605
        %v6607 = vpop.f32.mrf.mxu0
        %6608 = vmatprep.mubr.bf16.mxu0 %v6322
        %6609 = vmatmul.mubr.bf16.gmra.mxu0 %v6321
        %v6610 = vpop.f32.mrf.mxu0
        %v6611 = vadd.f32 0.0, %v6610
        %v6612 = vpop.f32.mrf.mxu0
        %v6613 = vpop.f32.mrf.mxu0
        %v6614 = vadd.f32 0.0, %v6613
        %v6615 = vpop.f32.mrf.mxu0
        %6616 = vmatprep.mubr.bf16.mxu0 %v6325
        %6617 = vmatmul.mubr.bf16.gmra.mxu0 %v6324
        %v6618 = vpop.f32.mrf.mxu0
        %v6619 = vadd.f32 0.0, %v6618
        %v6620 = vpop.f32.mrf.mxu0
        %v6621 = vpop.f32.mrf.mxu0
        %v6622 = vadd.f32 0.0, %v6621
        %v6623 = vpop.f32.mrf.mxu0
        %6624 = vmatprep.mubr.bf16.mxu0 %v6328
        %6625 = vmatmul.mubr.bf16.gmra.mxu0 %v6327
        %v6626 = vpop.f32.mrf.mxu0
        %v6627 = vadd.f32 0.0, %v6626
        %v6628 = vpop.f32.mrf.mxu0
        %v6629 = vpop.f32.mrf.mxu0
        %v6630 = vadd.f32 0.0, %v6629
        %v6631 = vpop.f32.mrf.mxu0
        %6632 = vmatprep.mubr.bf16.mxu0 %v6331
        %6633 = vmatmul.mubr.bf16.gmra.mxu0 %v6330
        %v6634 = vpop.f32.mrf.mxu0
        %v6635 = vadd.f32 0.0, %v6634
        %v6636 = vpop.f32.mrf.mxu0
        %v6637 = vpop.f32.mrf.mxu0
        %v6638 = vadd.f32 0.0, %v6637
        %v6639 = vpop.f32.mrf.mxu0
        %6640 = vmatprep.mubr.bf16.mxu0 %v6334
        %6641 = vmatmul.mubr.bf16.gmra.mxu0 %v6333
        %v6642 = vpop.f32.mrf.mxu0
        %v6643 = vadd.f32 0.0, %v6642
        %v6644 = vpop.f32.mrf.mxu0
        %v6645 = vpop.f32.mrf.mxu0
        %v6646 = vadd.f32 0.0, %v6645
        %v6647 = vpop.f32.mrf.mxu0
        %6648 = vmatprep.mubr.bf16.mxu0 %v6337
        %6649 = vmatmul.mubr.bf16.gmra.mxu0 %v6336
        %v6650 = vpop.f32.mrf.mxu0
        %v6651 = vadd.f32 0.0, %v6650
        %v6652 = vpop.f32.mrf.mxu0
        %v6653 = vpop.f32.mrf.mxu0
        %v6654 = vadd.f32 0.0, %v6653
        %v6655 = vpop.f32.mrf.mxu0
        %6656 = vmatprep.mubr.bf16.mxu0 %v6340
        %6657 = vmatmul.mubr.bf16.gmra.mxu0 %v6339
        %v6658 = vpop.f32.mrf.mxu0
        %v6659 = vadd.f32 0.0, %v6658
        %v6660 = vpop.f32.mrf.mxu0
        %v6661 = vpop.f32.mrf.mxu0
        %v6662 = vadd.f32 0.0, %v6661
        %v6663 = vpop.f32.mrf.mxu0
        %6664 = vmatprep.mubr.bf16.mxu0 %v6343
        %6665 = vmatmul.mubr.bf16.gmra.mxu0 %v6342
        %v6666 = vpop.f32.mrf.mxu0
        %v6667 = vadd.f32 0.0, %v6666
        %v6668 = vpop.f32.mrf.mxu0
        %v6669 = vpop.f32.mrf.mxu0
        %v6670 = vadd.f32 0.0, %v6669
        %v6671 = vpop.f32.mrf.mxu0
        %6672 = vmatprep.mubr.bf16.mxu0 %v6346
        %6673 = vmatmul.mubr.bf16.gmra.mxu0 %v6345
        %v6674 = vpop.f32.mrf.mxu0
        %v6675 = vadd.f32 0.0, %v6674
        %v6676 = vpop.f32.mrf.mxu0
        %v6677 = vpop.f32.mrf.mxu0
        %v6678 = vadd.f32 0.0, %v6677
        %v6679 = vpop.f32.mrf.mxu0
        %6680 = vmatprep.mubr.bf16.mxu0 %v6349
        %6681 = vmatmul.mubr.bf16.gmra.mxu0 %v6348
        %v6682 = vpop.f32.mrf.mxu0
        %v6683 = vadd.f32 0.0, %v6682
        %v6684 = vpop.f32.mrf.mxu0
        %v6685 = vpop.f32.mrf.mxu0
        %v6686 = vadd.f32 0.0, %v6685
        %v6687 = vpop.f32.mrf.mxu0
        %6688 = vmatprep.mubr.bf16.mxu0 %v6352
        %6689 = vmatmul.mubr.bf16.gmra.mxu0 %v6351
        %v6690 = vpop.f32.mrf.mxu0
        %v6691 = vadd.f32 0.0, %v6690
        %v6692 = vpop.f32.mrf.mxu0
        %v6693 = vpop.f32.mrf.mxu0
        %v6694 = vadd.f32 0.0, %v6693
        %v6695 = vpop.f32.mrf.mxu0
        %6696 = vmatprep.mubr.bf16.mxu0 %v6355
        %6697 = vmatmul.mubr.bf16.gmra.mxu0 %v6354
        %v6698 = vpop.f32.mrf.mxu0
        %v6699 = vadd.f32 0.0, %v6698
        %v6700 = vpop.f32.mrf.mxu0
        %v6701 = vpop.f32.mrf.mxu0
        %v6702 = vadd.f32 0.0, %v6701
        %v6703 = vpop.f32.mrf.mxu0
        %6704 = vmatprep.mubr.bf16.mxu0 %v6358
        %6705 = vmatmul.mubr.bf16.gmra.mxu0 %v6357
        %v6706 = vpop.f32.mrf.mxu0
        %v6707 = vadd.f32 0.0, %v6706
        %v6708 = vpop.f32.mrf.mxu0
        %v6709 = vpop.f32.mrf.mxu0
        %v6710 = vadd.f32 0.0, %v6709
        %v6711 = vpop.f32.mrf.mxu0
        %6712 = vdwg.mxu0
        %6713 = vmatprep.subr.bf16.mxu0 0
        %6714 = vmatpush1.bf16.msra.mxu0 %v6527
        %6715 = vmatprep.subr.bf16.mxu0 0
        %6716 = vmatpush1.bf16.msra.mxu0 %v6526
        %6717 = vmatprep.subr.bf16.mxu0 0
        %6718 = vmatpush1.bf16.msra.mxu0 %v6525
        %6719 = vmatprep.subr.bf16.mxu0 0
        %6720 = vmatpush1.bf16.msra.mxu0 %v6524
        %6721 = vmatprep.subr.bf16.mxu0 0
        %6722 = vmatpush1.bf16.msra.mxu0 %v6523
        %6723 = vmatprep.subr.bf16.mxu0 0
        %6724 = vmatpush1.bf16.msra.mxu0 %v6522
        %6725 = vmatprep.subr.bf16.mxu0 0
        %6726 = vmatpush1.bf16.msra.mxu0 %v6521
        %6727 = vmatprep.subr.bf16.mxu0 0
        %6728 = vmatpush1.bf16.msra.mxu0 %v6520
        %6729 = vmatprep.subr.bf16.mxu0 0
        %6730 = vmatpush2.bf16.msra.mxu0 0
        %6731 = vmatprep.subr.bf16.mxu0 0
        %6732 = vmatpush2.bf16.msra.mxu0 0
        %6733 = vmatprep.subr.bf16.mxu0 0
        %6734 = vmatpush2.bf16.msra.mxu0 0
        %6735 = vmatprep.subr.bf16.mxu0 0
        %6736 = vmatpush2.bf16.msra.mxu0 0
        %6737 = vmatprep.subr.bf16.mxu0 0
        %6738 = vmatpush2.bf16.msra.mxu0 0
        %6739 = vmatprep.subr.bf16.mxu0 0
        %6740 = vmatpush2.bf16.msra.mxu0 0
        %6741 = vmatprep.subr.bf16.mxu0 0
        %6742 = vmatpush2.bf16.msra.mxu0 0
        %6743 = vmatprep.subr.bf16.mxu0 0
        %6744 = vmatpush2.bf16.msra.mxu0 0
        %6745 = vmatprep.mubr.bf16.mxu0 0
        %6746 = vmatmul.mubr.bf16.gmra.mxu0 %v6314
        %v6747 = vpop.f32.mrf.mxu0
        %v6748 = vadd.f32 %v6587, %v6747
        %v6749 = vpop.f32.mrf.mxu0
        %v6750 = vpop.f32.mrf.mxu0
        %v6751 = vadd.f32 %v6590, %v6750
        %v6752 = vpop.f32.mrf.mxu0
        %6753 = vmatprep.mubr.bf16.mxu0 0
        %6754 = vmatmul.mubr.bf16.gmra.mxu0 %v6317
        %v6755 = vpop.f32.mrf.mxu0
        %v6756 = vadd.f32 %v6595, %v6755
        %v6757 = vpop.f32.mrf.mxu0
        %v6758 = vpop.f32.mrf.mxu0
        %v6759 = vadd.f32 %v6598, %v6758
        %v6760 = vpop.f32.mrf.mxu0
        %6761 = vmatprep.mubr.bf16.mxu0 0
        %6762 = vmatmul.mubr.bf16.gmra.mxu0 %v6320
        %v6763 = vpop.f32.mrf.mxu0
        %v6764 = vadd.f32 %v6603, %v6763
        %v6765 = vpop.f32.mrf.mxu0
        %v6766 = vpop.f32.mrf.mxu0
        %v6767 = vadd.f32 %v6606, %v6766
        %v6768 = vpop.f32.mrf.mxu0
        %6769 = vmatprep.mubr.bf16.mxu0 0
        %6770 = vmatmul.mubr.bf16.gmra.mxu0 %v6323
        %v6771 = vpop.f32.mrf.mxu0
        %v6772 = vadd.f32 %v6611, %v6771
        %v6773 = vpop.f32.mrf.mxu0
        %v6774 = vpop.f32.mrf.mxu0
        %v6775 = vadd.f32 %v6614, %v6774
        %v6776 = vpop.f32.mrf.mxu0
        %6777 = vmatprep.mubr.bf16.mxu0 0
        %6778 = vmatmul.mubr.bf16.gmra.mxu0 %v6326
        %v6779 = vpop.f32.mrf.mxu0
        %v6780 = vadd.f32 %v6619, %v6779
        %v6781 = vpop.f32.mrf.mxu0
        %v6782 = vpop.f32.mrf.mxu0
        %v6783 = vadd.f32 %v6622, %v6782
        %v6784 = vpop.f32.mrf.mxu0
        %6785 = vmatprep.mubr.bf16.mxu0 0
        %6786 = vmatmul.mubr.bf16.gmra.mxu0 %v6329
        %v6787 = vpop.f32.mrf.mxu0
        %v6788 = vadd.f32 %v6627, %v6787
        %v6789 = vpop.f32.mrf.mxu0
        %v6790 = vpop.f32.mrf.mxu0
        %v6791 = vadd.f32 %v6630, %v6790
        %v6792 = vpop.f32.mrf.mxu0
        %6793 = vmatprep.mubr.bf16.mxu0 0
        %6794 = vmatmul.mubr.bf16.gmra.mxu0 %v6332
        %v6795 = vpop.f32.mrf.mxu0
        %v6796 = vadd.f32 %v6635, %v6795
        %v6797 = vpop.f32.mrf.mxu0
        %v6798 = vpop.f32.mrf.mxu0
        %v6799 = vadd.f32 %v6638, %v6798
        %v6800 = vpop.f32.mrf.mxu0
        %6801 = vmatprep.mubr.bf16.mxu0 0
        %6802 = vmatmul.mubr.bf16.gmra.mxu0 %v6335
        %v6803 = vpop.f32.mrf.mxu0
        %v6804 = vadd.f32 %v6643, %v6803
        %v6805 = vpop.f32.mrf.mxu0
        %v6806 = vpop.f32.mrf.mxu0
        %v6807 = vadd.f32 %v6646, %v6806
        %v6808 = vpop.f32.mrf.mxu0
        %6809 = vmatprep.mubr.bf16.mxu0 0
        %6810 = vmatmul.mubr.bf16.gmra.mxu0 %v6338
        %v6811 = vpop.f32.mrf.mxu0
        %v6812 = vadd.f32 %v6651, %v6811
        %v6813 = vpop.f32.mrf.mxu0
        %v6814 = vpop.f32.mrf.mxu0
        %v6815 = vadd.f32 %v6654, %v6814
        %v6816 = vpop.f32.mrf.mxu0
        %6817 = vmatprep.mubr.bf16.mxu0 0
        %6818 = vmatmul.mubr.bf16.gmra.mxu0 %v6341
        %v6819 = vpop.f32.mrf.mxu0
        %v6820 = vadd.f32 %v6659, %v6819
        %v6821 = vpop.f32.mrf.mxu0
        %v6822 = vpop.f32.mrf.mxu0
        %v6823 = vadd.f32 %v6662, %v6822
        %v6824 = vpop.f32.mrf.mxu0
        %6825 = vmatprep.mubr.bf16.mxu0 0
        %6826 = vmatmul.mubr.bf16.gmra.mxu0 %v6344
        %v6827 = vpop.f32.mrf.mxu0
        %v6828 = vadd.f32 %v6667, %v6827
        %v6829 = vpop.f32.mrf.mxu0
        %v6830 = vpop.f32.mrf.mxu0
        %v6831 = vadd.f32 %v6670, %v6830
        %v6832 = vpop.f32.mrf.mxu0
        %6833 = vmatprep.mubr.bf16.mxu0 0
        %6834 = vmatmul.mubr.bf16.gmra.mxu0 %v6347
        %v6835 = vpop.f32.mrf.mxu0
        %v6836 = vadd.f32 %v6675, %v6835
        %v6837 = vpop.f32.mrf.mxu0
        %v6838 = vpop.f32.mrf.mxu0
        %v6839 = vadd.f32 %v6678, %v6838
        %v6840 = vpop.f32.mrf.mxu0
        %6841 = vmatprep.mubr.bf16.mxu0 0
        %6842 = vmatmul.mubr.bf16.gmra.mxu0 %v6350
        %v6843 = vpop.f32.mrf.mxu0
        %v6844 = vadd.f32 %v6683, %v6843
        %v6845 = vpop.f32.mrf.mxu0
        %v6846 = vpop.f32.mrf.mxu0
        %v6847 = vadd.f32 %v6686, %v6846
        %v6848 = vpop.f32.mrf.mxu0
        %6849 = vmatprep.mubr.bf16.mxu0 0
        %6850 = vmatmul.mubr.bf16.gmra.mxu0 %v6353
        %v6851 = vpop.f32.mrf.mxu0
        %v6852 = vadd.f32 %v6691, %v6851
        %v6853 = vpop.f32.mrf.mxu0
        %v6854 = vpop.f32.mrf.mxu0
        %v6855 = vadd.f32 %v6694, %v6854
        %v6856 = vpop.f32.mrf.mxu0
        %6857 = vmatprep.mubr.bf16.mxu0 0
        %6858 = vmatmul.mubr.bf16.gmra.mxu0 %v6356
        %v6859 = vpop.f32.mrf.mxu0
        %v6860 = vadd.f32 %v6699, %v6859
        %v6861 = vpop.f32.mrf.mxu0
        %v6862 = vpop.f32.mrf.mxu0
        %v6863 = vadd.f32 %v6702, %v6862
        %v6864 = vpop.f32.mrf.mxu0
        %6865 = vmatprep.mubr.bf16.mxu0 0
        %6866 = vmatmul.mubr.bf16.gmra.mxu0 %v6359
        %v6867 = vpop.f32.mrf.mxu0
        %v6868 = vadd.f32 %v6707, %v6867
        %v6869 = vpop.f32.mrf.mxu0
        %v6870 = vpop.f32.mrf.mxu0
        %v6871 = vadd.f32 %v6710, %v6870
        %v6872 = vpop.f32.mrf.mxu0
        %6873 = vdwg.mxu0
        %v6874 = vadd.f32 %v6006, %v6748
        %v6875 = vadd.f32 %v6007, %v6751
        %v6876 = vadd.f32 %v6008, %v6756
        %v6877 = vadd.f32 %v6009, %v6759
        %v6878 = vadd.f32 %v6010, %v6764
        %v6879 = vadd.f32 %v6011, %v6767
        %v6880 = vadd.f32 %v6012, %v6772
        %v6881 = vadd.f32 %v6013, %v6775
        %v6882 = vadd.f32 %v6014, %v6780
        %v6883 = vadd.f32 %v6015, %v6783
        %v6884 = vadd.f32 %v6016, %v6788
        %v6885 = vadd.f32 %v6017, %v6791
        %v6886 = vadd.f32 %v6018, %v6796
        %v6887 = vadd.f32 %v6019, %v6799
        %v6888 = vadd.f32 %v6020, %v6804
        %v6889 = vadd.f32 %v6021, %v6807
        %v6890 = vadd.f32 %v6022, %v6812
        %v6891 = vadd.f32 %v6023, %v6815
        %v6892 = vadd.f32 %v6024, %v6820
        %v6893 = vadd.f32 %v6025, %v6823
        %v6894 = vadd.f32 %v6026, %v6828
        %v6895 = vadd.f32 %v6027, %v6831
        %v6896 = vadd.f32 %v6028, %v6836
        %v6897 = vadd.f32 %v6029, %v6839
        %v6898 = vadd.f32 %v6030, %v6844
        %v6899 = vadd.f32 %v6031, %v6847
        %v6900 = vadd.f32 %v6032, %v6852
        %v6901 = vadd.f32 %v6033, %v6855
        %v6902 = vadd.f32 %v6034, %v6860
        %v6903 = vadd.f32 %v6035, %v6863
        %v6904 = vadd.f32 %v6036, %v6868
        %v6905 = vadd.f32 %v6037, %v6871
        %s6906 = scalar_lea.vmem %s237, 24 [#allocation4]
        %v6907 = vld [vmem:[%s6906 + $0x1] sm:$0xff]
        %v6908 = vld [vmem:[%s6906 + $0x9] sm:$0xff]
        %v6909 = vld [vmem:[%s6906 + $0x19] sm:$0xff]
        %v6910 = vld [vmem:[%s6906 + $0x21] sm:$0xff]
        %v6911 = vld [vmem:[%s6906 + $0x31] sm:$0xff]
        %v6912 = vld [vmem:[%s6906 + $0x39] sm:$0xff]
        %v6913 = vld [vmem:[%s6906 + $0x49] sm:$0xff]
        %v6914 = vld [vmem:[%s6906 + $0x51] sm:$0xff]
        %v6915 = vld [vmem:[%s6906 + $0x61] sm:$0xff]
        %v6916 = vld [vmem:[%s6906 + $0x69] sm:$0xff]
        %v6917 = vld [vmem:[%s6906 + $0x79] sm:$0xff]
        %v6918 = vld [vmem:[%s6906 + $0x81] sm:$0xff]
        %v6919 = vld [vmem:[%s6906 + $0x91] sm:$0xff]
        %v6920 = vld [vmem:[%s6906 + $0x99] sm:$0xff]
        %v6921 = vld [vmem:[%s6906 + $0xa9] sm:$0xff]
        %v6922 = vld [vmem:[%s6906 + $0xb1] sm:$0xff]
        %v6923 = vld [vmem:[%s6906 + $0xc1] sm:$0xff]
        %v6924 = vld [vmem:[%s6906 + $0xc9] sm:$0xff]
        %v6925 = vld [vmem:[%s6906 + $0xd9] sm:$0xff]
        %v6926 = vld [vmem:[%s6906 + $0xe1] sm:$0xff]
        %v6927 = vld [vmem:[%s6906 + $0xf1] sm:$0xff]
        %v6928 = vld [vmem:[%s6906 + $0xf9] sm:$0xff]
        %v6929 = vld [vmem:[%s6906 + $0x109] sm:$0xff]
        %v6930 = vld [vmem:[%s6906 + $0x111] sm:$0xff]
        %v6931 = vld [vmem:[%s6906 + $0x121] sm:$0xff]
        %v6932 = vld [vmem:[%s6906 + $0x129] sm:$0xff]
        %v6933 = vld [vmem:[%s6906 + $0x139] sm:$0xff]
        %v6934 = vld [vmem:[%s6906 + $0x141] sm:$0xff]
        %v6935 = vld [vmem:[%s6906 + $0x151] sm:$0xff]
        %v6936 = vld [vmem:[%s6906 + $0x159] sm:$0xff]
        %v6937 = vld [vmem:[%s6906 + $0x169] sm:$0xff]
        %v6938 = vld [vmem:[%s6906 + $0x171] sm:$0xff]
        %v6939 = vadd.f32 %v6874, %v6907
        %v6940 = vadd.f32 %v6875, %v6908
        %v6941 = vadd.f32 %v6876, %v6909
        %v6942 = vadd.f32 %v6877, %v6910
        %v6943 = vadd.f32 %v6878, %v6911
        %v6944 = vadd.f32 %v6879, %v6912
        %v6945 = vadd.f32 %v6880, %v6913
        %v6946 = vadd.f32 %v6881, %v6914
        %v6947 = vadd.f32 %v6882, %v6915
        %v6948 = vadd.f32 %v6883, %v6916
        %v6949 = vadd.f32 %v6884, %v6917
        %v6950 = vadd.f32 %v6885, %v6918
        %v6951 = vadd.f32 %v6886, %v6919
        %v6952 = vadd.f32 %v6887, %v6920
        %v6953 = vadd.f32 %v6888, %v6921
        %v6954 = vadd.f32 %v6889, %v6922
        %v6955 = vadd.f32 %v6890, %v6923
        %v6956 = vadd.f32 %v6891, %v6924
        %v6957 = vadd.f32 %v6892, %v6925
        %v6958 = vadd.f32 %v6893, %v6926
        %v6959 = vadd.f32 %v6894, %v6927
        %v6960 = vadd.f32 %v6895, %v6928
        %v6961 = vadd.f32 %v6896, %v6929
        %v6962 = vadd.f32 %v6897, %v6930
        %v6963 = vadd.f32 %v6898, %v6931
        %v6964 = vadd.f32 %v6899, %v6932
        %v6965 = vadd.f32 %v6900, %v6933
        %v6966 = vadd.f32 %v6901, %v6934
        %v6967 = vadd.f32 %v6902, %v6935
        %v6968 = vadd.f32 %v6903, %v6936
        %v6969 = vadd.f32 %v6904, %v6937
        %v6970 = vadd.f32 %v6905, %v6938
        %6971 = vst [vmem:[%s271] sm:$0xff] %v6939
        %6972 = vst [vmem:[%s271 + $0x8] sm:$0xff] %v6940
        %6973 = vst [vmem:[%s271 + $0x10] sm:$0xff] %v6941
        %6974 = vst [vmem:[%s271 + $0x18] sm:$0xff] %v6942
        %6975 = vst [vmem:[%s271 + $0x20] sm:$0xff] %v6943
        %6976 = vst [vmem:[%s271 + $0x28] sm:$0xff] %v6944
        %6977 = vst [vmem:[%s271 + $0x30] sm:$0xff] %v6945
        %6978 = vst [vmem:[%s271 + $0x38] sm:$0xff] %v6946
        %6979 = vst [vmem:[%s271 + $0x40] sm:$0xff] %v6947
        %6980 = vst [vmem:[%s271 + $0x48] sm:$0xff] %v6948
        %6981 = vst [vmem:[%s271 + $0x50] sm:$0xff] %v6949
        %6982 = vst [vmem:[%s271 + $0x58] sm:$0xff] %v6950
        %6983 = vst [vmem:[%s271 + $0x60] sm:$0xff] %v6951
        %6984 = vst [vmem:[%s271 + $0x68] sm:$0xff] %v6952
        %6985 = vst [vmem:[%s271 + $0x70] sm:$0xff] %v6953
        %6986 = vst [vmem:[%s271 + $0x78] sm:$0xff] %v6954
        %6987 = vst [vmem:[%s271 + $0x80] sm:$0xff] %v6955
        %6988 = vst [vmem:[%s271 + $0x88] sm:$0xff] %v6956
        %6989 = vst [vmem:[%s271 + $0x90] sm:$0xff] %v6957
        %6990 = vst [vmem:[%s271 + $0x98] sm:$0xff] %v6958
        %6991 = vst [vmem:[%s271 + $0xa0] sm:$0xff] %v6959
        %6992 = vst [vmem:[%s271 + $0xa8] sm:$0xff] %v6960
        %6993 = vst [vmem:[%s271 + $0xb0] sm:$0xff] %v6961
        %6994 = vst [vmem:[%s271 + $0xb8] sm:$0xff] %v6962
        %6995 = vst [vmem:[%s271 + $0xc0] sm:$0xff] %v6963
        %6996 = vst [vmem:[%s271 + $0xc8] sm:$0xff] %v6964
        %6997 = vst [vmem:[%s271 + $0xd0] sm:$0xff] %v6965
        %6998 = vst [vmem:[%s271 + $0xd8] sm:$0xff] %v6966
        %6999 = vst [vmem:[%s271 + $0xe0] sm:$0xff] %v6967
        %7000 = vst [vmem:[%s271 + $0xe8] sm:$0xff] %v6968
        %7001 = vst [vmem:[%s271 + $0xf0] sm:$0xff] %v6969
        %7002 = vst [vmem:[%s271 + $0xf8] sm:$0xff] %v6970
        %s7003 = sand.u32 %s141, 1
        %s7004 = scalar_lea.sflag [#allocation6], %s7003
        %s7005 = sand.u32 %s141, 1
        %s7006 = smul.addr %s7005, 256
        %s7007 = scalar_lea.vmem [#allocation10], %s7006
        // Predicated region
        $region53: #{tpu_custom_call.1} parent=39 // pred_check
          %p7008 = pneg %p151
        $region54: #{tpu_custom_call.1} parent=39 // pred_check_branch
          %7010 = sbr.rel (%p7008) target = $region56
        $region55: #{tpu_custom_call.1} parent=39 // pred_region
          %s7012 = ssub.s32 4096, 4096
          %7013 = vsyncadd %s7004, %s7012
          %s7014 = smul.addr %s23, 32
          %s7015 = smul.addr %s7014, 128
          %s7016 = scalar_lea.hbm %s5, %s7015
          %s7017 = sshll.u32 %s7007, 4
          %s7018 = int_to_ptr.vmem [resolvable:$true] %s7017
          %7023 = dma.vmem_to_hbm [thread:$0]  %s7018, 4096, %s7016, %s7004, 128, 128, 8
        $region56: #{tpu_custom_call.1} parent=39 // pred_fallthru
          _
      $region40: #{tpu_custom_call.1} parent=5 // pred_fallthru
        _
      %p7024 = scmp.le.s32.totalorder 2, %s18
      // Predicated region
      $region57: #{tpu_custom_call.1} parent=5 // pred_check
        %p7025 = pneg %p7024
      $region58: #{tpu_custom_call.1} parent=5 // pred_check_branch
        %7027 = sbr.rel (%p7025) target = $region60
      $region59: #{tpu_custom_call.1} parent=5 // pred_region
        %s7028 = ssub.s32 %s18, 2
        // Predicated region
        $region61: #{tpu_custom_call.1} parent=59 // pred_check
          %p7029 = pneg %p157
        $region62: #{tpu_custom_call.1} parent=59 // pred_check_branch
          %7031 = sbr.rel (%p7029) target = $region64
        $region63: #{tpu_custom_call.1} parent=59 // pred_region
          %s7032 = sand.u32 %s142, 1
          %s7033 = scalar_lea.sflag [#allocation6], %s7032
          %s7034 = sand.u32 %s142, 1
          %s7035 = smul.addr %s7034, 256
          %s7036 = scalar_lea.vmem [#allocation10], %s7035
          %7037 = dma.done %s7033, 4096
        $region64: #{tpu_custom_call.1} parent=59 // pred_fallthru
          _
      $region60: #{tpu_custom_call.1} parent=5 // pred_fallthru
        _
    $region6: #{tpu_custom_call.1} parent=1 // loop_footer
      %s22 = sadd.s32 1, %s18
    $region7: #{tpu_custom_call.1} parent=1 // loop_footer_branch
      %17 = sbr.rel target = $region3
    $region8: #{tpu_custom_call.1} parent=1 // loop_exit
      _
    %7038 = vsyncpa [#allocation5], 1
    %s7039 = scalar_lea.sflag [#allocation5], 1
    %7040 = vsyncpa %s7039, 1
    %7041 = vsyncpa [#allocation8], 1
    %7042 = vsyncpa [#allocation6], 1
    %s7043 = scalar_lea.sflag [#allocation6], 1
    %7044 = vsyncpa %s7043, 1

</llo_original>
